<compile_context>
chip_gen: v5e
topology: v5e:2x2
jax: 0.10.0
libtpu: 0.0.40
codegen_flags: <defaults>
</compile_context>

<pallas_src>
import math

import jax
import jax.numpy as jnp
from jax.experimental import pallas as pl
from jax.experimental.pallas import tpu as pltpu

DOWNSAMPLE = 4                    # feature downsampling factor (GMFlow uses 8)
FEAT_DIM = 128                    # feature channels, lane-dense (= real GMFlow)
ATTN_SPLITS = 2                   # matches attn_splits_list=[2]
PATCH_DIM = 3 * DOWNSAMPLE * DOWNSAMPLE   # 48; kept unpadded in HBM
COORD_LANES = 8                   # coords / flow carried on 8 lanes (cols 0,1 used)
VMEM_LIMIT = 32 * 1024 * 1024     # safe on v5e/v6e (128 MiB) and v7x (64 MiB)


# ----------------------------- Pallas kernels ------------------------------

def _patch_embed_kernel(p_ref, w_ref, b_ref, o_ref):
    # p_ref: (1, tn, P=48) bf16 patches, w_ref: (P, C) bf16, b_ref: (1, C) f32
    x = p_ref[0]
    y = jnp.dot(x, w_ref[...], preferred_element_type=jnp.float32) + b_ref[...]
    o_ref[0] = jnp.maximum(y, 0.0).astype(o_ref.dtype)


def _self_attn_kernel(x_ref, qw_ref, kw_ref, vw_ref, o_ref):
    # One attention window per grid step; fused QKV + softmax + residual.
    x = x_ref[0]                                            # (s_tok, C) bf16
    c = x.shape[-1]
    scale = 1.0 / math.sqrt(c)
    # scale folded into q (the smaller operand) instead of the (s,s) score tensor
    q = (jnp.dot(x, qw_ref[...], preferred_element_type=jnp.float32)
         * scale).astype(jnp.bfloat16)
    k = jnp.dot(x, kw_ref[...], preferred_element_type=jnp.float32).astype(jnp.bfloat16)
    v = jnp.dot(x, vw_ref[...], preferred_element_type=jnp.float32).astype(jnp.bfloat16)
    s = jax.lax.dot_general(q, k, (((1,), (1,)), ((), ())),
                            preferred_element_type=jnp.float32)      # (s, s)
    s = s - jnp.max(s, axis=-1, keepdims=True)
    p = jnp.exp(s)
    p = p * (1.0 / jnp.sum(p, axis=-1, keepdims=True))               # exact norm
    o = jnp.dot(p.astype(jnp.bfloat16), v, preferred_element_type=jnp.float32)
    o_ref[0] = (x.astype(jnp.float32) + o).astype(o_ref.dtype)       # residual


def _cross_attn_kernel(xq_ref, xkv_ref, qw_ref, kw_ref, vw_ref, o_ref):
    xq = xq_ref[0]                                          # (s_tok, C) bf16
    xkv = xkv_ref[0]
    c = xq.shape[-1]
    scale = 1.0 / math.sqrt(c)
    q = (jnp.dot(xq, qw_ref[...], preferred_element_type=jnp.float32)
         * scale).astype(jnp.bfloat16)
    k = jnp.dot(xkv, kw_ref[...], preferred_element_type=jnp.float32).astype(jnp.bfloat16)
    v = jnp.dot(xkv, vw_ref[...], preferred_element_type=jnp.float32).astype(jnp.bfloat16)
    s = jax.lax.dot_general(q, k, (((1,), (1,)), ((), ())),
                            preferred_element_type=jnp.float32)
    s = s - jnp.max(s, axis=-1, keepdims=True)
    p = jnp.exp(s)
    p = p * (1.0 / jnp.sum(p, axis=-1, keepdims=True))
    o = jnp.dot(p.astype(jnp.bfloat16), v, preferred_element_type=jnp.float32)
    o_ref[0] = (xq.astype(jnp.float32) + o).astype(o_ref.dtype)


def _global_corr_kernel(f0_ref, f1_ref, ck_ref, cq_ref, out_ref, m_sc, l_sc, acc_sc):
    # Flash-style global correlation softmax matching (corr_radius = -1).
    # f0: (1, TQ, C) bf16, f1: (1, TK, C) bf16,
    # ck: (TK, 8) f32 key coords, cq: (TQ, 8) f32 query coords (cols 0,1 = x,y)
    # out: (1, TQ, 8) f32 flow (= softmax-matched coords - own coords).
    kt = pl.program_id(2)

    @pl.when(kt == 0)
    def _():
        m_sc[...] = jnp.full_like(m_sc, -jnp.inf)
        l_sc[...] = jnp.zeros_like(l_sc)
        acc_sc[...] = jnp.zeros_like(acc_sc)

    c = f0_ref.shape[-1]
    scale = 1.0 / math.sqrt(c)
    f0 = f0_ref[0] * scale                                   # fold scale into (TQ,C)
    f1 = f1_ref[0]
    s = jax.lax.dot_general(f0, f1, (((1,), (1,)), ((), ())),
                            preferred_element_type=jnp.float32)       # (TQ, TK)
    m_prev = m_sc[...]
    m_new = jnp.maximum(m_prev, jnp.max(s, axis=-1, keepdims=True))
    alpha = jnp.exp(m_prev - m_new)
    p = jnp.exp(s - m_new)
    l_sc[...] = alpha * l_sc[...] + jnp.sum(p, axis=-1, keepdims=True)
    acc_sc[...] = alpha * acc_sc[...] + jnp.dot(
        p, ck_ref[...], preferred_element_type=jnp.float32)
    m_sc[...] = m_new

    @pl.when(kt == pl.num_programs(2) - 1)
    def _():
        # exact divide at finalize; output is already the flow
        out_ref[0] = acc_sc[...] / l_sc[...] - cq_ref[...]


# ----------------------------- pallas_call wrappers -------------------------

def patch_embed(patches, w, b):
    G, N, P = patches.shape
    C = w.shape[1]
    tn = min(N, 512)
    assert N % tn == 0
    return pl.pallas_call(
        _patch_embed_kernel,
        out_shape=jax.ShapeDtypeStruct((G, N, C), jnp.bfloat16),
        grid=(G, N // tn),
        in_specs=[
            pl.BlockSpec((1, tn, P), lambda g, n: (g, n, 0)),
            pl.BlockSpec((P, C), lambda g, n: (0, 0)),
            pl.BlockSpec((1, C), lambda g, n: (0, 0)),
        ],
        out_specs=pl.BlockSpec((1, tn, C), lambda g, n: (g, n, 0)),
        compiler_params=pltpu.CompilerParams(
            dimension_semantics=("parallel", "parallel"),
            vmem_limit_bytes=VMEM_LIMIT),
    )(patches, w, b)


def self_window_attention(x, params, s_tok):
    # Single token input (xq == xkv): the (1, s_tok, C) block is DMA'd once.
    G, N, C = x.shape
    n_win = N // s_tok
    tok = pl.BlockSpec((1, s_tok, C), lambda g, w: (g, w, 0))
    wsp = pl.BlockSpec((C, C), lambda g, w: (0, 0))
    return pl.pallas_call(
        _self_attn_kernel,
        out_shape=jax.ShapeDtypeStruct((G, N, C), jnp.bfloat16),
        grid=(G, n_win),
        in_specs=[tok, wsp, wsp, wsp],
        out_specs=tok,
        compiler_params=pltpu.CompilerParams(
            dimension_semantics=("parallel", "parallel"),
            vmem_limit_bytes=VMEM_LIMIT),
    )(x, params["q_w"], params["k_w"], params["v_w"])


def cross_window_attention(x, params, s_tok):
    # Symmetric cross-attention: kv block comes from the "other" image via a
    # swapped index_map — no concatenated HBM copy is ever materialized.
    G, N, C = x.shape
    n_win = N // s_tok
    half = G // 2
    q_spec = pl.BlockSpec((1, s_tok, C), lambda g, w: (g, w, 0))
    kv_spec = pl.BlockSpec((1, s_tok, C), lambda g, w: ((g + half) % G, w, 0))
    wsp = pl.BlockSpec((C, C), lambda g, w: (0, 0))
    return pl.pallas_call(
        _cross_attn_kernel,
        out_shape=jax.ShapeDtypeStruct((G, N, C), jnp.bfloat16),
        grid=(G, n_win),
        in_specs=[q_spec, kv_spec, wsp, wsp, wsp],
        out_specs=q_spec,
        compiler_params=pltpu.CompilerParams(
            dimension_semantics=("parallel", "parallel"),
            vmem_limit_bytes=VMEM_LIMIT),
    )(x, x, params["q_w"], params["k_w"], params["v_w"])


def global_corr_flow(f0, f1, coords8):
    B, N, C = f0.shape
    t = min(N, 512)
    assert N % t == 0
    tq = tk = t
    return pl.pallas_call(
        _global_corr_kernel,
        out_shape=jax.ShapeDtypeStruct((B, N, COORD_LANES), jnp.float32),
        grid=(B, N // tq, N // tk),
        in_specs=[
            pl.BlockSpec((1, tq, C), lambda b, qi, ki: (b, qi, 0)),
            pl.BlockSpec((1, tk, C), lambda b, qi, ki: (b, ki, 0)),
            pl.BlockSpec((tk, COORD_LANES), lambda b, qi, ki: (ki, 0)),
            pl.BlockSpec((tq, COORD_LANES), lambda b, qi, ki: (qi, 0)),
        ],
        out_specs=pl.BlockSpec((1, tq, COORD_LANES), lambda b, qi, ki: (b, qi, 0)),
        scratch_shapes=[
            pltpu.VMEM((tq, 1), jnp.float32),
            pltpu.VMEM((tq, 1), jnp.float32),
            pltpu.VMEM((tq, COORD_LANES), jnp.float32),
        ],
        compiler_params=pltpu.CompilerParams(
            dimension_semantics=("parallel", "parallel", "arbitrary"),
            vmem_limit_bytes=VMEM_LIMIT),
    )(f0, f1, coords8, coords8)


# ----------------------------- glue (plain JAX) ------------------------------

def init_params():
    kp = jax.random.PRNGKey(123)  # deterministic synthetic weights
    kw, kb, kq, kk, kv = jax.random.split(kp, 5)
    s_p = 1.0 / math.sqrt(PATCH_DIM)
    s_c = 1.0 / math.sqrt(FEAT_DIM)
    return {
        "embed_w": (jax.random.normal(kw, (PATCH_DIM, FEAT_DIM), jnp.float32) * s_p
                    ).astype(jnp.bfloat16),
        "embed_b": jax.random.normal(kb, (1, FEAT_DIM), jnp.float32) * 0.01,
        "q_w": (jax.random.normal(kq, (FEAT_DIM, FEAT_DIM), jnp.float32) * s_c
                ).astype(jnp.bfloat16),
        "k_w": (jax.random.normal(kk, (FEAT_DIM, FEAT_DIM), jnp.float32) * s_c
                ).astype(jnp.bfloat16),
        "v_w": (jax.random.normal(kv, (FEAT_DIM, FEAT_DIM), jnp.float32) * s_c
                ).astype(jnp.bfloat16),
    }


def extract_features(imgs_nchw, params):
    # Non-overlapping patch embedding; tokens emitted in WINDOW-MAJOR order so the
    # attention kernel's window partition is a plain contiguous block (no gather).
    G, Cc, H, W = imgs_nchw.shape
    Hf, Wf = H // DOWNSAMPLE, W // DOWNSAMPLE
    hs, ws = Hf // ATTN_SPLITS, Wf // ATTN_SPLITS
    x = jnp.transpose(imgs_nchw, (0, 2, 3, 1))                     # NHWC
    x = x.reshape(G, ATTN_SPLITS, hs, DOWNSAMPLE, ATTN_SPLITS, ws, DOWNSAMPLE, Cc)
    x = x.transpose(0, 1, 4, 2, 5, 3, 6, 7)                        # (G,wi,wj,r,c,dy,dx,C)
    patches = x.reshape(G, Hf * Wf, PATCH_DIM)                     # unpadded K=48
    feat = patch_embed(patches.astype(jnp.bfloat16),
                       params["embed_w"], params["embed_b"])       # (G, N, C) bf16
    return feat, Hf, Wf


def make_coords(Hf, Wf):
    # pixel (x, y) grid in the same window-major token ordering as the features
    hs, ws = Hf // ATTN_SPLITS, Wf // ATTN_SPLITS
    ys, xs = jnp.meshgrid(jnp.arange(Hf, dtype=jnp.float32),
                          jnp.arange(Wf, dtype=jnp.float32), indexing="ij")
    c = jnp.stack([xs, ys], axis=-1)                               # (Hf, Wf, 2)
    c = c.reshape(ATTN_SPLITS, hs, ATTN_SPLITS, ws, 2)
    return c.transpose(0, 2, 1, 3, 4).reshape(Hf * Wf, 2)          # (N, 2)


def unpartition_tokens(x_tok, Hf, Wf):
    # window-major tokens -> (B, Hf, Wf, C) spatial map
    B = x_tok.shape[0]
    Cc = x_tok.shape[-1]
    hs, ws = Hf // ATTN_SPLITS, Wf // ATTN_SPLITS
    x = x_tok.reshape(B, ATTN_SPLITS, ATTN_SPLITS, hs, ws, Cc)
    return x.transpose(0, 1, 3, 2, 4, 5).reshape(B, Hf, Wf, Cc)


def transformer_block(feat, Hf, Wf, params):
    # one shared-weight self + cross attention block, attn_splits=2 windows
    hs, ws = Hf // ATTN_SPLITS, Wf // ATTN_SPLITS
    s_tok = hs * ws
    x = self_window_attention(feat, params, s_tok)                 # both images
    x = cross_window_attention(x, params, s_tok)                   # symmetric swap
    return x


def gmflow_forward(tenFirst, tenSecond, params):
    B = tenFirst.shape[0]
    imgs = jnp.concatenate([tenFirst, tenSecond], axis=0)          # (2B, 3, H, W)
    feat, Hf, Wf = extract_features(imgs, params)                  # (2B, N, C) bf16
    feat = transformer_block(feat, Hf, Wf, params)
    f0, f1 = feat[:B], feat[B:]

    coords = make_coords(Hf, Wf)                                   # (N, 2) f32
    coords8 = jnp.zeros((coords.shape[0], COORD_LANES), jnp.float32
                        ).at[:, :2].set(coords)

    flow_tok8 = global_corr_flow(f0, f1, coords8)                  # (B, N, 8) flow
    flow = unpartition_tokens(flow_tok8[..., :2], Hf, Wf)          # (B, Hf, Wf, 2)

    H, W = Hf * DOWNSAMPLE, Wf * DOWNSAMPLE
    # TODO(synk): real GMFlow uses learned convex upsampling / align_corners=True;
    # plain bilinear resize is a numerical approximation of that step.
    flow_up = jax.image.resize(flow, (B, H, W, 2), method="bilinear") * float(DOWNSAMPLE)
    return jnp.transpose(flow_up, (0, 3, 1, 2))                    # NCHW [B, 2, H, W]


# ----------------------------------- main ------------------------------------

if __name__ == "__main__":
    key = jax.random.PRNGKey(0)
    k1, k2 = jax.random.split(key)
    B, H, W = 2, 32, 32
    tenFirst = jax.random.uniform(k1, (B, 3, H, W), jnp.float32)
    tenSecond = jax.random.uniform(k2, (B, 3, H, W), jnp.float32)

    params = init_params()
    flow = jax.jit(gmflow_forward)(tenFirst, tenSecond, params)
    jax.block_until_ready(flow)

    assert flow.shape == (B, 2, H, W), flow.shape
    assert bool(jnp.all(jnp.isfinite(flow)))
    print("KERNEL_OK")
</pallas_src>

<mosaic_0001>
module attributes {stable_mosaic.version = 11 : i64} {
  func.func @_patch_embed_kernel(%arg0: i32, %arg1: i32, %arg2: memref<1x64x48xbf16, #tpu.memory_space<vmem>>, %arg3: memref<48x128xbf16, #tpu.memory_space<vmem>>, %arg4: memref<1x128xf32, #tpu.memory_space<vmem>>, %arg5: memref<1x64x128xbf16, #tpu.memory_space<vmem>>) attributes {dimension_semantics = [#tpu.dimension_semantics<parallel>, #tpu.dimension_semantics<parallel>], iteration_bounds = array<i64: 4, 1>, scalar_prefetch = 0 : i64, scratch_operands = 0 : i64, tpu.core_type = #tpu.core_type<tc>, window_params = [{transform_indices = @transform_0, window_bounds = array<i64: 1, 64, 48>}, {pipeline_mode = #tpu.pipeline_mode<synchronous>, transform_indices = @transform_1, window_bounds = array<i64: 48, 128>}, {pipeline_mode = #tpu.pipeline_mode<synchronous>, transform_indices = @transform_2, window_bounds = array<i64: 1, 128>}, {transform_indices = @transform_3, window_bounds = array<i64: 1, 64, 128>}]} {
    %c0 = arith.constant 0 : index
    %c0_0 = arith.constant 0 : index
    %c0_1 = arith.constant 0 : index
    %0 = vector.load %arg2[%c0, %c0_0, %c0_1] : memref<1x64x48xbf16, #tpu.memory_space<vmem>>, vector<1x64x48xbf16>
    %1 = vector.shape_cast %0 : vector<1x64x48xbf16> to vector<64x48xbf16>
    %c0_2 = arith.constant 0 : index
    %c0_3 = arith.constant 0 : index
    %2 = vector.load %arg3[%c0_2, %c0_3] : memref<48x128xbf16, #tpu.memory_space<vmem>>, vector<48x128xbf16>
    %cst = arith.constant dense<0.000000e+00> : vector<64x128xf32>
    %3 = tpu.matmul %1, %2, %cst {dimension_numbers = #tpu.dot_dimension_numbers<[1], [0], [0], [1], [0, 0, 1, 1], [], []>} : vector<64x48xbf16>, vector<48x128xbf16>, vector<64x128xf32> -> vector<64x128xf32>
    %c0_4 = arith.constant 0 : index
    %c0_5 = arith.constant 0 : index
    %4 = vector.load %arg4[%c0_4, %c0_5] : memref<1x128xf32, #tpu.memory_space<vmem>>, vector<1x128xf32>
    %5 = vector.broadcast %4 : vector<1x128xf32> to vector<64x128xf32>
    %6 = arith.addf %3, %5 : vector<64x128xf32>
    %cst_6 = arith.constant 0.000000e+00 : f32
    %7 = vector.broadcast %cst_6 : f32 to vector<64x128xf32>
    %8 = arith.maximumf %6, %7 : vector<64x128xf32>
    %9 = arith.truncf %8 : vector<64x128xf32> to vector<64x128xbf16>
    %c0_7 = arith.constant 0 : index
    %c0_8 = arith.constant 0 : index
    %c0_9 = arith.constant 0 : index
    %10 = vector.load %arg5[%c0_7, %c0_8, %c0_9] : memref<1x64x128xbf16, #tpu.memory_space<vmem>>, vector<1x64x128xbf16>
    %11 = vector.shape_cast %10 : vector<1x64x128xbf16> to vector<64x128xbf16>
    %12 = vector.shape_cast %9 : vector<64x128xbf16> to vector<1x64x128xbf16>
    tpu.vector_store %arg5[%c0_7, %c0_8, %c0_9], %12 {strides = array<i32>} : memref<1x64x128xbf16, #tpu.memory_space<vmem>>, vector<1x64x128xbf16>,
    return
  }
  func.func @transform_0(%arg0: i32, %arg1: i32) -> (i32, i32, i32) {
    %c0_i32 = arith.constant 0 : i32
    %c0_i32_0 = arith.constant 0 : i32
    return %arg0, %arg1, %c0_i32 : i32, i32, i32
  }
  func.func @transform_1(%arg0: i32, %arg1: i32) -> (i32, i32) {
    %c0_i32 = arith.constant 0 : i32
    %c0_i32_0 = arith.constant 0 : i32
    %c0_i32_1 = arith.constant 0 : i32
    return %c0_i32, %c0_i32_0 : i32, i32
  }
  func.func @transform_2(%arg0: i32, %arg1: i32) -> (i32, i32) {
    %c0_i32 = arith.constant 0 : i32
    %c0_i32_0 = arith.constant 0 : i32
    %c0_i32_1 = arith.constant 0 : i32
    return %c0_i32, %c0_i32_0 : i32, i32
  }
  func.func @transform_3(%arg0: i32, %arg1: i32) -> (i32, i32, i32) {
    %c0_i32 = arith.constant 0 : i32
    %c0_i32_0 = arith.constant 0 : i32
    return %arg0, %arg1, %c0_i32 : i32, i32, i32
  }
}

module attributes {stable_mosaic.version = 11 : i64} {
  func.func @_self_attn_kernel(%arg0: i32, %arg1: i32, %arg2: memref<1x16x128xbf16, #tpu.memory_space<vmem>>, %arg3: memref<128x128xbf16, #tpu.memory_space<vmem>>, %arg4: memref<128x128xbf16, #tpu.memory_space<vmem>>, %arg5: memref<128x128xbf16, #tpu.memory_space<vmem>>, %arg6: memref<1x16x128xbf16, #tpu.memory_space<vmem>>) attributes {dimension_semantics = [#tpu.dimension_semantics<parallel>, #tpu.dimension_semantics<parallel>], iteration_bounds = array<i64: 4, 4>, scalar_prefetch = 0 : i64, scratch_operands = 0 : i64, tpu.core_type = #tpu.core_type<tc>, window_params = [{transform_indices = @transform_0, window_bounds = array<i64: 1, 16, 128>}, {pipeline_mode = #tpu.pipeline_mode<synchronous>, transform_indices = @transform_1, window_bounds = array<i64: 128, 128>}, {pipeline_mode = #tpu.pipeline_mode<synchronous>, transform_indices = @transform_2, window_bounds = array<i64: 128, 128>}, {pipeline_mode = #tpu.pipeline_mode<synchronous>, transform_indices = @transform_3, window_bounds = array<i64: 128, 128>}, {transform_indices = @transform_4, window_bounds = array<i64: 1, 16, 128>}]} {
    %c0 = arith.constant 0 : index
    %c0_0 = arith.constant 0 : index
    %c0_1 = arith.constant 0 : index
    %0 = vector.load %arg2[%c0, %c0_0, %c0_1] : memref<1x16x128xbf16, #tpu.memory_space<vmem>>, vector<1x16x128xbf16>
    %1 = vector.shape_cast %0 : vector<1x16x128xbf16> to vector<16x128xbf16>
    %c0_2 = arith.constant 0 : index
    %c0_3 = arith.constant 0 : index
    %2 = vector.load %arg3[%c0_2, %c0_3] : memref<128x128xbf16, #tpu.memory_space<vmem>>, vector<128x128xbf16>
    %cst = arith.constant dense<0.000000e+00> : vector<16x128xf32>
    %3 = tpu.matmul %1, %2, %cst {dimension_numbers = #tpu.dot_dimension_numbers<[1], [0], [0], [1], [0, 0, 1, 1], [], []>} : vector<16x128xbf16>, vector<128x128xbf16>, vector<16x128xf32> -> vector<16x128xf32>
    %cst_4 = arith.constant 0.0883883461 : f32
    %4 = vector.broadcast %cst_4 : f32 to vector<16x128xf32>
    %5 = arith.mulf %3, %4 : vector<16x128xf32>
    %6 = arith.truncf %5 : vector<16x128xf32> to vector<16x128xbf16>
    %c0_5 = arith.constant 0 : index
    %c0_6 = arith.constant 0 : index
    %7 = vector.load %arg4[%c0_5, %c0_6] : memref<128x128xbf16, #tpu.memory_space<vmem>>, vector<128x128xbf16>
    %cst_7 = arith.constant dense<0.000000e+00> : vector<16x128xf32>
    %8 = tpu.matmul %1, %7, %cst_7 {dimension_numbers = #tpu.dot_dimension_numbers<[1], [0], [0], [1], [0, 0, 1, 1], [], []>} : vector<16x128xbf16>, vector<128x128xbf16>, vector<16x128xf32> -> vector<16x128xf32>
    %9 = arith.truncf %8 : vector<16x128xf32> to vector<16x128xbf16>
    %c0_8 = arith.constant 0 : index
    %c0_9 = arith.constant 0 : index
    %10 = vector.load %arg5[%c0_8, %c0_9] : memref<128x128xbf16, #tpu.memory_space<vmem>>, vector<128x128xbf16>
    %cst_10 = arith.constant dense<0.000000e+00> : vector<16x128xf32>
    %11 = tpu.matmul %1, %10, %cst_10 {dimension_numbers = #tpu.dot_dimension_numbers<[1], [0], [0], [1], [0, 0, 1, 1], [], []>} : vector<16x128xbf16>, vector<128x128xbf16>, vector<16x128xf32> -> vector<16x128xf32>
    %12 = arith.truncf %11 : vector<16x128xf32> to vector<16x128xbf16>
    %cst_11 = arith.constant dense<0.000000e+00> : vector<16x16xf32>
    %13 = tpu.matmul %6, %9, %cst_11 {dimension_numbers = #tpu.dot_dimension_numbers<[1], [1], [0], [0], [0, 0, 1, 0], [], []>} : vector<16x128xbf16>, vector<16x128xbf16>, vector<16x16xf32> -> vector<16x16xf32>
    %cst_12 = arith.constant dense<0xFF800000> : vector<16xf32>
    %14 = vector.multi_reduction <maximumf>, %13, %cst_12 [1] : vector<16x16xf32> to vector<16xf32>
    %15 = vector.shape_cast %14 : vector<16xf32> to vector<16x1xf32>
    %16 = vector.broadcast %15 : vector<16x1xf32> to vector<16x16xf32>
    %17 = arith.subf %13, %16 : vector<16x16xf32>
    %18 = math.exp %17 : vector<16x16xf32>
    %cst_13 = arith.constant dense<0.000000e+00> : vector<16xf32>
    %19 = vector.multi_reduction <add>, %18, %cst_13 [1] : vector<16x16xf32> to vector<16xf32>
    %20 = vector.shape_cast %19 : vector<16xf32> to vector<16x1xf32>
    %cst_14 = arith.constant 1.000000e+00 : f32
    %21 = vector.broadcast %cst_14 : f32 to vector<16x1xf32>
    %22 = arith.divf %21, %20 : vector<16x1xf32>
    %23 = vector.broadcast %22 : vector<16x1xf32> to vector<16x16xf32>
    %24 = arith.mulf %18, %23 : vector<16x16xf32>
    %25 = arith.truncf %24 : vector<16x16xf32> to vector<16x16xbf16>
    %cst_15 = arith.constant dense<0.000000e+00> : vector<16x128xf32>
    %26 = tpu.matmul %25, %12, %cst_15 {dimension_numbers = #tpu.dot_dimension_numbers<[1], [0], [0], [1], [0, 0, 1, 1], [], []>} : vector<16x16xbf16>, vector<16x128xbf16>, vector<16x128xf32> -> vector<16x128xf32>
    %27 = arith.extf %1 : vector<16x128xbf16> to vector<16x128xf32>
    %28 = arith.addf %27, %26 : vector<16x128xf32>
    %29 = arith.truncf %28 : vector<16x128xf32> to vector<16x128xbf16>
    %c0_16 = arith.constant 0 : index
    %c0_17 = arith.constant 0 : index
    %c0_18 = arith.constant 0 : index
    %30 = vector.load %arg6[%c0_16, %c0_17, %c0_18] : memref<1x16x128xbf16, #tpu.memory_space<vmem>>, vector<1x16x128xbf16>
    %31 = vector.shape_cast %30 : vector<1x16x128xbf16> to vector<16x128xbf16>
    %32 = vector.shape_cast %29 : vector<16x128xbf16> to vector<1x16x128xbf16>
    tpu.vector_store %arg6[%c0_16, %c0_17, %c0_18], %32 {strides = array<i32>} : memref<1x16x128xbf16, #tpu.memory_space<vmem>>, vector<1x16x128xbf16>,
    return
  }
  func.func @transform_0(%arg0: i32, %arg1: i32) -> (i32, i32, i32) {
    %c0_i32 = arith.constant 0 : i32
    %c0_i32_0 = arith.constant 0 : i32
    return %arg0, %arg1, %c0_i32 : i32, i32, i32
  }
  func.func @transform_1(%arg0: i32, %arg1: i32) -> (i32, i32) {
    %c0_i32 = arith.constant 0 : i32
    %c0_i32_0 = arith.constant 0 : i32
    %c0_i32_1 = arith.constant 0 : i32
    return %c0_i32, %c0_i32_0 : i32, i32
  }
  func.func @transform_2(%arg0: i32, %arg1: i32) -> (i32, i32) {
    %c0_i32 = arith.constant 0 : i32
    %c0_i32_0 = arith.constant 0 : i32
    %c0_i32_1 = arith.constant 0 : i32
    return %c0_i32, %c0_i32_0 : i32, i32
  }
  func.func @transform_3(%arg0: i32, %arg1: i32) -> (i32, i32) {
    %c0_i32 = arith.constant 0 : i32
    %c0_i32_0 = arith.constant 0 : i32
    %c0_i32_1 = arith.constant 0 : i32
    return %c0_i32, %c0_i32_0 : i32, i32
  }
  func.func @transform_4(%arg0: i32, %arg1: i32) -> (i32, i32, i32) {
    %c0_i32 = arith.constant 0 : i32
    %c0_i32_0 = arith.constant 0 : i32
    return %arg0, %arg1, %c0_i32 : i32, i32, i32
  }
}

module attributes {stable_mosaic.version = 11 : i64} {
  func.func @_cross_attn_kernel(%arg0: i32, %arg1: i32, %arg2: memref<1x16x128xbf16, #tpu.memory_space<vmem>>, %arg3: memref<1x16x128xbf16, #tpu.memory_space<vmem>>, %arg4: memref<128x128xbf16, #tpu.memory_space<vmem>>, %arg5: memref<128x128xbf16, #tpu.memory_space<vmem>>, %arg6: memref<128x128xbf16, #tpu.memory_space<vmem>>, %arg7: memref<1x16x128xbf16, #tpu.memory_space<vmem>>) attributes {dimension_semantics = [#tpu.dimension_semantics<parallel>, #tpu.dimension_semantics<parallel>], iteration_bounds = array<i64: 4, 4>, scalar_prefetch = 0 : i64, scratch_operands = 0 : i64, tpu.core_type = #tpu.core_type<tc>, window_params = [{transform_indices = @transform_0, window_bounds = array<i64: 1, 16, 128>}, {transform_indices = @transform_1, window_bounds = array<i64: 1, 16, 128>}, {pipeline_mode = #tpu.pipeline_mode<synchronous>, transform_indices = @transform_2, window_bounds = array<i64: 128, 128>}, {pipeline_mode = #tpu.pipeline_mode<synchronous>, transform_indices = @transform_3, window_bounds = array<i64: 128, 128>}, {pipeline_mode = #tpu.pipeline_mode<synchronous>, transform_indices = @transform_4, window_bounds = array<i64: 128, 128>}, {transform_indices = @transform_5, window_bounds = array<i64: 1, 16, 128>}]} {
    %c0 = arith.constant 0 : index
    %c0_0 = arith.constant 0 : index
    %c0_1 = arith.constant 0 : index
    %0 = vector.load %arg2[%c0, %c0_0, %c0_1] : memref<1x16x128xbf16, #tpu.memory_space<vmem>>, vector<1x16x128xbf16>
    %1 = vector.shape_cast %0 : vector<1x16x128xbf16> to vector<16x128xbf16>
    %c0_2 = arith.constant 0 : index
    %c0_3 = arith.constant 0 : index
    %c0_4 = arith.constant 0 : index
    %2 = vector.load %arg3[%c0_2, %c0_3, %c0_4] : memref<1x16x128xbf16, #tpu.memory_space<vmem>>, vector<1x16x128xbf16>
    %3 = vector.shape_cast %2 : vector<1x16x128xbf16> to vector<16x128xbf16>
    %c0_5 = arith.constant 0 : index
    %c0_6 = arith.constant 0 : index
    %4 = vector.load %arg4[%c0_5, %c0_6] : memref<128x128xbf16, #tpu.memory_space<vmem>>, vector<128x128xbf16>
    %cst = arith.constant dense<0.000000e+00> : vector<16x128xf32>
    %5 = tpu.matmul %1, %4, %cst {dimension_numbers = #tpu.dot_dimension_numbers<[1], [0], [0], [1], [0, 0, 1, 1], [], []>} : vector<16x128xbf16>, vector<128x128xbf16>, vector<16x128xf32> -> vector<16x128xf32>
    %cst_7 = arith.constant 0.0883883461 : f32
    %6 = vector.broadcast %cst_7 : f32 to vector<16x128xf32>
    %7 = arith.mulf %5, %6 : vector<16x128xf32>
    %8 = arith.truncf %7 : vector<16x128xf32> to vector<16x128xbf16>
    %c0_8 = arith.constant 0 : index
    %c0_9 = arith.constant 0 : index
    %9 = vector.load %arg5[%c0_8, %c0_9] : memref<128x128xbf16, #tpu.memory_space<vmem>>, vector<128x128xbf16>
    %cst_10 = arith.constant dense<0.000000e+00> : vector<16x128xf32>
    %10 = tpu.matmul %3, %9, %cst_10 {dimension_numbers = #tpu.dot_dimension_numbers<[1], [0], [0], [1], [0, 0, 1, 1], [], []>} : vector<16x128xbf16>, vector<128x128xbf16>, vector<16x128xf32> -> vector<16x128xf32>
    %11 = arith.truncf %10 : vector<16x128xf32> to vector<16x128xbf16>
    %c0_11 = arith.constant 0 : index
    %c0_12 = arith.constant 0 : index
    %12 = vector.load %arg6[%c0_11, %c0_12] : memref<128x128xbf16, #tpu.memory_space<vmem>>, vector<128x128xbf16>
    %cst_13 = arith.constant dense<0.000000e+00> : vector<16x128xf32>
    %13 = tpu.matmul %3, %12, %cst_13 {dimension_numbers = #tpu.dot_dimension_numbers<[1], [0], [0], [1], [0, 0, 1, 1], [], []>} : vector<16x128xbf16>, vector<128x128xbf16>, vector<16x128xf32> -> vector<16x128xf32>
    %14 = arith.truncf %13 : vector<16x128xf32> to vector<16x128xbf16>
    %cst_14 = arith.constant dense<0.000000e+00> : vector<16x16xf32>
    %15 = tpu.matmul %8, %11, %cst_14 {dimension_numbers = #tpu.dot_dimension_numbers<[1], [1], [0], [0], [0, 0, 1, 0], [], []>} : vector<16x128xbf16>, vector<16x128xbf16>, vector<16x16xf32> -> vector<16x16xf32>
    %cst_15 = arith.constant dense<0xFF800000> : vector<16xf32>
    %16 = vector.multi_reduction <maximumf>, %15, %cst_15 [1] : vector<16x16xf32> to vector<16xf32>
    %17 = vector.shape_cast %16 : vector<16xf32> to vector<16x1xf32>
    %18 = vector.broadcast %17 : vector<16x1xf32> to vector<16x16xf32>
    %19 = arith.subf %15, %18 : vector<16x16xf32>
    %20 = math.exp %19 : vector<16x16xf32>
    %cst_16 = arith.constant dense<0.000000e+00> : vector<16xf32>
    %21 = vector.multi_reduction <add>, %20, %cst_16 [1] : vector<16x16xf32> to vector<16xf32>
    %22 = vector.shape_cast %21 : vector<16xf32> to vector<16x1xf32>
    %cst_17 = arith.constant 1.000000e+00 : f32
    %23 = vector.broadcast %cst_17 : f32 to vector<16x1xf32>
    %24 = arith.divf %23, %22 : vector<16x1xf32>
    %25 = vector.broadcast %24 : vector<16x1xf32> to vector<16x16xf32>
    %26 = arith.mulf %20, %25 : vector<16x16xf32>
    %27 = arith.truncf %26 : vector<16x16xf32> to vector<16x16xbf16>
    %cst_18 = arith.constant dense<0.000000e+00> : vector<16x128xf32>
    %28 = tpu.matmul %27, %14, %cst_18 {dimension_numbers = #tpu.dot_dimension_numbers<[1], [0], [0], [1], [0, 0, 1, 1], [], []>} : vector<16x16xbf16>, vector<16x128xbf16>, vector<16x128xf32> -> vector<16x128xf32>
    %29 = arith.extf %1 : vector<16x128xbf16> to vector<16x128xf32>
    %30 = arith.addf %29, %28 : vector<16x128xf32>
    %31 = arith.truncf %30 : vector<16x128xf32> to vector<16x128xbf16>
    %c0_19 = arith.constant 0 : index
    %c0_20 = arith.constant 0 : index
    %c0_21 = arith.constant 0 : index
    %32 = vector.load %arg7[%c0_19, %c0_20, %c0_21] : memref<1x16x128xbf16, #tpu.memory_space<vmem>>, vector<1x16x128xbf16>
    %33 = vector.shape_cast %32 : vector<1x16x128xbf16> to vector<16x128xbf16>
    %34 = vector.shape_cast %31 : vector<16x128xbf16> to vector<1x16x128xbf16>
    tpu.vector_store %arg7[%c0_19, %c0_20, %c0_21], %34 {strides = array<i32>} : memref<1x16x128xbf16, #tpu.memory_space<vmem>>, vector<1x16x128xbf16>,
    return
  }
  func.func @transform_0(%arg0: i32, %arg1: i32) -> (i32, i32, i32) {
    %c0_i32 = arith.constant 0 : i32
    %c0_i32_0 = arith.constant 0 : i32
    return %arg0, %arg1, %c0_i32 : i32, i32, i32
  }
  func.func @transform_1(%arg0: i32, %arg1: i32) -> (i32, i32, i32) {
    %c2_i32 = arith.constant 2 : i32
    %0 = arith.addi %arg0, %c2_i32 : i32
    %c4_i32 = arith.constant 4 : i32
    %c0_i32 = arith.constant 0 : i32
    %1 = arith.cmpi eq, %c4_i32, %c0_i32 : i32
    %c1_i32 = arith.constant 1 : i32
    %2 = arith.select %1, %c1_i32, %c4_i32 : i32
    %3 = arith.remsi %0, %2 : i32
    %c0_i32_0 = arith.constant 0 : i32
    %4 = arith.cmpi ne, %3, %c0_i32_0 : i32
    %c0_i32_1 = arith.constant 0 : i32
    %5 = arith.cmpi slt, %3, %c0_i32_1 : i32
    %c0_i32_2 = arith.constant 0 : i32
    %6 = arith.cmpi slt, %2, %c0_i32_2 : i32
    %7 = arith.xori %5, %6 : i1
    %8 = arith.andi %7, %4 : i1
    %9 = arith.addi %3, %2 : i32
    %10 = arith.select %8, %9, %3 : i32
    %c0_i32_3 = arith.constant 0 : i32
    %c0_i32_4 = arith.constant 0 : i32
    return %10, %arg1, %c0_i32_3 : i32, i32, i32
  }
  func.func @transform_2(%arg0: i32, %arg1: i32) -> (i32, i32) {
    %c0_i32 = arith.constant 0 : i32
    %c0_i32_0 = arith.constant 0 : i32
    %c0_i32_1 = arith.constant 0 : i32
    return %c0_i32, %c0_i32_0 : i32, i32
  }
  func.func @transform_3(%arg0: i32, %arg1: i32) -> (i32, i32) {
    %c0_i32 = arith.constant 0 : i32
    %c0_i32_0 = arith.constant 0 : i32
    %c0_i32_1 = arith.constant 0 : i32
    return %c0_i32, %c0_i32_0 : i32, i32
  }
  func.func @transform_4(%arg0: i32, %arg1: i32) -> (i32, i32) {
    %c0_i32 = arith.constant 0 : i32
    %c0_i32_0 = arith.constant 0 : i32
    %c0_i32_1 = arith.constant 0 : i32
    return %c0_i32, %c0_i32_0 : i32, i32
  }
  func.func @transform_5(%arg0: i32, %arg1: i32) -> (i32, i32, i32) {
    %c0_i32 = arith.constant 0 : i32
    %c0_i32_0 = arith.constant 0 : i32
    return %arg0, %arg1, %c0_i32 : i32, i32, i32
  }
}

module attributes {stable_mosaic.version = 11 : i64} {
  func.func @_global_corr_kernel(%arg0: i32, %arg1: i32, %arg2: i32, %arg3: memref<1x64x128xbf16, #tpu.memory_space<vmem>>, %arg4: memref<1x64x128xbf16, #tpu.memory_space<vmem>>, %arg5: memref<64x8xf32, #tpu.memory_space<vmem>>, %arg6: memref<64x8xf32, #tpu.memory_space<vmem>>, %arg7: memref<1x64x8xf32, #tpu.memory_space<vmem>>, %arg8: memref<64x1xf32, #tpu.memory_space<vmem>>, %arg9: memref<64x1xf32, #tpu.memory_space<vmem>>, %arg10: memref<64x8xf32, #tpu.memory_space<vmem>>) attributes {dimension_semantics = [#tpu.dimension_semantics<parallel>, #tpu.dimension_semantics<parallel>, #tpu.dimension_semantics<arbitrary>], iteration_bounds = array<i64: 2, 1, 1>, scalar_prefetch = 0 : i64, scratch_operands = 3 : i64, tpu.core_type = #tpu.core_type<tc>, window_params = [{transform_indices = @transform_0, window_bounds = array<i64: 1, 64, 128>}, {transform_indices = @transform_1, window_bounds = array<i64: 1, 64, 128>}, {transform_indices = @transform_2, window_bounds = array<i64: 64, 8>}, {transform_indices = @transform_3, window_bounds = array<i64: 64, 8>}, {transform_indices = @transform_4, window_bounds = array<i64: 1, 64, 8>}]} {
    %c0_i32 = arith.constant 0 : i32
    %0 = arith.cmpi eq, %arg2, %c0_i32 : i32
    %1 = arith.extui %0 : i1 to i32
    %c0_i32_0 = arith.constant 0 : i32
    %2 = arith.cmpi ne, %1, %c0_i32_0 : i32
    scf.if %2 {
      %cst_26 = arith.constant 0xFF800000 : f32
      %36 = vector.broadcast %cst_26 : f32 to vector<64x1xf32>
      %c0_27 = arith.constant 0 : index
      %c0_28 = arith.constant 0 : index
      %37 = vector.load %arg8[%c0_27, %c0_28] : memref<64x1xf32, #tpu.memory_space<vmem>>, vector<64x1xf32>
      tpu.vector_store %arg8[%c0_27, %c0_28], %36 {strides = array<i32>} : memref<64x1xf32, #tpu.memory_space<vmem>>, vector<64x1xf32>,
      %cst_29 = arith.constant 0.000000e+00 : f32
      %38 = vector.broadcast %cst_29 : f32 to vector<64x1xf32>
      %c0_30 = arith.constant 0 : index
      %c0_31 = arith.constant 0 : index
      %39 = vector.load %arg9[%c0_30, %c0_31] : memref<64x1xf32, #tpu.memory_space<vmem>>, vector<64x1xf32>
      tpu.vector_store %arg9[%c0_30, %c0_31], %38 {strides = array<i32>} : memref<64x1xf32, #tpu.memory_space<vmem>>, vector<64x1xf32>,
      %cst_32 = arith.constant 0.000000e+00 : f32
      %40 = vector.broadcast %cst_32 : f32 to vector<64x8xf32>
      %c0_33 = arith.constant 0 : index
      %c0_34 = arith.constant 0 : index
      %41 = vector.load %arg10[%c0_33, %c0_34] : memref<64x8xf32, #tpu.memory_space<vmem>>, vector<64x8xf32>
      tpu.vector_store %arg10[%c0_33, %c0_34], %40 {strides = array<i32>} : memref<64x8xf32, #tpu.memory_space<vmem>>, vector<64x8xf32>,
    } else {
    }
    %c0 = arith.constant 0 : index
    %c0_1 = arith.constant 0 : index
    %c0_2 = arith.constant 0 : index
    %3 = vector.load %arg3[%c0, %c0_1, %c0_2] : memref<1x64x128xbf16, #tpu.memory_space<vmem>>, vector<1x64x128xbf16>
    %4 = vector.shape_cast %3 : vector<1x64x128xbf16> to vector<64x128xbf16>
    %cst = arith.constant 8.837890e-02 : bf16
    %5 = vector.broadcast %cst : bf16 to vector<64x128xbf16>
    %6 = arith.mulf %4, %5 : vector<64x128xbf16>
    %c0_3 = arith.constant 0 : index
    %c0_4 = arith.constant 0 : index
    %c0_5 = arith.constant 0 : index
    %7 = vector.load %arg4[%c0_3, %c0_4, %c0_5] : memref<1x64x128xbf16, #tpu.memory_space<vmem>>, vector<1x64x128xbf16>
    %8 = vector.shape_cast %7 : vector<1x64x128xbf16> to vector<64x128xbf16>
    %cst_6 = arith.constant dense<0.000000e+00> : vector<64x64xf32>
    %9 = tpu.matmul %6, %8, %cst_6 {dimension_numbers = #tpu.dot_dimension_numbers<[1], [1], [0], [0], [0, 0, 1, 0], [], []>} : vector<64x128xbf16>, vector<64x128xbf16>, vector<64x64xf32> -> vector<64x64xf32>
    %c0_7 = arith.constant 0 : index
    %c0_8 = arith.constant 0 : index
    %10 = vector.load %arg8[%c0_7, %c0_8] : memref<64x1xf32, #tpu.memory_space<vmem>>, vector<64x1xf32>
    %cst_9 = arith.constant dense<0xFF800000> : vector<64xf32>
    %11 = vector.multi_reduction <maximumf>, %9, %cst_9 [1] : vector<64x64xf32> to vector<64xf32>
    %12 = vector.shape_cast %11 : vector<64xf32> to vector<64x1xf32>
    %13 = arith.maximumf %10, %12 : vector<64x1xf32>
    %14 = arith.subf %10, %13 : vector<64x1xf32>
    %15 = math.exp %14 : vector<64x1xf32>
    %16 = vector.broadcast %13 : vector<64x1xf32> to vector<64x64xf32>
    %17 = arith.subf %9, %16 : vector<64x64xf32>
    %18 = math.exp %17 : vector<64x64xf32>
    %c0_10 = arith.constant 0 : index
    %c0_11 = arith.constant 0 : index
    %19 = vector.load %arg9[%c0_10, %c0_11] : memref<64x1xf32, #tpu.memory_space<vmem>>, vector<64x1xf32>
    %20 = arith.mulf %15, %19 : vector<64x1xf32>
    %cst_12 = arith.constant dense<0.000000e+00> : vector<64xf32>
    %21 = vector.multi_reduction <add>, %18, %cst_12 [1] : vector<64x64xf32> to vector<64xf32>
    %22 = vector.shape_cast %21 : vector<64xf32> to vector<64x1xf32>
    %23 = arith.addf %20, %22 : vector<64x1xf32>
    %c0_13 = arith.constant 0 : index
    %c0_14 = arith.constant 0 : index
    %24 = vector.load %arg9[%c0_13, %c0_14] : memref<64x1xf32, #tpu.memory_space<vmem>>, vector<64x1xf32>
    tpu.vector_store %arg9[%c0_13, %c0_14], %23 {strides = array<i32>} : memref<64x1xf32, #tpu.memory_space<vmem>>, vector<64x1xf32>,
    %c0_15 = arith.constant 0 : index
    %c0_16 = arith.constant 0 : index
    %25 = vector.load %arg10[%c0_15, %c0_16] : memref<64x8xf32, #tpu.memory_space<vmem>>, vector<64x8xf32>
    %26 = vector.broadcast %15 : vector<64x1xf32> to vector<64x8xf32>
    %27 = arith.mulf %26, %25 : vector<64x8xf32>
    %c0_17 = arith.constant 0 : index
    %c0_18 = arith.constant 0 : index
    %28 = vector.load %arg5[%c0_17, %c0_18] : memref<64x8xf32, #tpu.memory_space<vmem>>, vector<64x8xf32>
    %cst_19 = arith.constant dense<0.000000e+00> : vector<64x8xf32>
    %29 = tpu.matmul %18, %28, %cst_19 {dimension_numbers = #tpu.dot_dimension_numbers<[1], [0], [0], [1], [0, 0, 1, 1], [], []>} : vector<64x64xf32>, vector<64x8xf32>, vector<64x8xf32> -> vector<64x8xf32>
    %30 = arith.addf %27, %29 : vector<64x8xf32>
    %c0_20 = arith.constant 0 : index
    %c0_21 = arith.constant 0 : index
    %31 = vector.load %arg10[%c0_20, %c0_21] : memref<64x8xf32, #tpu.memory_space<vmem>>, vector<64x8xf32>
    tpu.vector_store %arg10[%c0_20, %c0_21], %30 {strides = array<i32>} : memref<64x8xf32, #tpu.memory_space<vmem>>, vector<64x8xf32>,
    %c0_22 = arith.constant 0 : index
    %c0_23 = arith.constant 0 : index
    %32 = vector.load %arg8[%c0_22, %c0_23] : memref<64x1xf32, #tpu.memory_space<vmem>>, vector<64x1xf32>
    tpu.vector_store %arg8[%c0_22, %c0_23], %13 {strides = array<i32>} : memref<64x1xf32, #tpu.memory_space<vmem>>, vector<64x1xf32>,
    %c0_i32_24 = arith.constant 0 : i32
    %33 = arith.cmpi eq, %arg2, %c0_i32_24 : i32
    %34 = arith.extui %33 : i1 to i32
    %c0_i32_25 = arith.constant 0 : i32
    %35 = arith.cmpi ne, %34, %c0_i32_25 : i32
    scf.if %35 {
      %c0_26 = arith.constant 0 : index
      %c0_27 = arith.constant 0 : index
      %36 = vector.load %arg10[%c0_26, %c0_27] : memref<64x8xf32, #tpu.memory_space<vmem>>, vector<64x8xf32>
      %c0_28 = arith.constant 0 : index
      %c0_29 = arith.constant 0 : index
      %37 = vector.load %arg9[%c0_28, %c0_29] : memref<64x1xf32, #tpu.memory_space<vmem>>, vector<64x1xf32>
      %38 = vector.broadcast %37 : vector<64x1xf32> to vector<64x8xf32>
      %39 = arith.divf %36, %38 : vector<64x8xf32>
      %c0_30 = arith.constant 0 : index
      %c0_31 = arith.constant 0 : index
      %40 = vector.load %arg6[%c0_30, %c0_31] : memref<64x8xf32, #tpu.memory_space<vmem>>, vector<64x8xf32>
      %41 = arith.subf %39, %40 : vector<64x8xf32>
      %c0_32 = arith.constant 0 : index
      %c0_33 = arith.constant 0 : index
      %c0_34 = arith.constant 0 : index
      %42 = vector.load %arg7[%c0_32, %c0_33, %c0_34] : memref<1x64x8xf32, #tpu.memory_space<vmem>>, vector<1x64x8xf32>
      %43 = vector.shape_cast %42 : vector<1x64x8xf32> to vector<64x8xf32>
      %44 = vector.shape_cast %41 : vector<64x8xf32> to vector<1x64x8xf32>
      tpu.vector_store %arg7[%c0_32, %c0_33, %c0_34], %44 {strides = array<i32>} : memref<1x64x8xf32, #tpu.memory_space<vmem>>, vector<1x64x8xf32>,
    } else {
    }
    return
  }
  func.func @transform_0(%arg0: i32, %arg1: i32, %arg2: i32) -> (i32, i32, i32) {
    %c0_i32 = arith.constant 0 : i32
    %c0_i32_0 = arith.constant 0 : i32
    return %arg0, %arg1, %c0_i32 : i32, i32, i32
  }
  func.func @transform_1(%arg0: i32, %arg1: i32, %arg2: i32) -> (i32, i32, i32) {
    %c0_i32 = arith.constant 0 : i32
    %c0_i32_0 = arith.constant 0 : i32
    return %arg0, %arg2, %c0_i32 : i32, i32, i32
  }
  func.func @transform_2(%arg0: i32, %arg1: i32, %arg2: i32) -> (i32, i32) {
    %c0_i32 = arith.constant 0 : i32
    %c0_i32_0 = arith.constant 0 : i32
    return %arg2, %c0_i32 : i32, i32
  }
  func.func @transform_3(%arg0: i32, %arg1: i32, %arg2: i32) -> (i32, i32) {
    %c0_i32 = arith.constant 0 : i32
    %c0_i32_0 = arith.constant 0 : i32
    return %arg1, %c0_i32 : i32, i32
  }
  func.func @transform_4(%arg0: i32, %arg1: i32, %arg2: i32) -> (i32, i32, i32) {
    %c0_i32 = arith.constant 0 : i32
    %c0_i32_0 = arith.constant 0 : i32
    return %arg0, %arg1, %c0_i32 : i32, i32, i32
  }
}

</mosaic_0001>

<llo_original>
// kernel: gmflow_forward.4
$region0: #{gmflow_forward.4}
  #allocation0 [shape = 'u32[]', space=smem, size = 0x4, offset = 0x4, fixed_abs, tag = 'smem constant byte address 0x4 - core index']
  #allocation1 [shape = 'u32[72,128]{1,0:T(1,128)}', space=vmem, size = 0x9000, scoped, tag = 'internal scratch']
  %s0 = inlined_call_operand.vmem [shape: bf16[4,64,48], index: 0, kind: input, shape index: {}]
  %s1 = inlined_call_operand.vmem [shape: bf16[48,128], index: 1, kind: input, shape index: {}]
  %s2 = inlined_call_operand.vmem [shape: f32[1,128], index: 2, kind: input, shape index: {}]
  %s3 = inlined_call_operand.vmem [shape: bf16[4,64,128], index: 3, kind: output, shape index: {}]
  %s4 = sld [smem:[#allocation0]]
  $region45: #{gmflow_forward.4} parent=0
    _
  %s6 = ssub.s32 1, %s4
  %s7 = scalar_select 0, %s6, %s4
  loop: start=0, step=1, limit=6
  $region2: #{gmflow_forward.4} parent=0 // loop_pre_header
    _
  $region3: #{gmflow_forward.4} parent=0 // loop_header
    %s9 = sphi 0, %s13
    %p10 = scmp.ge.s32.totalorder %s9, 6
    %s16 = sphi 0, %s28
    %s17 = sphi 0, %s24
    %s18 = sphi 0, %s16
    %s19 = sphi 0, %s17
    %s20 = sphi 0, %s18
    %s21 = sphi 0, %s19
    %s33 = sphi 0, %s35
    %s36 = sphi 0, %s33
    %s37 = sphi 0, %s36
    %s53 = sphi 0, %s37
    %s57 = sphi 0, %s57
    %s59 = sphi 0, %s57
    %s60 = sphi 0, %s59
    %s74 = sphi 0, %s60
    %s78 = sphi 0, %s78
    %s80 = sphi 0, %s78
    %s81 = sphi 0, %s80
    %s95 = sphi 0, %s81
    %s103 = sphi 0, %s105
    %s106 = sphi 0, %s103
    %s107 = sphi 0, %s106
    %s123 = sphi 0, %s107
  $region4: #{gmflow_forward.4} parent=0 // loop_header_branch
    %12 = sbr.rel (%p10) target = $region8
  $region5: #{gmflow_forward.4} parent=0 // loop_body
    %s14 = ssub.s32 %s9, 1
    %s15 = ssub.s32 %s9, 2
    %s22 = sadd.s32 1, %s17
    %p23 = scmp.ge.s32.totalorder %s22, 1
    %s24 = scalar_select %p23, 0, %s22
    %s25 = sadd.s32 1, %s16
    %s26 = scalar_select %p23, %s25, %s16
    %p27 = scmp.ge.s32.totalorder %s26, 4
    %s28 = scalar_select %p27, 0, %s26
    %s29 = ssub.s32 %s16, %s28
    %s30 = ssub.s32 %s17, %s24
    %s31 = sor.u32 %s29, %s30
    %p32 = scmp.eq.s32.totalorder %s31, 0
    %s34 = sadd.s32 %s33, 1
    %s35 = scalar_select %p32, %s33, %s34
    %p38 = pneg %p32
    %p39 = scmp.eq.s32.totalorder %s9, 3
    %p40 = por %p38, %p39
    %p41 = scmp.ne.s32.totalorder %s33, %s36
    %p42 = scmp.eq.s32.totalorder %s9, 0
    %p43 = por %p41, %p42
    %p44 = scmp.ne.s32.totalorder %s33, %s36
    %p45 = scmp.eq.s32.totalorder %s14, 3
    %p46 = por %p44, %p45
    %p47 = scmp.ne.s32.totalorder %s36, %s37
    %p48 = scmp.eq.s32.totalorder %s14, 0
    %p49 = por %p47, %p48
    %p50 = scmp.ne.s32.totalorder %s36, %s37
    %p51 = scmp.eq.s32.totalorder %s15, 3
    %p52 = por %p50, %p51
    %p54 = scmp.ne.s32.totalorder %s37, %s53
    %p55 = scmp.eq.s32.totalorder %s15, 0
    %p56 = por %p54, %p55
    %s58 = sadd.s32 %s57, 1
    %p61 = scmp.eq.s32.totalorder %s9, 3
    %p62 = scmp.ne.s32.totalorder %s57, %s59
    %p63 = scmp.eq.s32.totalorder %s9, 0
    %p64 = por %p62, %p63
    %p65 = scmp.ne.s32.totalorder %s57, %s59
    %p66 = scmp.eq.s32.totalorder %s14, 3
    %p67 = por %p65, %p66
    %p68 = scmp.ne.s32.totalorder %s59, %s60
    %p69 = scmp.eq.s32.totalorder %s14, 0
    %p70 = por %p68, %p69
    %p71 = scmp.ne.s32.totalorder %s59, %s60
    %p72 = scmp.eq.s32.totalorder %s15, 3
    %p73 = por %p71, %p72
    %p75 = scmp.ne.s32.totalorder %s60, %s74
    %p76 = scmp.eq.s32.totalorder %s15, 0
    %p77 = por %p75, %p76
    %s79 = sadd.s32 %s78, 1
    %p82 = scmp.eq.s32.totalorder %s9, 3
    %p83 = scmp.ne.s32.totalorder %s78, %s80
    %p84 = scmp.eq.s32.totalorder %s9, 0
    %p85 = por %p83, %p84
    %p86 = scmp.ne.s32.totalorder %s78, %s80
    %p87 = scmp.eq.s32.totalorder %s14, 3
    %p88 = por %p86, %p87
    %p89 = scmp.ne.s32.totalorder %s80, %s81
    %p90 = scmp.eq.s32.totalorder %s14, 0
    %p91 = por %p89, %p90
    %p92 = scmp.ne.s32.totalorder %s80, %s81
    %p93 = scmp.eq.s32.totalorder %s15, 3
    %p94 = por %p92, %p93
    %p96 = scmp.ne.s32.totalorder %s81, %s95
    %p97 = scmp.eq.s32.totalorder %s15, 0
    %p98 = por %p96, %p97
    %s99 = ssub.s32 %s16, %s28
    %s100 = ssub.s32 %s17, %s24
    %s101 = sor.u32 %s99, %s100
    %p102 = scmp.eq.s32.totalorder %s101, 0
    %s104 = sadd.s32 %s103, 1
    %s105 = scalar_select %p102, %s103, %s104
    %p108 = pneg %p102
    %p109 = scmp.eq.s32.totalorder %s9, 3
    %p110 = por %p108, %p109
    %p111 = scmp.ne.s32.totalorder %s103, %s106
    %p112 = scmp.eq.s32.totalorder %s9, 0
    %p113 = por %p111, %p112
    %p114 = scmp.ne.s32.totalorder %s103, %s106
    %p115 = scmp.eq.s32.totalorder %s14, 3
    %p116 = por %p114, %p115
    %p117 = scmp.ne.s32.totalorder %s106, %s107
    %p118 = scmp.eq.s32.totalorder %s14, 0
    %p119 = por %p117, %p118
    %p120 = scmp.ne.s32.totalorder %s106, %s107
    %p121 = scmp.eq.s32.totalorder %s15, 3
    %p122 = por %p120, %p121
    %p124 = scmp.ne.s32.totalorder %s107, %s123
    %p125 = scmp.eq.s32.totalorder %s15, 0
    %p126 = por %p124, %p125
    %p127 = scmp.le.s32.totalorder 1, %s9
    %p128 = scmp.lt.s32.totalorder %s9, 5
    %p129 = pnand %p127, %p128
    %p130 = pneg %p129
    // Predicated region
    $region9: #{gmflow_forward.4} parent=5 // pred_check
      _
    $region10: #{gmflow_forward.4} parent=5 // pred_check_branch
      %132 = sbr.rel (%p129) target = $region12
    $region11: #{gmflow_forward.4} parent=5 // pred_region
      %s133 = ssub.s32 %s9, 1
      // Predicated region
      $region13: #{gmflow_forward.4} parent=11 // pred_check
        %p134 = pneg %p70
      $region14: #{gmflow_forward.4} parent=11 // pred_check_branch
        %136 = sbr.rel (%p134) target = $region16
      $region15: #{gmflow_forward.4} parent=11 // pred_region
        _
      $region16: #{gmflow_forward.4} parent=11 // pred_fallthru
        _
      // Predicated region
      $region17: #{gmflow_forward.4} parent=11 // pred_check
        %p137 = pneg %p91
      $region18: #{gmflow_forward.4} parent=11 // pred_check_branch
        %139 = sbr.rel (%p137) target = $region20
      $region19: #{gmflow_forward.4} parent=11 // pred_region
        _
      $region20: #{gmflow_forward.4} parent=11 // pred_fallthru
        _
    $region12: #{gmflow_forward.4} parent=5 // pred_fallthru
      _
    %p140 = scmp.lt.s32.totalorder %s9, 4
    // Predicated region
    $region21: #{gmflow_forward.4} parent=5 // pred_check
      %p141 = pneg %p140
    $region22: #{gmflow_forward.4} parent=5 // pred_check_branch
      %143 = sbr.rel (%p141) target = $region24
    $region23: #{gmflow_forward.4} parent=5 // pred_region
      // Predicated region
      $region25: #{gmflow_forward.4} parent=23 // pred_check
        %p144 = pneg %p43
      $region26: #{gmflow_forward.4} parent=23 // pred_check_branch
        %146 = sbr.rel (%p144) target = $region28
      $region27: #{gmflow_forward.4} parent=23 // pred_region
        %s147 = smul.u32 8, %s17
        %p148 = scmp.lt.s32.totalorder %s16, 3
        %s149 = scalar_select %p148, %s16, 3
        %p150 = scmp.lt.s32.totalorder %s147, 7
        %s151 = scalar_select %p150, %s147, 7
        %s152 = smul.addr %s149, 8
        %s153 = sadd.s32 %s151, %s152
        %s154 = smul.addr %s153, 4
        %s155 = scalar_lea.vmem %s0, %s154
        %s156 = smul.u32 8, %s17
      $region28: #{gmflow_forward.4} parent=23 // pred_fallthru
        _
    $region24: #{gmflow_forward.4} parent=5 // pred_fallthru
      _
    %p157 = scmp.le.s32.totalorder 1, %s9
    %p158 = scmp.lt.s32.totalorder %s9, 5
    %p159 = pnand %p157, %p158
    %p160 = pneg %p159
    // Predicated region
    $region29: #{gmflow_forward.4} parent=5 // pred_check
      _
    $region30: #{gmflow_forward.4} parent=5 // pred_check_branch
      %162 = sbr.rel (%p159) target = $region32
    $region31: #{gmflow_forward.4} parent=5 // pred_region
      %s163 = ssub.s32 %s9, 1
      %s164 = smul.u32 8, %s19
      %p165 = scmp.lt.s32.totalorder %s18, 3
      %s166 = scalar_select %p165, %s18, 3
      %p167 = scmp.lt.s32.totalorder %s164, 7
      %s168 = scalar_select %p167, %s164, 7
      %s169 = smul.addr %s166, 8
      %s170 = sadd.s32 %s168, %s169
      %s171 = smul.addr %s170, 4
      %s172 = scalar_lea.vmem %s0, %s171
      %p173 = pneg %p49
      %p174 = pneg %p46
      %p175 = pneg %p70
      %p176 = pneg %p67
      %p177 = pneg %p91
      %p178 = pneg %p88
      %p179 = pneg %p119
      %p180 = pneg %p116
      %s181 = smul.u32 8, %s19
      %p182 = scmp.lt.s32.totalorder %s18, 3
      %s183 = scalar_select %p182, %s18, 3
      %p184 = scmp.lt.s32.totalorder %s181, 7
      %s185 = scalar_select %p184, %s181, 7
      %s186 = smul.addr %s183, 8
      %s187 = sadd.s32 %s185, %s186
      %s188 = smul.addr %s187, 4
      %s189 = scalar_lea.vmem %s3, %s188
      %s190 = smul.u32 8, %s19
      %p191 = scmp.lt.s32.totalorder %s18, 3
      %s192 = scalar_select %p191, %s18, 3
      %p193 = scmp.lt.s32.totalorder %s190, 7
      %s194 = scalar_select %p193, %s190, 7
      %s195 = smul.addr %s192, 8
      %s196 = sadd.s32 %s194, %s195
      %s197 = smul.addr %s196, 4
      %s198 = scalar_lea.vmem %s0, %s197
      %s199 = smul.u32 8, %s19
      %s200 = smul.u32 8, %s19
      %p201 = scmp.lt.s32.totalorder %s18, 3
      %s202 = scalar_select %p201, %s18, 3
      %p203 = scmp.lt.s32.totalorder %s200, 7
      %s204 = scalar_select %p203, %s200, 7
      %s205 = smul.addr %s202, 8
      %s206 = sadd.s32 %s204, %s205
      %s207 = smul.addr %s206, 4
      %s208 = scalar_lea.vmem %s3, %s207
      %s209 = smul.u32 8, %s19
      %v211 = vld [vmem:[%s198] sm:$0xf]
      %v212 = vld [vmem:[%s198 + $0x4] sm:$0xf]
      %v213 = vld [vmem:[%s198 + $0x8] sm:$0xf]
      %v214 = vld [vmem:[%s198 + $0xc] sm:$0xf]
      %v215 = vld [vmem:[%s198 + $0x10] sm:$0xf]
      %v216 = vld [vmem:[%s198 + $0x14] sm:$0xf]
      %v217 = vld [vmem:[%s198 + $0x18] sm:$0xf]
      %v218 = vld [vmem:[%s198 + $0x1c] sm:$0xf]
      %v219 = vld [vmem:[%s1] sm:$0xf]
      %v220 = vld [vmem:[%s1 + $0x4] sm:$0xf]
      %v221 = vld [vmem:[%s1 + $0x8] sm:$0xf]
      %v222 = vld [vmem:[%s1 + $0xc] sm:$0xf]
      %v223 = vld [vmem:[%s1 + $0x10] sm:$0xf]
      %v224 = vld [vmem:[%s1 + $0x14] sm:$0xf]
      %v225 = vld [vmem:[%s2] sm:$0x1]
      %v227 = vperm.slane %v225, 0
      %v237 = vunpack.c.l.b16 %v211
      %v238 = vunpack.c.l.b16 %v212
      %v239 = vunpack.c.l.b16 %v213
      %v240 = vunpack.c.l.b16 %v214
      %v241 = vunpack.c.l.b16 %v215
      %v242 = vunpack.c.l.b16 %v216
      %v243 = vunpack.c.l.b16 %v217
      %v244 = vunpack.c.l.b16 %v218
      %v245 = vpack.c.b16 %v238, %v237
      %v246 = vpack.c.b16 %v240, %v239
      %v247 = vpack.c.b16 %v242, %v241
      %v248 = vpack.c.b16 %v244, %v243
      %v255 = vunpack.c.l.b16 %v219
      %v256 = vunpack.c.l.b16 %v220
      %v257 = vunpack.c.l.b16 %v221
      %v258 = vunpack.c.l.b16 %v222
      %v259 = vunpack.c.l.b16 %v223
      %v260 = vunpack.c.l.b16 %v224
      %v261 = vpack.c.b16 %v256, %v255
      %v262 = vpack.c.b16 %v258, %v257
      %v263 = vpack.c.b16 %v260, %v259
      %vm267 = vcmask 392192
      %v269 = vsel %vm267, %v245, 0
      %v272 = vsel %vm267, %v246, 0
      %v275 = vsel %vm267, %v247, 0
      %v278 = vsel %vm267, %v248, 0
      %280 = vmatpush.bf16.msra.mxu0 0
      %281 = vmatpush.bf16.msra.mxu0 0
      %282 = vmatpush.bf16.msra.mxu0 0
      %283 = vmatpush.bf16.msra.mxu0 0
      %284 = vmatpush.bf16.msra.mxu0 0
      %285 = vmatpush.bf16.msra.mxu0 %v263
      %286 = vmatpush.bf16.msra.mxu0 %v262
      %287 = vmatpush.bf16.msra.mxu0 %v261
      %288 = vmatmul.bf16.gmra.mxu0 %v269
      %v289 = vpop.f32.mrf.mxu0
      %v290 = vadd.f32 %v227, %v289
      %v291 = vpop.f32.mrf.mxu0
      %v292 = vadd.f32 %v227, %v291
      %293 = vmatmul.bf16.gmra.mxu0 %v272
      %v294 = vpop.f32.mrf.mxu0
      %v295 = vadd.f32 %v227, %v294
      %v296 = vpop.f32.mrf.mxu0
      %v297 = vadd.f32 %v227, %v296
      %298 = vmatmul.bf16.gmra.mxu0 %v275
      %v299 = vpop.f32.mrf.mxu0
      %v300 = vadd.f32 %v227, %v299
      %v301 = vpop.f32.mrf.mxu0
      %v302 = vadd.f32 %v227, %v301
      %303 = vmatmul.bf16.gmra.mxu0 %v278
      %v304 = vpop.f32.mrf.mxu0
      %v305 = vadd.f32 %v227, %v304
      %v306 = vpop.f32.mrf.mxu0
      %v307 = vadd.f32 %v227, %v306
      %308 = vdwg.mxu0
      %v309 = vmax.f32 %v290, 0.0
      %v310 = vmax.f32 %v292, 0.0
      %v311 = vmax.f32 %v295, 0.0
      %v312 = vmax.f32 %v297, 0.0
      %v313 = vmax.f32 %v300, 0.0
      %v314 = vmax.f32 %v302, 0.0
      %v315 = vmax.f32 %v305, 0.0
      %v316 = vmax.f32 %v307, 0.0
      %v317 = vpack.c.bf16 %v309, %v309
      %v318 = vpack.c.bf16 %v310, %v310
      %v319 = vpack.c.bf16 %v311, %v311
      %v320 = vpack.c.bf16 %v312, %v312
      %v321 = vpack.c.bf16 %v313, %v313
      %v322 = vpack.c.bf16 %v314, %v314
      %v323 = vpack.c.bf16 %v315, %v315
      %v324 = vpack.c.bf16 %v316, %v316
      %325 = vst [vmem:[%s208] sm:$0xf] %v317
      %326 = vst [vmem:[%s208 + $0x4] sm:$0xf] %v318
      %327 = vst [vmem:[%s208 + $0x8] sm:$0xf] %v319
      %328 = vst [vmem:[%s208 + $0xc] sm:$0xf] %v320
      %329 = vst [vmem:[%s208 + $0x10] sm:$0xf] %v321
      %330 = vst [vmem:[%s208 + $0x14] sm:$0xf] %v322
      %331 = vst [vmem:[%s208 + $0x18] sm:$0xf] %v323
      %332 = vst [vmem:[%s208 + $0x1c] sm:$0xf] %v324
      %s333 = smul.u32 8, %s19
      %p334 = scmp.lt.s32.totalorder %s18, 3
      %s335 = scalar_select %p334, %s18, 3
      %p336 = scmp.lt.s32.totalorder %s333, 7
      %s337 = scalar_select %p336, %s333, 7
      %s338 = smul.addr %s335, 8
      %s339 = sadd.s32 %s337, %s338
      %s340 = smul.addr %s339, 4
      %s341 = scalar_lea.vmem %s3, %s340
      // Predicated region
      $region33: #{gmflow_forward.4} parent=31 // pred_check
        %p342 = pneg %p116
      $region34: #{gmflow_forward.4} parent=31 // pred_check_branch
        %344 = sbr.rel (%p342) target = $region36
      $region35: #{gmflow_forward.4} parent=31 // pred_region
        %s345 = smul.u32 8, %s19
      $region36: #{gmflow_forward.4} parent=31 // pred_fallthru
        _
    $region32: #{gmflow_forward.4} parent=5 // pred_fallthru
      _
    %p346 = scmp.le.s32.totalorder 2, %s9
    // Predicated region
    $region37: #{gmflow_forward.4} parent=5 // pred_check
      %p347 = pneg %p346
    $region38: #{gmflow_forward.4} parent=5 // pred_check_branch
      %349 = sbr.rel (%p347) target = $region40
    $region39: #{gmflow_forward.4} parent=5 // pred_region
      %s350 = ssub.s32 %s9, 2
      // Predicated region
      $region41: #{gmflow_forward.4} parent=39 // pred_check
        %p351 = pneg %p122
      $region42: #{gmflow_forward.4} parent=39 // pred_check_branch
        %353 = sbr.rel (%p351) target = $region44
      $region43: #{gmflow_forward.4} parent=39 // pred_region
        %s354 = smul.u32 8, %s21
        %p355 = scmp.lt.s32.totalorder %s20, 3
        %s356 = scalar_select %p355, %s20, 3
        %p357 = scmp.lt.s32.totalorder %s354, 7
        %s358 = scalar_select %p357, %s354, 7
        %s359 = smul.addr %s356, 8
        %s360 = sadd.s32 %s358, %s359
        %s361 = smul.addr %s360, 4
        %s362 = scalar_lea.vmem %s3, %s361
      $region44: #{gmflow_forward.4} parent=39 // pred_fallthru
        _
    $region40: #{gmflow_forward.4} parent=5 // pred_fallthru
      _
  $region6: #{gmflow_forward.4} parent=0 // loop_footer
    %s13 = sadd.s32 1, %s9
  $region7: #{gmflow_forward.4} parent=0 // loop_footer_branch
    %8 = sbr.rel target = $region3
  $region8: #{gmflow_forward.4} parent=0 // loop_exit
    _

// kernel: gmflow_forward.5
$region0: #{gmflow_forward.5}
  #allocation0 [shape = 'u32[]', space=smem, size = 0x4, offset = 0x4, fixed_abs, tag = 'smem constant byte address 0x4 - core index']
  #allocation1 [shape = 'u32[72,128]{1,0:T(1,128)}', space=vmem, size = 0x9000, scoped, tag = 'internal scratch']
  %s0 = inlined_call_operand.vmem [shape: bf16[4,64,128], index: 0, kind: input, shape index: {}]
  %s1 = inlined_call_operand.vmem [shape: bf16[128,128], index: 1, kind: input, shape index: {}]
  %s2 = inlined_call_operand.vmem [shape: bf16[128,128], index: 2, kind: input, shape index: {}]
  %s3 = inlined_call_operand.vmem [shape: bf16[128,128], index: 3, kind: input, shape index: {}]
  %s4 = inlined_call_operand.vmem [shape: bf16[4,64,128], index: 4, kind: output, shape index: {}]
  %s5 = sld [smem:[#allocation0]]
  $region49: #{gmflow_forward.5} parent=0
    _
  %s7 = ssub.s32 1, %s5
  %s8 = scalar_select 0, %s7, %s5
  loop: start=0, step=1, limit=18
  $region2: #{gmflow_forward.5} parent=0 // loop_pre_header
    _
  $region3: #{gmflow_forward.5} parent=0 // loop_header
    %s10 = sphi 0, %s14
    %p11 = scmp.ge.s32.totalorder %s10, 18
    %s17 = sphi 0, %s29
    %s18 = sphi 0, %s25
    %s19 = sphi 0, %s17
    %s20 = sphi 0, %s18
    %s21 = sphi 0, %s19
    %s22 = sphi 0, %s20
    %s34 = sphi 0, %s36
    %s37 = sphi 0, %s34
    %s38 = sphi 0, %s37
    %s54 = sphi 0, %s38
    %s58 = sphi 0, %s58
    %s60 = sphi 0, %s58
    %s61 = sphi 0, %s60
    %s75 = sphi 0, %s61
    %s79 = sphi 0, %s79
    %s81 = sphi 0, %s79
    %s82 = sphi 0, %s81
    %s96 = sphi 0, %s82
    %s100 = sphi 0, %s100
    %s102 = sphi 0, %s100
    %s103 = sphi 0, %s102
    %s117 = sphi 0, %s103
    %s125 = sphi 0, %s127
    %s128 = sphi 0, %s125
    %s129 = sphi 0, %s128
    %s145 = sphi 0, %s129
  $region4: #{gmflow_forward.5} parent=0 // loop_header_branch
    %13 = sbr.rel (%p11) target = $region8
  $region5: #{gmflow_forward.5} parent=0 // loop_body
    %s15 = ssub.s32 %s10, 1
    %s16 = ssub.s32 %s10, 2
    %s23 = sadd.s32 1, %s18
    %p24 = scmp.ge.s32.totalorder %s23, 4
    %s25 = scalar_select %p24, 0, %s23
    %s26 = sadd.s32 1, %s17
    %s27 = scalar_select %p24, %s26, %s17
    %p28 = scmp.ge.s32.totalorder %s27, 4
    %s29 = scalar_select %p28, 0, %s27
    %s30 = ssub.s32 %s17, %s29
    %s31 = ssub.s32 %s18, %s25
    %s32 = sor.u32 %s30, %s31
    %p33 = scmp.eq.s32.totalorder %s32, 0
    %s35 = sadd.s32 %s34, 1
    %s36 = scalar_select %p33, %s34, %s35
    %p39 = pneg %p33
    %p40 = scmp.eq.s32.totalorder %s10, 15
    %p41 = por %p39, %p40
    %p42 = scmp.ne.s32.totalorder %s34, %s37
    %p43 = scmp.eq.s32.totalorder %s10, 0
    %p44 = por %p42, %p43
    %p45 = scmp.ne.s32.totalorder %s34, %s37
    %p46 = scmp.eq.s32.totalorder %s15, 15
    %p47 = por %p45, %p46
    %p48 = scmp.ne.s32.totalorder %s37, %s38
    %p49 = scmp.eq.s32.totalorder %s15, 0
    %p50 = por %p48, %p49
    %p51 = scmp.ne.s32.totalorder %s37, %s38
    %p52 = scmp.eq.s32.totalorder %s16, 15
    %p53 = por %p51, %p52
    %p55 = scmp.ne.s32.totalorder %s38, %s54
    %p56 = scmp.eq.s32.totalorder %s16, 0
    %p57 = por %p55, %p56
    %s59 = sadd.s32 %s58, 1
    %p62 = scmp.eq.s32.totalorder %s10, 15
    %p63 = scmp.ne.s32.totalorder %s58, %s60
    %p64 = scmp.eq.s32.totalorder %s10, 0
    %p65 = por %p63, %p64
    %p66 = scmp.ne.s32.totalorder %s58, %s60
    %p67 = scmp.eq.s32.totalorder %s15, 15
    %p68 = por %p66, %p67
    %p69 = scmp.ne.s32.totalorder %s60, %s61
    %p70 = scmp.eq.s32.totalorder %s15, 0
    %p71 = por %p69, %p70
    %p72 = scmp.ne.s32.totalorder %s60, %s61
    %p73 = scmp.eq.s32.totalorder %s16, 15
    %p74 = por %p72, %p73
    %p76 = scmp.ne.s32.totalorder %s61, %s75
    %p77 = scmp.eq.s32.totalorder %s16, 0
    %p78 = por %p76, %p77
    %s80 = sadd.s32 %s79, 1
    %p83 = scmp.eq.s32.totalorder %s10, 15
    %p84 = scmp.ne.s32.totalorder %s79, %s81
    %p85 = scmp.eq.s32.totalorder %s10, 0
    %p86 = por %p84, %p85
    %p87 = scmp.ne.s32.totalorder %s79, %s81
    %p88 = scmp.eq.s32.totalorder %s15, 15
    %p89 = por %p87, %p88
    %p90 = scmp.ne.s32.totalorder %s81, %s82
    %p91 = scmp.eq.s32.totalorder %s15, 0
    %p92 = por %p90, %p91
    %p93 = scmp.ne.s32.totalorder %s81, %s82
    %p94 = scmp.eq.s32.totalorder %s16, 15
    %p95 = por %p93, %p94
    %p97 = scmp.ne.s32.totalorder %s82, %s96
    %p98 = scmp.eq.s32.totalorder %s16, 0
    %p99 = por %p97, %p98
    %s101 = sadd.s32 %s100, 1
    %p104 = scmp.eq.s32.totalorder %s10, 15
    %p105 = scmp.ne.s32.totalorder %s100, %s102
    %p106 = scmp.eq.s32.totalorder %s10, 0
    %p107 = por %p105, %p106
    %p108 = scmp.ne.s32.totalorder %s100, %s102
    %p109 = scmp.eq.s32.totalorder %s15, 15
    %p110 = por %p108, %p109
    %p111 = scmp.ne.s32.totalorder %s102, %s103
    %p112 = scmp.eq.s32.totalorder %s15, 0
    %p113 = por %p111, %p112
    %p114 = scmp.ne.s32.totalorder %s102, %s103
    %p115 = scmp.eq.s32.totalorder %s16, 15
    %p116 = por %p114, %p115
    %p118 = scmp.ne.s32.totalorder %s103, %s117
    %p119 = scmp.eq.s32.totalorder %s16, 0
    %p120 = por %p118, %p119
    %s121 = ssub.s32 %s17, %s29
    %s122 = ssub.s32 %s18, %s25
    %s123 = sor.u32 %s121, %s122
    %p124 = scmp.eq.s32.totalorder %s123, 0
    %s126 = sadd.s32 %s125, 1
    %s127 = scalar_select %p124, %s125, %s126
    %p130 = pneg %p124
    %p131 = scmp.eq.s32.totalorder %s10, 15
    %p132 = por %p130, %p131
    %p133 = scmp.ne.s32.totalorder %s125, %s128
    %p134 = scmp.eq.s32.totalorder %s10, 0
    %p135 = por %p133, %p134
    %p136 = scmp.ne.s32.totalorder %s125, %s128
    %p137 = scmp.eq.s32.totalorder %s15, 15
    %p138 = por %p136, %p137
    %p139 = scmp.ne.s32.totalorder %s128, %s129
    %p140 = scmp.eq.s32.totalorder %s15, 0
    %p141 = por %p139, %p140
    %p142 = scmp.ne.s32.totalorder %s128, %s129
    %p143 = scmp.eq.s32.totalorder %s16, 15
    %p144 = por %p142, %p143
    %p146 = scmp.ne.s32.totalorder %s129, %s145
    %p147 = scmp.eq.s32.totalorder %s16, 0
    %p148 = por %p146, %p147
    %p149 = scmp.le.s32.totalorder 1, %s10
    %p150 = scmp.lt.s32.totalorder %s10, 17
    %p151 = pnand %p149, %p150
    %p152 = pneg %p151
    // Predicated region
    $region9: #{gmflow_forward.5} parent=5 // pred_check
      _
    $region10: #{gmflow_forward.5} parent=5 // pred_check_branch
      %154 = sbr.rel (%p151) target = $region12
    $region11: #{gmflow_forward.5} parent=5 // pred_region
      %s155 = ssub.s32 %s10, 1
      // Predicated region
      $region13: #{gmflow_forward.5} parent=11 // pred_check
        %p156 = pneg %p71
      $region14: #{gmflow_forward.5} parent=11 // pred_check_branch
        %158 = sbr.rel (%p156) target = $region16
      $region15: #{gmflow_forward.5} parent=11 // pred_region
        _
      $region16: #{gmflow_forward.5} parent=11 // pred_fallthru
        _
      // Predicated region
      $region17: #{gmflow_forward.5} parent=11 // pred_check
        %p159 = pneg %p92
      $region18: #{gmflow_forward.5} parent=11 // pred_check_branch
        %161 = sbr.rel (%p159) target = $region20
      $region19: #{gmflow_forward.5} parent=11 // pred_region
        _
      $region20: #{gmflow_forward.5} parent=11 // pred_fallthru
        _
      // Predicated region
      $region21: #{gmflow_forward.5} parent=11 // pred_check
        %p162 = pneg %p113
      $region22: #{gmflow_forward.5} parent=11 // pred_check_branch
        %164 = sbr.rel (%p162) target = $region24
      $region23: #{gmflow_forward.5} parent=11 // pred_region
        _
      $region24: #{gmflow_forward.5} parent=11 // pred_fallthru
        _
    $region12: #{gmflow_forward.5} parent=5 // pred_fallthru
      _
    %p165 = scmp.lt.s32.totalorder %s10, 16
    // Predicated region
    $region25: #{gmflow_forward.5} parent=5 // pred_check
      %p166 = pneg %p165
    $region26: #{gmflow_forward.5} parent=5 // pred_check_branch
      %168 = sbr.rel (%p166) target = $region28
    $region27: #{gmflow_forward.5} parent=5 // pred_region
      // Predicated region
      $region29: #{gmflow_forward.5} parent=27 // pred_check
        %p169 = pneg %p44
      $region30: #{gmflow_forward.5} parent=27 // pred_check_branch
        %171 = sbr.rel (%p169) target = $region32
      $region31: #{gmflow_forward.5} parent=27 // pred_region
        %s172 = smul.u32 2, %s18
        %p173 = scmp.lt.s32.totalorder %s17, 3
        %s174 = scalar_select %p173, %s17, 3
        %p175 = scmp.lt.s32.totalorder %s172, 7
        %s176 = scalar_select %p175, %s172, 7
        %s177 = smul.addr %s174, 8
        %s178 = sadd.s32 %s176, %s177
        %s179 = smul.addr %s178, 4
        %s180 = scalar_lea.vmem %s0, %s179
        %s181 = smul.u32 2, %s18
      $region32: #{gmflow_forward.5} parent=27 // pred_fallthru
        _
    $region28: #{gmflow_forward.5} parent=5 // pred_fallthru
      _
    %p182 = scmp.le.s32.totalorder 1, %s10
    %p183 = scmp.lt.s32.totalorder %s10, 17
    %p184 = pnand %p182, %p183
    %p185 = pneg %p184
    // Predicated region
    $region33: #{gmflow_forward.5} parent=5 // pred_check
      _
    $region34: #{gmflow_forward.5} parent=5 // pred_check_branch
      %187 = sbr.rel (%p184) target = $region36
    $region35: #{gmflow_forward.5} parent=5 // pred_region
      %s188 = ssub.s32 %s10, 1
      %s189 = smul.u32 2, %s20
      %p190 = scmp.lt.s32.totalorder %s19, 3
      %s191 = scalar_select %p190, %s19, 3
      %p192 = scmp.lt.s32.totalorder %s189, 7
      %s193 = scalar_select %p192, %s189, 7
      %s194 = smul.addr %s191, 8
      %s195 = sadd.s32 %s193, %s194
      %s196 = smul.addr %s195, 4
      %s197 = scalar_lea.vmem %s0, %s196
      %p198 = pneg %p50
      %p199 = pneg %p47
      %p200 = pneg %p71
      %p201 = pneg %p68
      %p202 = pneg %p92
      %p203 = pneg %p89
      %p204 = pneg %p113
      %p205 = pneg %p110
      %p206 = pneg %p141
      %p207 = pneg %p138
      %s208 = smul.u32 2, %s20
      %p209 = scmp.lt.s32.totalorder %s19, 3
      %s210 = scalar_select %p209, %s19, 3
      %p211 = scmp.lt.s32.totalorder %s208, 7
      %s212 = scalar_select %p211, %s208, 7
      %s213 = smul.addr %s210, 8
      %s214 = sadd.s32 %s212, %s213
      %s215 = smul.addr %s214, 4
      %s216 = scalar_lea.vmem %s4, %s215
      %s217 = smul.u32 2, %s20
      %p218 = scmp.lt.s32.totalorder %s19, 3
      %s219 = scalar_select %p218, %s19, 3
      %p220 = scmp.lt.s32.totalorder %s217, 7
      %s221 = scalar_select %p220, %s217, 7
      %s222 = smul.addr %s219, 8
      %s223 = sadd.s32 %s221, %s222
      %s224 = smul.addr %s223, 4
      %s225 = scalar_lea.vmem %s0, %s224
      %s226 = smul.u32 2, %s20
      %s227 = smul.u32 2, %s20
      %p228 = scmp.lt.s32.totalorder %s19, 3
      %s229 = scalar_select %p228, %s19, 3
      %p230 = scmp.lt.s32.totalorder %s227, 7
      %s231 = scalar_select %p230, %s227, 7
      %s232 = smul.addr %s229, 8
      %s233 = sadd.s32 %s231, %s232
      %s234 = smul.addr %s233, 4
      %s235 = scalar_lea.vmem %s4, %s234
      %s236 = smul.u32 2, %s20
      %v238 = vld [vmem:[%s225] sm:$0xf]
      %v239 = vld [vmem:[%s225 + $0x4] sm:$0xf]
      %v240 = vld [vmem:[%s1] sm:$0xf]
      %v241 = vld [vmem:[%s1 + $0x4] sm:$0xf]
      %v242 = vld [vmem:[%s1 + $0x8] sm:$0xf]
      %v243 = vld [vmem:[%s1 + $0xc] sm:$0xf]
      %v244 = vld [vmem:[%s1 + $0x10] sm:$0xf]
      %v245 = vld [vmem:[%s1 + $0x14] sm:$0xf]
      %v246 = vld [vmem:[%s1 + $0x18] sm:$0xf]
      %v247 = vld [vmem:[%s1 + $0x1c] sm:$0xf]
      %v248 = vld [vmem:[%s1 + $0x20] sm:$0xf]
      %v249 = vld [vmem:[%s1 + $0x24] sm:$0xf]
      %v250 = vld [vmem:[%s1 + $0x28] sm:$0xf]
      %v251 = vld [vmem:[%s1 + $0x2c] sm:$0xf]
      %v252 = vld [vmem:[%s1 + $0x30] sm:$0xf]
      %v253 = vld [vmem:[%s1 + $0x34] sm:$0xf]
      %v254 = vld [vmem:[%s1 + $0x38] sm:$0xf]
      %v255 = vld [vmem:[%s1 + $0x3c] sm:$0xf]
      %v258 = vunpack.c.l.b16 %v238
      %v259 = vunpack.c.l.b16 %v239
      %v260 = vpack.c.b16 %v259, %v258
      %v278 = vunpack.c.l.b16 %v240
      %v279 = vunpack.c.l.b16 %v241
      %v280 = vunpack.c.l.b16 %v242
      %v281 = vunpack.c.l.b16 %v243
      %v282 = vunpack.c.l.b16 %v244
      %v283 = vunpack.c.l.b16 %v245
      %v284 = vunpack.c.l.b16 %v246
      %v285 = vunpack.c.l.b16 %v247
      %v286 = vunpack.c.l.b16 %v248
      %v287 = vunpack.c.l.b16 %v249
      %v288 = vunpack.c.l.b16 %v250
      %v289 = vunpack.c.l.b16 %v251
      %v290 = vunpack.c.l.b16 %v252
      %v291 = vunpack.c.l.b16 %v253
      %v292 = vunpack.c.l.b16 %v254
      %v293 = vunpack.c.l.b16 %v255
      %v294 = vpack.c.b16 %v279, %v278
      %v295 = vpack.c.b16 %v281, %v280
      %v296 = vpack.c.b16 %v283, %v282
      %v297 = vpack.c.b16 %v285, %v284
      %v298 = vpack.c.b16 %v287, %v286
      %v299 = vpack.c.b16 %v289, %v288
      %v300 = vpack.c.b16 %v291, %v290
      %v301 = vpack.c.b16 %v293, %v292
      %310 = vmatpush.bf16.msra.mxu0 %v301
      %311 = vmatpush.bf16.msra.mxu0 %v300
      %312 = vmatpush.bf16.msra.mxu0 %v299
      %313 = vmatpush.bf16.msra.mxu0 %v298
      %314 = vmatpush.bf16.msra.mxu0 %v297
      %315 = vmatpush.bf16.msra.mxu0 %v296
      %316 = vmatpush.bf16.msra.mxu0 %v295
      %317 = vmatpush.bf16.msra.mxu0 %v294
      %318 = vmatmul.bf16.gmra.mxu0 %v260
      %v319 = vpop.f32.mrf.mxu0
      %v320 = vadd.f32 0.0, %v319
      %v321 = vpop.f32.mrf.mxu0
      %v322 = vadd.f32 0.0, %v321
      %323 = vdwg.mxu0
      %v324 = vmul.f32 %v320, 0.088388346
      %v325 = vmul.f32 %v322, 0.088388346
      %v326 = vpack.c.bf16 %v325, %v324
      %v327 = vld [vmem:[%s2] sm:$0xf]
      %v328 = vld [vmem:[%s2 + $0x4] sm:$0xf]
      %v329 = vld [vmem:[%s2 + $0x8] sm:$0xf]
      %v330 = vld [vmem:[%s2 + $0xc] sm:$0xf]
      %v331 = vld [vmem:[%s2 + $0x10] sm:$0xf]
      %v332 = vld [vmem:[%s2 + $0x14] sm:$0xf]
      %v333 = vld [vmem:[%s2 + $0x18] sm:$0xf]
      %v334 = vld [vmem:[%s2 + $0x1c] sm:$0xf]
      %v335 = vld [vmem:[%s2 + $0x20] sm:$0xf]
      %v336 = vld [vmem:[%s2 + $0x24] sm:$0xf]
      %v337 = vld [vmem:[%s2 + $0x28] sm:$0xf]
      %v338 = vld [vmem:[%s2 + $0x2c] sm:$0xf]
      %v339 = vld [vmem:[%s2 + $0x30] sm:$0xf]
      %v340 = vld [vmem:[%s2 + $0x34] sm:$0xf]
      %v341 = vld [vmem:[%s2 + $0x38] sm:$0xf]
      %v342 = vld [vmem:[%s2 + $0x3c] sm:$0xf]
      %v359 = vunpack.c.l.b16 %v327
      %v360 = vunpack.c.l.b16 %v328
      %v361 = vunpack.c.l.b16 %v329
      %v362 = vunpack.c.l.b16 %v330
      %v363 = vunpack.c.l.b16 %v331
      %v364 = vunpack.c.l.b16 %v332
      %v365 = vunpack.c.l.b16 %v333
      %v366 = vunpack.c.l.b16 %v334
      %v367 = vunpack.c.l.b16 %v335
      %v368 = vunpack.c.l.b16 %v336
      %v369 = vunpack.c.l.b16 %v337
      %v370 = vunpack.c.l.b16 %v338
      %v371 = vunpack.c.l.b16 %v339
      %v372 = vunpack.c.l.b16 %v340
      %v373 = vunpack.c.l.b16 %v341
      %v374 = vunpack.c.l.b16 %v342
      %v375 = vpack.c.b16 %v360, %v359
      %v376 = vpack.c.b16 %v362, %v361
      %v377 = vpack.c.b16 %v364, %v363
      %v378 = vpack.c.b16 %v366, %v365
      %v379 = vpack.c.b16 %v368, %v367
      %v380 = vpack.c.b16 %v370, %v369
      %v381 = vpack.c.b16 %v372, %v371
      %v382 = vpack.c.b16 %v374, %v373
      %391 = vmatpush.bf16.msra.mxu0 %v382
      %392 = vmatpush.bf16.msra.mxu0 %v381
      %393 = vmatpush.bf16.msra.mxu0 %v380
      %394 = vmatpush.bf16.msra.mxu0 %v379
      %395 = vmatpush.bf16.msra.mxu0 %v378
      %396 = vmatpush.bf16.msra.mxu0 %v377
      %397 = vmatpush.bf16.msra.mxu0 %v376
      %398 = vmatpush.bf16.msra.mxu0 %v375
      %399 = vmatmul.bf16.gmra.mxu0 %v260
      %v400 = vpop.f32.mrf.mxu0
      %v401 = vadd.f32 0.0, %v400
      %v402 = vpop.f32.mrf.mxu0
      %v403 = vadd.f32 0.0, %v402
      %404 = vdwg.mxu0
      %v405 = vpack.c.bf16 %v403, %v401
      %v406 = vld [vmem:[%s3] sm:$0xf]
      %v407 = vld [vmem:[%s3 + $0x4] sm:$0xf]
      %v408 = vld [vmem:[%s3 + $0x8] sm:$0xf]
      %v409 = vld [vmem:[%s3 + $0xc] sm:$0xf]
      %v410 = vld [vmem:[%s3 + $0x10] sm:$0xf]
      %v411 = vld [vmem:[%s3 + $0x14] sm:$0xf]
      %v412 = vld [vmem:[%s3 + $0x18] sm:$0xf]
      %v413 = vld [vmem:[%s3 + $0x1c] sm:$0xf]
      %v414 = vld [vmem:[%s3 + $0x20] sm:$0xf]
      %v415 = vld [vmem:[%s3 + $0x24] sm:$0xf]
      %v416 = vld [vmem:[%s3 + $0x28] sm:$0xf]
      %v417 = vld [vmem:[%s3 + $0x2c] sm:$0xf]
      %v418 = vld [vmem:[%s3 + $0x30] sm:$0xf]
      %v419 = vld [vmem:[%s3 + $0x34] sm:$0xf]
      %v420 = vld [vmem:[%s3 + $0x38] sm:$0xf]
      %v421 = vld [vmem:[%s3 + $0x3c] sm:$0xf]
      %v438 = vunpack.c.l.b16 %v406
      %v439 = vunpack.c.l.b16 %v407
      %v440 = vunpack.c.l.b16 %v408
      %v441 = vunpack.c.l.b16 %v409
      %v442 = vunpack.c.l.b16 %v410
      %v443 = vunpack.c.l.b16 %v411
      %v444 = vunpack.c.l.b16 %v412
      %v445 = vunpack.c.l.b16 %v413
      %v446 = vunpack.c.l.b16 %v414
      %v447 = vunpack.c.l.b16 %v415
      %v448 = vunpack.c.l.b16 %v416
      %v449 = vunpack.c.l.b16 %v417
      %v450 = vunpack.c.l.b16 %v418
      %v451 = vunpack.c.l.b16 %v419
      %v452 = vunpack.c.l.b16 %v420
      %v453 = vunpack.c.l.b16 %v421
      %v454 = vpack.c.b16 %v439, %v438
      %v455 = vpack.c.b16 %v441, %v440
      %v456 = vpack.c.b16 %v443, %v442
      %v457 = vpack.c.b16 %v445, %v444
      %v458 = vpack.c.b16 %v447, %v446
      %v459 = vpack.c.b16 %v449, %v448
      %v460 = vpack.c.b16 %v451, %v450
      %v461 = vpack.c.b16 %v453, %v452
      %470 = vmatpush.bf16.msra.mxu0 %v461
      %471 = vmatpush.bf16.msra.mxu0 %v460
      %472 = vmatpush.bf16.msra.mxu0 %v459
      %473 = vmatpush.bf16.msra.mxu0 %v458
      %474 = vmatpush.bf16.msra.mxu0 %v457
      %475 = vmatpush.bf16.msra.mxu0 %v456
      %476 = vmatpush.bf16.msra.mxu0 %v455
      %477 = vmatpush.bf16.msra.mxu0 %v454
      %478 = vmatmul.bf16.gmra.mxu0 %v260
      %v479 = vpop.f32.mrf.mxu0
      %v480 = vadd.f32 0.0, %v479
      %v481 = vpop.f32.mrf.mxu0
      %v482 = vadd.f32 0.0, %v481
      %483 = vdwg.mxu0
      %v484 = vpack.c.bf16 %v482, %v480
      %485 = vmatpush.bf16.xpose.msra.mxu0 0
      %486 = vmatpush.bf16.xpose.msra.mxu0 0
      %487 = vmatpush.bf16.xpose.msra.mxu0 0
      %488 = vmatpush.bf16.xpose.msra.mxu0 0
      %489 = vmatpush.bf16.xpose.msra.mxu0 0
      %490 = vmatpush.bf16.xpose.msra.mxu0 0
      %491 = vmatpush.bf16.xpose.msra.mxu0 0
      %492 = vmatpush.bf16.xpose.msra.mxu0 %v405
      %493 = vmatmul.bf16.gmra.mxu0 %v326
      %v494 = vpop.f32.mrf.mxu0
      %v495 = vadd.f32 0.0, %v494
      %v496 = vpop.f32.mrf.mxu0
      %v497 = vadd.f32 0.0, %v496
      %498 = vdwg.mxu0
      %vm499 = vcmask 130048
      %v500 = vsel %vm499, %v495, -inf
      %501 = vmax.xlane.f32.xlu0 %v500
      %v502 = vpop.xlane.xlu0 %501
      %v503 = vsel %vm499, %v497, -inf
      %504 = vmax.xlane.f32.xlu0 %v503
      %v505 = vpop.xlane.xlu0 %504
      %v506 = vsub.f32 %v495, %v502
      %v507 = vsub.f32 %v497, %v505
      %v508 = vmul.f32 %v506, 1.442695
      %v509 = vpow.pop %v508
      %v510 = vmul.f32 %v507, 1.442695
      %v511 = vpow.pop %v510
      %v512 = vsel %vm499, %v509, 0.0
      %513 = vadd.xlane.f32.xlu0 %v512
      %v514 = vpop.xlane.xlu0 %513
      %v515 = vsel %vm499, %v511, 0.0
      %516 = vadd.xlane.f32.xlu0 %v515
      %v517 = vpop.xlane.xlu0 %516
      %v518 = vrcp.pop %v514
      %v519 = vmul.f32 %v514, %v518
      %v520 = vsub.f32 1.0, %v519
      %v521 = vmul.f32 %v518, %v520
      %v522 = vadd.f32 %v518, %v521
      %vm523 = vweird.f32 %v514
      %vm524 = vweird.f32 %v518
      %vm525 = vmor %vm523, %vm524
      %v526 = vsel %vm525, %v518, %v522
      %v527 = vand.u32 2147483647, %v514
      %vm528 = vcmp.eq.f32.partialorder %v527, 8.507059e+37
      %v529 = vand.u32 %v514, 2147483648
      %v530 = vor.u32 1.1754944e-38, %v529
      %v531 = vsel %vm528, %v530, %v526
      %v532 = vmul.f32 1.0, %v531
      %v533 = vrcp.pop %v517
      %v534 = vmul.f32 %v517, %v533
      %v535 = vsub.f32 1.0, %v534
      %v536 = vmul.f32 %v533, %v535
      %v537 = vadd.f32 %v533, %v536
      %vm538 = vweird.f32 %v517
      %vm539 = vweird.f32 %v533
      %vm540 = vmor %vm538, %vm539
      %v541 = vsel %vm540, %v533, %v537
      %v542 = vand.u32 2147483647, %v517
      %vm543 = vcmp.eq.f32.partialorder %v542, 8.507059e+37
      %v544 = vand.u32 %v517, 2147483648
      %v545 = vor.u32 1.1754944e-38, %v544
      %v546 = vsel %vm543, %v545, %v541
      %v547 = vmul.f32 1.0, %v546
      %v548 = vmul.f32 %v509, %v532
      %v549 = vmul.f32 %v511, %v547
      %v550 = vpack.c.bf16 %v549, %v548
      %v552 = vsel %vm499, %v550, 0
      %554 = vmatpush.bf16.msra.mxu0 0
      %555 = vmatpush.bf16.msra.mxu0 0
      %556 = vmatpush.bf16.msra.mxu0 0
      %557 = vmatpush.bf16.msra.mxu0 0
      %558 = vmatpush.bf16.msra.mxu0 0
      %559 = vmatpush.bf16.msra.mxu0 0
      %560 = vmatpush.bf16.msra.mxu0 0
      %561 = vmatpush.bf16.msra.mxu0 %v484
      %562 = vmatmul.bf16.gmra.mxu0 %v552
      %v563 = vpop.f32.mrf.mxu0
      %v564 = vadd.f32 0.0, %v563
      %v565 = vpop.f32.mrf.mxu0
      %v566 = vadd.f32 0.0, %v565
      %567 = vdwg.mxu0
      %v568 = vunpack.c.l.bf16 %v238
      %v569 = vunpack.c.l.bf16 %v239
      %v570 = vadd.f32 %v568, %v564
      %v571 = vadd.f32 %v569, %v566
      %v572 = vpack.c.bf16 %v570, %v570
      %v573 = vpack.c.bf16 %v571, %v571
      %574 = vst [vmem:[%s235] sm:$0xf] %v572
      %575 = vst [vmem:[%s235 + $0x4] sm:$0xf] %v573
      %s576 = smul.u32 2, %s20
      %p577 = scmp.lt.s32.totalorder %s19, 3
      %s578 = scalar_select %p577, %s19, 3
      %p579 = scmp.lt.s32.totalorder %s576, 7
      %s580 = scalar_select %p579, %s576, 7
      %s581 = smul.addr %s578, 8
      %s582 = sadd.s32 %s580, %s581
      %s583 = smul.addr %s582, 4
      %s584 = scalar_lea.vmem %s4, %s583
      // Predicated region
      $region37: #{gmflow_forward.5} parent=35 // pred_check
        %p585 = pneg %p138
      $region38: #{gmflow_forward.5} parent=35 // pred_check_branch
        %587 = sbr.rel (%p585) target = $region40
      $region39: #{gmflow_forward.5} parent=35 // pred_region
        %s588 = smul.u32 2, %s20
      $region40: #{gmflow_forward.5} parent=35 // pred_fallthru
        _
    $region36: #{gmflow_forward.5} parent=5 // pred_fallthru
      _
    %p589 = scmp.le.s32.totalorder 2, %s10
    // Predicated region
    $region41: #{gmflow_forward.5} parent=5 // pred_check
      %p590 = pneg %p589
    $region42: #{gmflow_forward.5} parent=5 // pred_check_branch
      %592 = sbr.rel (%p590) target = $region44
    $region43: #{gmflow_forward.5} parent=5 // pred_region
      %s593 = ssub.s32 %s10, 2
      // Predicated region
      $region45: #{gmflow_forward.5} parent=43 // pred_check
        %p594 = pneg %p144
      $region46: #{gmflow_forward.5} parent=43 // pred_check_branch
        %596 = sbr.rel (%p594) target = $region48
      $region47: #{gmflow_forward.5} parent=43 // pred_region
        %s597 = smul.u32 2, %s22
        %p598 = scmp.lt.s32.totalorder %s21, 3
        %s599 = scalar_select %p598, %s21, 3
        %p600 = scmp.lt.s32.totalorder %s597, 7
        %s601 = scalar_select %p600, %s597, 7
        %s602 = smul.addr %s599, 8
        %s603 = sadd.s32 %s601, %s602
        %s604 = smul.addr %s603, 4
        %s605 = scalar_lea.vmem %s4, %s604
      $region48: #{gmflow_forward.5} parent=43 // pred_fallthru
        _
    $region44: #{gmflow_forward.5} parent=5 // pred_fallthru
      _
  $region6: #{gmflow_forward.5} parent=0 // loop_footer
    %s14 = sadd.s32 1, %s10
  $region7: #{gmflow_forward.5} parent=0 // loop_footer_branch
    %9 = sbr.rel target = $region3
  $region8: #{gmflow_forward.5} parent=0 // loop_exit
    _

// kernel: gmflow_forward.6
$region0: #{gmflow_forward.6}
  #allocation0 [shape = 'u32[]', space=smem, size = 0x4, offset = 0x4, fixed_abs, tag = 'smem constant byte address 0x4 - core index']
  #allocation1 [shape = 'u32[72,128]{1,0:T(1,128)}', space=vmem, size = 0x9000, scoped, tag = 'internal scratch']
  %s0 = inlined_call_operand.vmem [shape: bf16[4,64,128], index: 0, kind: input, shape index: {}, may-alias: {0,1}]
  %s1 = inlined_call_operand.vmem [shape: bf16[4,64,128], index: 1, kind: input, shape index: {}, may-alias: {0,1}]
  %s2 = inlined_call_operand.vmem [shape: bf16[128,128], index: 2, kind: input, shape index: {}]
  %s3 = inlined_call_operand.vmem [shape: bf16[128,128], index: 3, kind: input, shape index: {}]
  %s4 = inlined_call_operand.vmem [shape: bf16[128,128], index: 4, kind: input, shape index: {}]
  %s5 = inlined_call_operand.vmem [shape: bf16[4,64,128], index: 5, kind: output, shape index: {}]
  %s6 = sld [smem:[#allocation0]]
  $region53: #{gmflow_forward.6} parent=0
    _
  %s8 = ssub.s32 1, %s6
  %s9 = scalar_select 0, %s8, %s6
  loop: start=0, step=1, limit=18
  $region2: #{gmflow_forward.6} parent=0 // loop_pre_header
    _
  $region3: #{gmflow_forward.6} parent=0 // loop_header
    %s11 = sphi 0, %s15
    %p12 = scmp.ge.s32.totalorder %s11, 18
    %s18 = sphi 0, %s30
    %s19 = sphi 0, %s26
    %s20 = sphi 0, %s18
    %s21 = sphi 0, %s19
    %s22 = sphi 0, %s20
    %s23 = sphi 0, %s21
    %s35 = sphi 0, %s37
    %s38 = sphi 0, %s35
    %s39 = sphi 0, %s38
    %s55 = sphi 0, %s39
    %s89 = sphi 0, %s91
    %s92 = sphi 0, %s89
    %s93 = sphi 0, %s92
    %s109 = sphi 0, %s93
    %s113 = sphi 0, %s113
    %s115 = sphi 0, %s113
    %s116 = sphi 0, %s115
    %s130 = sphi 0, %s116
    %s134 = sphi 0, %s134
    %s136 = sphi 0, %s134
    %s137 = sphi 0, %s136
    %s151 = sphi 0, %s137
    %s155 = sphi 0, %s155
    %s157 = sphi 0, %s155
    %s158 = sphi 0, %s157
    %s172 = sphi 0, %s158
    %s180 = sphi 0, %s182
    %s183 = sphi 0, %s180
    %s184 = sphi 0, %s183
    %s200 = sphi 0, %s184
  $region4: #{gmflow_forward.6} parent=0 // loop_header_branch
    %14 = sbr.rel (%p12) target = $region8
  $region5: #{gmflow_forward.6} parent=0 // loop_body
    %s16 = ssub.s32 %s11, 1
    %s17 = ssub.s32 %s11, 2
    %s24 = sadd.s32 1, %s19
    %p25 = scmp.ge.s32.totalorder %s24, 4
    %s26 = scalar_select %p25, 0, %s24
    %s27 = sadd.s32 1, %s18
    %s28 = scalar_select %p25, %s27, %s18
    %p29 = scmp.ge.s32.totalorder %s28, 4
    %s30 = scalar_select %p29, 0, %s28
    %s31 = ssub.s32 %s18, %s30
    %s32 = ssub.s32 %s19, %s26
    %s33 = sor.u32 %s31, %s32
    %p34 = scmp.eq.s32.totalorder %s33, 0
    %s36 = sadd.s32 %s35, 1
    %s37 = scalar_select %p34, %s35, %s36
    %p40 = pneg %p34
    %p41 = scmp.eq.s32.totalorder %s11, 15
    %p42 = por %p40, %p41
    %p43 = scmp.ne.s32.totalorder %s35, %s38
    %p44 = scmp.eq.s32.totalorder %s11, 0
    %p45 = por %p43, %p44
    %p46 = scmp.ne.s32.totalorder %s35, %s38
    %p47 = scmp.eq.s32.totalorder %s16, 15
    %p48 = por %p46, %p47
    %p49 = scmp.ne.s32.totalorder %s38, %s39
    %p50 = scmp.eq.s32.totalorder %s16, 0
    %p51 = por %p49, %p50
    %p52 = scmp.ne.s32.totalorder %s38, %s39
    %p53 = scmp.eq.s32.totalorder %s17, 15
    %p54 = por %p52, %p53
    %p56 = scmp.ne.s32.totalorder %s39, %s55
    %p57 = scmp.eq.s32.totalorder %s17, 0
    %p58 = por %p56, %p57
    %s59 = sadd.s32 %s18, 2
    %p60 = scmp.lt.s32.totalorder %s59, 0
    %s61 = ssub.s32 0, %s59
    %s62 = scalar_select %p60, %s61, %s59
    %s63 = sand.u32 %s62, 3
    %s64 = ssub.s32 0, %s63
    %s65 = scalar_select %p60, %s64, %s63
    %p66 = scmp.ne.s32.totalorder %s65, 0
    %p67 = scmp.lt.s32.totalorder %s65, 0
    %p68 = pnand %p67, %p66
    %p69 = pneg %p68
    %s70 = sadd.s32 %s65, 4
    %s71 = scalar_select %p69, %s70, %s65
    %s72 = sadd.s32 %s30, 2
    %p73 = scmp.lt.s32.totalorder %s72, 0
    %s74 = ssub.s32 0, %s72
    %s75 = scalar_select %p73, %s74, %s72
    %s76 = sand.u32 %s75, 3
    %s77 = ssub.s32 0, %s76
    %s78 = scalar_select %p73, %s77, %s76
    %p79 = scmp.ne.s32.totalorder %s78, 0
    %p80 = scmp.lt.s32.totalorder %s78, 0
    %p81 = pnand %p80, %p79
    %p82 = pneg %p81
    %s83 = sadd.s32 %s78, 4
    %s84 = scalar_select %p82, %s83, %s78
    %s85 = ssub.s32 %s71, %s84
    %s86 = ssub.s32 %s19, %s26
    %s87 = sor.u32 %s85, %s86
    %p88 = scmp.eq.s32.totalorder %s87, 0
    %s90 = sadd.s32 %s89, 1
    %s91 = scalar_select %p88, %s89, %s90
    %p94 = pneg %p88
    %p95 = scmp.eq.s32.totalorder %s11, 15
    %p96 = por %p94, %p95
    %p97 = scmp.ne.s32.totalorder %s89, %s92
    %p98 = scmp.eq.s32.totalorder %s11, 0
    %p99 = por %p97, %p98
    %p100 = scmp.ne.s32.totalorder %s89, %s92
    %p101 = scmp.eq.s32.totalorder %s16, 15
    %p102 = por %p100, %p101
    %p103 = scmp.ne.s32.totalorder %s92, %s93
    %p104 = scmp.eq.s32.totalorder %s16, 0
    %p105 = por %p103, %p104
    %p106 = scmp.ne.s32.totalorder %s92, %s93
    %p107 = scmp.eq.s32.totalorder %s17, 15
    %p108 = por %p106, %p107
    %p110 = scmp.ne.s32.totalorder %s93, %s109
    %p111 = scmp.eq.s32.totalorder %s17, 0
    %p112 = por %p110, %p111
    %s114 = sadd.s32 %s113, 1
    %p117 = scmp.eq.s32.totalorder %s11, 15
    %p118 = scmp.ne.s32.totalorder %s113, %s115
    %p119 = scmp.eq.s32.totalorder %s11, 0
    %p120 = por %p118, %p119
    %p121 = scmp.ne.s32.totalorder %s113, %s115
    %p122 = scmp.eq.s32.totalorder %s16, 15
    %p123 = por %p121, %p122
    %p124 = scmp.ne.s32.totalorder %s115, %s116
    %p125 = scmp.eq.s32.totalorder %s16, 0
    %p126 = por %p124, %p125
    %p127 = scmp.ne.s32.totalorder %s115, %s116
    %p128 = scmp.eq.s32.totalorder %s17, 15
    %p129 = por %p127, %p128
    %p131 = scmp.ne.s32.totalorder %s116, %s130
    %p132 = scmp.eq.s32.totalorder %s17, 0
    %p133 = por %p131, %p132
    %s135 = sadd.s32 %s134, 1
    %p138 = scmp.eq.s32.totalorder %s11, 15
    %p139 = scmp.ne.s32.totalorder %s134, %s136
    %p140 = scmp.eq.s32.totalorder %s11, 0
    %p141 = por %p139, %p140
    %p142 = scmp.ne.s32.totalorder %s134, %s136
    %p143 = scmp.eq.s32.totalorder %s16, 15
    %p144 = por %p142, %p143
    %p145 = scmp.ne.s32.totalorder %s136, %s137
    %p146 = scmp.eq.s32.totalorder %s16, 0
    %p147 = por %p145, %p146
    %p148 = scmp.ne.s32.totalorder %s136, %s137
    %p149 = scmp.eq.s32.totalorder %s17, 15
    %p150 = por %p148, %p149
    %p152 = scmp.ne.s32.totalorder %s137, %s151
    %p153 = scmp.eq.s32.totalorder %s17, 0
    %p154 = por %p152, %p153
    %s156 = sadd.s32 %s155, 1
    %p159 = scmp.eq.s32.totalorder %s11, 15
    %p160 = scmp.ne.s32.totalorder %s155, %s157
    %p161 = scmp.eq.s32.totalorder %s11, 0
    %p162 = por %p160, %p161
    %p163 = scmp.ne.s32.totalorder %s155, %s157
    %p164 = scmp.eq.s32.totalorder %s16, 15
    %p165 = por %p163, %p164
    %p166 = scmp.ne.s32.totalorder %s157, %s158
    %p167 = scmp.eq.s32.totalorder %s16, 0
    %p168 = por %p166, %p167
    %p169 = scmp.ne.s32.totalorder %s157, %s158
    %p170 = scmp.eq.s32.totalorder %s17, 15
    %p171 = por %p169, %p170
    %p173 = scmp.ne.s32.totalorder %s158, %s172
    %p174 = scmp.eq.s32.totalorder %s17, 0
    %p175 = por %p173, %p174
    %s176 = ssub.s32 %s18, %s30
    %s177 = ssub.s32 %s19, %s26
    %s178 = sor.u32 %s176, %s177
    %p179 = scmp.eq.s32.totalorder %s178, 0
    %s181 = sadd.s32 %s180, 1
    %s182 = scalar_select %p179, %s180, %s181
    %p185 = pneg %p179
    %p186 = scmp.eq.s32.totalorder %s11, 15
    %p187 = por %p185, %p186
    %p188 = scmp.ne.s32.totalorder %s180, %s183
    %p189 = scmp.eq.s32.totalorder %s11, 0
    %p190 = por %p188, %p189
    %p191 = scmp.ne.s32.totalorder %s180, %s183
    %p192 = scmp.eq.s32.totalorder %s16, 15
    %p193 = por %p191, %p192
    %p194 = scmp.ne.s32.totalorder %s183, %s184
    %p195 = scmp.eq.s32.totalorder %s16, 0
    %p196 = por %p194, %p195
    %p197 = scmp.ne.s32.totalorder %s183, %s184
    %p198 = scmp.eq.s32.totalorder %s17, 15
    %p199 = por %p197, %p198
    %p201 = scmp.ne.s32.totalorder %s184, %s200
    %p202 = scmp.eq.s32.totalorder %s17, 0
    %p203 = por %p201, %p202
    %p204 = scmp.le.s32.totalorder 1, %s11
    %p205 = scmp.lt.s32.totalorder %s11, 17
    %p206 = pnand %p204, %p205
    %p207 = pneg %p206
    // Predicated region
    $region9: #{gmflow_forward.6} parent=5 // pred_check
      _
    $region10: #{gmflow_forward.6} parent=5 // pred_check_branch
      %209 = sbr.rel (%p206) target = $region12
    $region11: #{gmflow_forward.6} parent=5 // pred_region
      %s210 = ssub.s32 %s11, 1
      // Predicated region
      $region13: #{gmflow_forward.6} parent=11 // pred_check
        %p211 = pneg %p126
      $region14: #{gmflow_forward.6} parent=11 // pred_check_branch
        %213 = sbr.rel (%p211) target = $region16
      $region15: #{gmflow_forward.6} parent=11 // pred_region
        _
      $region16: #{gmflow_forward.6} parent=11 // pred_fallthru
        _
      // Predicated region
      $region17: #{gmflow_forward.6} parent=11 // pred_check
        %p214 = pneg %p147
      $region18: #{gmflow_forward.6} parent=11 // pred_check_branch
        %216 = sbr.rel (%p214) target = $region20
      $region19: #{gmflow_forward.6} parent=11 // pred_region
        _
      $region20: #{gmflow_forward.6} parent=11 // pred_fallthru
        _
      // Predicated region
      $region21: #{gmflow_forward.6} parent=11 // pred_check
        %p217 = pneg %p168
      $region22: #{gmflow_forward.6} parent=11 // pred_check_branch
        %219 = sbr.rel (%p217) target = $region24
      $region23: #{gmflow_forward.6} parent=11 // pred_region
        _
      $region24: #{gmflow_forward.6} parent=11 // pred_fallthru
        _
    $region12: #{gmflow_forward.6} parent=5 // pred_fallthru
      _
    %p220 = scmp.lt.s32.totalorder %s11, 16
    // Predicated region
    $region25: #{gmflow_forward.6} parent=5 // pred_check
      %p221 = pneg %p220
    $region26: #{gmflow_forward.6} parent=5 // pred_check_branch
      %223 = sbr.rel (%p221) target = $region28
    $region27: #{gmflow_forward.6} parent=5 // pred_region
      // Predicated region
      $region29: #{gmflow_forward.6} parent=27 // pred_check
        %p224 = pneg %p45
      $region30: #{gmflow_forward.6} parent=27 // pred_check_branch
        %226 = sbr.rel (%p224) target = $region32
      $region31: #{gmflow_forward.6} parent=27 // pred_region
        %s227 = smul.u32 2, %s19
        %p228 = scmp.lt.s32.totalorder %s18, 3
        %s229 = scalar_select %p228, %s18, 3
        %p230 = scmp.lt.s32.totalorder %s227, 7
        %s231 = scalar_select %p230, %s227, 7
        %s232 = smul.addr %s229, 8
        %s233 = sadd.s32 %s231, %s232
        %s234 = smul.addr %s233, 4
        %s235 = scalar_lea.vmem %s0, %s234
        %s236 = smul.u32 2, %s19
      $region32: #{gmflow_forward.6} parent=27 // pred_fallthru
        _
      // Predicated region
      $region33: #{gmflow_forward.6} parent=27 // pred_check
        %p237 = pneg %p99
      $region34: #{gmflow_forward.6} parent=27 // pred_check_branch
        %239 = sbr.rel (%p237) target = $region36
      $region35: #{gmflow_forward.6} parent=27 // pred_region
        %s240 = sadd.s32 %s18, 2
        %p241 = scmp.lt.s32.totalorder %s240, 0
        %s242 = ssub.s32 0, %s240
        %s243 = scalar_select %p241, %s242, %s240
        %s244 = sand.u32 %s243, 3
        %s245 = ssub.s32 0, %s244
        %s246 = scalar_select %p241, %s245, %s244
        %p247 = scmp.ne.s32.totalorder %s246, 0
        %p248 = scmp.lt.s32.totalorder %s246, 0
        %p249 = pnand %p248, %p247
        %p250 = pneg %p249
        %s251 = sadd.s32 %s246, 4
        %s252 = scalar_select %p250, %s251, %s246
        %s253 = smul.u32 2, %s19
        %p254 = scmp.lt.s32.totalorder %s252, 3
        %s255 = scalar_select %p254, %s252, 3
        %p256 = scmp.lt.s32.totalorder %s253, 7
        %s257 = scalar_select %p256, %s253, 7
        %s258 = smul.addr %s255, 8
        %s259 = sadd.s32 %s257, %s258
        %s260 = smul.addr %s259, 4
        %s261 = scalar_lea.vmem %s1, %s260
        %s262 = sadd.s32 %s18, 2
        %p263 = scmp.lt.s32.totalorder %s262, 0
        %s264 = ssub.s32 0, %s262
        %s265 = scalar_select %p263, %s264, %s262
        %s266 = sand.u32 %s265, 3
        %s267 = ssub.s32 0, %s266
        %s268 = scalar_select %p263, %s267, %s266
        %p269 = scmp.ne.s32.totalorder %s268, 0
        %p270 = scmp.lt.s32.totalorder %s268, 0
        %p271 = pnand %p270, %p269
        %p272 = pneg %p271
        %s273 = sadd.s32 %s268, 4
        %s274 = scalar_select %p272, %s273, %s268
        %s275 = smul.u32 2, %s19
      $region36: #{gmflow_forward.6} parent=27 // pred_fallthru
        _
    $region28: #{gmflow_forward.6} parent=5 // pred_fallthru
      _
    %p276 = scmp.le.s32.totalorder 1, %s11
    %p277 = scmp.lt.s32.totalorder %s11, 17
    %p278 = pnand %p276, %p277
    %p279 = pneg %p278
    // Predicated region
    $region37: #{gmflow_forward.6} parent=5 // pred_check
      _
    $region38: #{gmflow_forward.6} parent=5 // pred_check_branch
      %281 = sbr.rel (%p278) target = $region40
    $region39: #{gmflow_forward.6} parent=5 // pred_region
      %s282 = ssub.s32 %s11, 1
      %s283 = smul.u32 2, %s21
      %p284 = scmp.lt.s32.totalorder %s20, 3
      %s285 = scalar_select %p284, %s20, 3
      %p286 = scmp.lt.s32.totalorder %s283, 7
      %s287 = scalar_select %p286, %s283, 7
      %s288 = smul.addr %s285, 8
      %s289 = sadd.s32 %s287, %s288
      %s290 = smul.addr %s289, 4
      %s291 = scalar_lea.vmem %s0, %s290
      %p292 = pneg %p51
      %p293 = pneg %p48
      %s294 = sadd.s32 %s20, 2
      %p295 = scmp.lt.s32.totalorder %s294, 0
      %s296 = ssub.s32 0, %s294
      %s297 = scalar_select %p295, %s296, %s294
      %s298 = sand.u32 %s297, 3
      %s299 = ssub.s32 0, %s298
      %s300 = scalar_select %p295, %s299, %s298
      %p301 = scmp.ne.s32.totalorder %s300, 0
      %p302 = scmp.lt.s32.totalorder %s300, 0
      %p303 = pnand %p302, %p301
      %p304 = pneg %p303
      %s305 = sadd.s32 %s300, 4
      %s306 = scalar_select %p304, %s305, %s300
      %s307 = smul.u32 2, %s21
      %p308 = scmp.lt.s32.totalorder %s306, 3
      %s309 = scalar_select %p308, %s306, 3
      %p310 = scmp.lt.s32.totalorder %s307, 7
      %s311 = scalar_select %p310, %s307, 7
      %s312 = smul.addr %s309, 8
      %s313 = sadd.s32 %s311, %s312
      %s314 = smul.addr %s313, 4
      %s315 = scalar_lea.vmem %s1, %s314
      %p316 = pneg %p105
      %p317 = pneg %p102
      %p318 = pneg %p126
      %p319 = pneg %p123
      %p320 = pneg %p147
      %p321 = pneg %p144
      %p322 = pneg %p168
      %p323 = pneg %p165
      %p324 = pneg %p196
      %p325 = pneg %p193
      %s326 = smul.u32 2, %s21
      %p327 = scmp.lt.s32.totalorder %s20, 3
      %s328 = scalar_select %p327, %s20, 3
      %p329 = scmp.lt.s32.totalorder %s326, 7
      %s330 = scalar_select %p329, %s326, 7
      %s331 = smul.addr %s328, 8
      %s332 = sadd.s32 %s330, %s331
      %s333 = smul.addr %s332, 4
      %s334 = scalar_lea.vmem %s5, %s333
      %s335 = smul.u32 2, %s21
      %p336 = scmp.lt.s32.totalorder %s20, 3
      %s337 = scalar_select %p336, %s20, 3
      %p338 = scmp.lt.s32.totalorder %s335, 7
      %s339 = scalar_select %p338, %s335, 7
      %s340 = smul.addr %s337, 8
      %s341 = sadd.s32 %s339, %s340
      %s342 = smul.addr %s341, 4
      %s343 = scalar_lea.vmem %s0, %s342
      %s344 = smul.u32 2, %s21
      %s345 = sadd.s32 %s20, 2
      %p346 = scmp.lt.s32.totalorder %s345, 0
      %s347 = ssub.s32 0, %s345
      %s348 = scalar_select %p346, %s347, %s345
      %s349 = sand.u32 %s348, 3
      %s350 = ssub.s32 0, %s349
      %s351 = scalar_select %p346, %s350, %s349
      %p352 = scmp.ne.s32.totalorder %s351, 0
      %p353 = scmp.lt.s32.totalorder %s351, 0
      %p354 = pnand %p353, %p352
      %p355 = pneg %p354
      %s356 = sadd.s32 %s351, 4
      %s357 = scalar_select %p355, %s356, %s351
      %s358 = smul.u32 2, %s21
      %p359 = scmp.lt.s32.totalorder %s357, 3
      %s360 = scalar_select %p359, %s357, 3
      %p361 = scmp.lt.s32.totalorder %s358, 7
      %s362 = scalar_select %p361, %s358, 7
      %s363 = smul.addr %s360, 8
      %s364 = sadd.s32 %s362, %s363
      %s365 = smul.addr %s364, 4
      %s366 = scalar_lea.vmem %s1, %s365
      %s367 = sadd.s32 %s20, 2
      %p368 = scmp.lt.s32.totalorder %s367, 0
      %s369 = ssub.s32 0, %s367
      %s370 = scalar_select %p368, %s369, %s367
      %s371 = sand.u32 %s370, 3
      %s372 = ssub.s32 0, %s371
      %s373 = scalar_select %p368, %s372, %s371
      %p374 = scmp.ne.s32.totalorder %s373, 0
      %p375 = scmp.lt.s32.totalorder %s373, 0
      %p376 = pnand %p375, %p374
      %p377 = pneg %p376
      %s378 = sadd.s32 %s373, 4
      %s379 = scalar_select %p377, %s378, %s373
      %s380 = smul.u32 2, %s21
      %s381 = smul.u32 2, %s21
      %p382 = scmp.lt.s32.totalorder %s20, 3
      %s383 = scalar_select %p382, %s20, 3
      %p384 = scmp.lt.s32.totalorder %s381, 7
      %s385 = scalar_select %p384, %s381, 7
      %s386 = smul.addr %s383, 8
      %s387 = sadd.s32 %s385, %s386
      %s388 = smul.addr %s387, 4
      %s389 = scalar_lea.vmem %s5, %s388
      %s390 = smul.u32 2, %s21
      %v392 = vld [vmem:[%s343] sm:$0xf]
      %v393 = vld [vmem:[%s343 + $0x4] sm:$0xf]
      %v394 = vld [vmem:[%s366] sm:$0xf]
      %v395 = vld [vmem:[%s366 + $0x4] sm:$0xf]
      %v396 = vld [vmem:[%s2] sm:$0xf]
      %v397 = vld [vmem:[%s2 + $0x4] sm:$0xf]
      %v398 = vld [vmem:[%s2 + $0x8] sm:$0xf]
      %v399 = vld [vmem:[%s2 + $0xc] sm:$0xf]
      %v400 = vld [vmem:[%s2 + $0x10] sm:$0xf]
      %v401 = vld [vmem:[%s2 + $0x14] sm:$0xf]
      %v402 = vld [vmem:[%s2 + $0x18] sm:$0xf]
      %v403 = vld [vmem:[%s2 + $0x1c] sm:$0xf]
      %v404 = vld [vmem:[%s2 + $0x20] sm:$0xf]
      %v405 = vld [vmem:[%s2 + $0x24] sm:$0xf]
      %v406 = vld [vmem:[%s2 + $0x28] sm:$0xf]
      %v407 = vld [vmem:[%s2 + $0x2c] sm:$0xf]
      %v408 = vld [vmem:[%s2 + $0x30] sm:$0xf]
      %v409 = vld [vmem:[%s2 + $0x34] sm:$0xf]
      %v410 = vld [vmem:[%s2 + $0x38] sm:$0xf]
      %v411 = vld [vmem:[%s2 + $0x3c] sm:$0xf]
      %v414 = vunpack.c.l.b16 %v392
      %v415 = vunpack.c.l.b16 %v393
      %v416 = vpack.c.b16 %v415, %v414
      %v434 = vunpack.c.l.b16 %v396
      %v435 = vunpack.c.l.b16 %v397
      %v436 = vunpack.c.l.b16 %v398
      %v437 = vunpack.c.l.b16 %v399
      %v438 = vunpack.c.l.b16 %v400
      %v439 = vunpack.c.l.b16 %v401
      %v440 = vunpack.c.l.b16 %v402
      %v441 = vunpack.c.l.b16 %v403
      %v442 = vunpack.c.l.b16 %v404
      %v443 = vunpack.c.l.b16 %v405
      %v444 = vunpack.c.l.b16 %v406
      %v445 = vunpack.c.l.b16 %v407
      %v446 = vunpack.c.l.b16 %v408
      %v447 = vunpack.c.l.b16 %v409
      %v448 = vunpack.c.l.b16 %v410
      %v449 = vunpack.c.l.b16 %v411
      %v450 = vpack.c.b16 %v435, %v434
      %v451 = vpack.c.b16 %v437, %v436
      %v452 = vpack.c.b16 %v439, %v438
      %v453 = vpack.c.b16 %v441, %v440
      %v454 = vpack.c.b16 %v443, %v442
      %v455 = vpack.c.b16 %v445, %v444
      %v456 = vpack.c.b16 %v447, %v446
      %v457 = vpack.c.b16 %v449, %v448
      %466 = vmatpush.bf16.msra.mxu0 %v457
      %467 = vmatpush.bf16.msra.mxu0 %v456
      %468 = vmatpush.bf16.msra.mxu0 %v455
      %469 = vmatpush.bf16.msra.mxu0 %v454
      %470 = vmatpush.bf16.msra.mxu0 %v453
      %471 = vmatpush.bf16.msra.mxu0 %v452
      %472 = vmatpush.bf16.msra.mxu0 %v451
      %473 = vmatpush.bf16.msra.mxu0 %v450
      %474 = vmatmul.bf16.gmra.mxu0 %v416
      %v475 = vpop.f32.mrf.mxu0
      %v476 = vadd.f32 0.0, %v475
      %v477 = vpop.f32.mrf.mxu0
      %v478 = vadd.f32 0.0, %v477
      %479 = vdwg.mxu0
      %v480 = vmul.f32 %v476, 0.088388346
      %v481 = vmul.f32 %v478, 0.088388346
      %v482 = vpack.c.bf16 %v481, %v480
      %v483 = vld [vmem:[%s3] sm:$0xf]
      %v484 = vld [vmem:[%s3 + $0x4] sm:$0xf]
      %v485 = vld [vmem:[%s3 + $0x8] sm:$0xf]
      %v486 = vld [vmem:[%s3 + $0xc] sm:$0xf]
      %v487 = vld [vmem:[%s3 + $0x10] sm:$0xf]
      %v488 = vld [vmem:[%s3 + $0x14] sm:$0xf]
      %v489 = vld [vmem:[%s3 + $0x18] sm:$0xf]
      %v490 = vld [vmem:[%s3 + $0x1c] sm:$0xf]
      %v491 = vld [vmem:[%s3 + $0x20] sm:$0xf]
      %v492 = vld [vmem:[%s3 + $0x24] sm:$0xf]
      %v493 = vld [vmem:[%s3 + $0x28] sm:$0xf]
      %v494 = vld [vmem:[%s3 + $0x2c] sm:$0xf]
      %v495 = vld [vmem:[%s3 + $0x30] sm:$0xf]
      %v496 = vld [vmem:[%s3 + $0x34] sm:$0xf]
      %v497 = vld [vmem:[%s3 + $0x38] sm:$0xf]
      %v498 = vld [vmem:[%s3 + $0x3c] sm:$0xf]
      %v501 = vunpack.c.l.b16 %v394
      %v502 = vunpack.c.l.b16 %v395
      %v503 = vpack.c.b16 %v502, %v501
      %v521 = vunpack.c.l.b16 %v483
      %v522 = vunpack.c.l.b16 %v484
      %v523 = vunpack.c.l.b16 %v485
      %v524 = vunpack.c.l.b16 %v486
      %v525 = vunpack.c.l.b16 %v487
      %v526 = vunpack.c.l.b16 %v488
      %v527 = vunpack.c.l.b16 %v489
      %v528 = vunpack.c.l.b16 %v490
      %v529 = vunpack.c.l.b16 %v491
      %v530 = vunpack.c.l.b16 %v492
      %v531 = vunpack.c.l.b16 %v493
      %v532 = vunpack.c.l.b16 %v494
      %v533 = vunpack.c.l.b16 %v495
      %v534 = vunpack.c.l.b16 %v496
      %v535 = vunpack.c.l.b16 %v497
      %v536 = vunpack.c.l.b16 %v498
      %v537 = vpack.c.b16 %v522, %v521
      %v538 = vpack.c.b16 %v524, %v523
      %v539 = vpack.c.b16 %v526, %v525
      %v540 = vpack.c.b16 %v528, %v527
      %v541 = vpack.c.b16 %v530, %v529
      %v542 = vpack.c.b16 %v532, %v531
      %v543 = vpack.c.b16 %v534, %v533
      %v544 = vpack.c.b16 %v536, %v535
      %553 = vmatpush.bf16.msra.mxu0 %v544
      %554 = vmatpush.bf16.msra.mxu0 %v543
      %555 = vmatpush.bf16.msra.mxu0 %v542
      %556 = vmatpush.bf16.msra.mxu0 %v541
      %557 = vmatpush.bf16.msra.mxu0 %v540
      %558 = vmatpush.bf16.msra.mxu0 %v539
      %559 = vmatpush.bf16.msra.mxu0 %v538
      %560 = vmatpush.bf16.msra.mxu0 %v537
      %561 = vmatmul.bf16.gmra.mxu0 %v503
      %v562 = vpop.f32.mrf.mxu0
      %v563 = vadd.f32 0.0, %v562
      %v564 = vpop.f32.mrf.mxu0
      %v565 = vadd.f32 0.0, %v564
      %566 = vdwg.mxu0
      %v567 = vpack.c.bf16 %v565, %v563
      %v568 = vld [vmem:[%s4] sm:$0xf]
      %v569 = vld [vmem:[%s4 + $0x4] sm:$0xf]
      %v570 = vld [vmem:[%s4 + $0x8] sm:$0xf]
      %v571 = vld [vmem:[%s4 + $0xc] sm:$0xf]
      %v572 = vld [vmem:[%s4 + $0x10] sm:$0xf]
      %v573 = vld [vmem:[%s4 + $0x14] sm:$0xf]
      %v574 = vld [vmem:[%s4 + $0x18] sm:$0xf]
      %v575 = vld [vmem:[%s4 + $0x1c] sm:$0xf]
      %v576 = vld [vmem:[%s4 + $0x20] sm:$0xf]
      %v577 = vld [vmem:[%s4 + $0x24] sm:$0xf]
      %v578 = vld [vmem:[%s4 + $0x28] sm:$0xf]
      %v579 = vld [vmem:[%s4 + $0x2c] sm:$0xf]
      %v580 = vld [vmem:[%s4 + $0x30] sm:$0xf]
      %v581 = vld [vmem:[%s4 + $0x34] sm:$0xf]
      %v582 = vld [vmem:[%s4 + $0x38] sm:$0xf]
      %v583 = vld [vmem:[%s4 + $0x3c] sm:$0xf]
      %v600 = vunpack.c.l.b16 %v568
      %v601 = vunpack.c.l.b16 %v569
      %v602 = vunpack.c.l.b16 %v570
      %v603 = vunpack.c.l.b16 %v571
      %v604 = vunpack.c.l.b16 %v572
      %v605 = vunpack.c.l.b16 %v573
      %v606 = vunpack.c.l.b16 %v574
      %v607 = vunpack.c.l.b16 %v575
      %v608 = vunpack.c.l.b16 %v576
      %v609 = vunpack.c.l.b16 %v577
      %v610 = vunpack.c.l.b16 %v578
      %v611 = vunpack.c.l.b16 %v579
      %v612 = vunpack.c.l.b16 %v580
      %v613 = vunpack.c.l.b16 %v581
      %v614 = vunpack.c.l.b16 %v582
      %v615 = vunpack.c.l.b16 %v583
      %v616 = vpack.c.b16 %v601, %v600
      %v617 = vpack.c.b16 %v603, %v602
      %v618 = vpack.c.b16 %v605, %v604
      %v619 = vpack.c.b16 %v607, %v606
      %v620 = vpack.c.b16 %v609, %v608
      %v621 = vpack.c.b16 %v611, %v610
      %v622 = vpack.c.b16 %v613, %v612
      %v623 = vpack.c.b16 %v615, %v614
      %632 = vmatpush.bf16.msra.mxu0 %v623
      %633 = vmatpush.bf16.msra.mxu0 %v622
      %634 = vmatpush.bf16.msra.mxu0 %v621
      %635 = vmatpush.bf16.msra.mxu0 %v620
      %636 = vmatpush.bf16.msra.mxu0 %v619
      %637 = vmatpush.bf16.msra.mxu0 %v618
      %638 = vmatpush.bf16.msra.mxu0 %v617
      %639 = vmatpush.bf16.msra.mxu0 %v616
      %640 = vmatmul.bf16.gmra.mxu0 %v503
      %v641 = vpop.f32.mrf.mxu0
      %v642 = vadd.f32 0.0, %v641
      %v643 = vpop.f32.mrf.mxu0
      %v644 = vadd.f32 0.0, %v643
      %645 = vdwg.mxu0
      %v646 = vpack.c.bf16 %v644, %v642
      %647 = vmatpush.bf16.xpose.msra.mxu0 0
      %648 = vmatpush.bf16.xpose.msra.mxu0 0
      %649 = vmatpush.bf16.xpose.msra.mxu0 0
      %650 = vmatpush.bf16.xpose.msra.mxu0 0
      %651 = vmatpush.bf16.xpose.msra.mxu0 0
      %652 = vmatpush.bf16.xpose.msra.mxu0 0
      %653 = vmatpush.bf16.xpose.msra.mxu0 0
      %654 = vmatpush.bf16.xpose.msra.mxu0 %v567
      %655 = vmatmul.bf16.gmra.mxu0 %v482
      %v656 = vpop.f32.mrf.mxu0
      %v657 = vadd.f32 0.0, %v656
      %v658 = vpop.f32.mrf.mxu0
      %v659 = vadd.f32 0.0, %v658
      %660 = vdwg.mxu0
      %vm661 = vcmask 130048
      %v662 = vsel %vm661, %v657, -inf
      %663 = vmax.xlane.f32.xlu0 %v662
      %v664 = vpop.xlane.xlu0 %663
      %v665 = vsel %vm661, %v659, -inf
      %666 = vmax.xlane.f32.xlu0 %v665
      %v667 = vpop.xlane.xlu0 %666
      %v668 = vsub.f32 %v657, %v664
      %v669 = vsub.f32 %v659, %v667
      %v670 = vmul.f32 %v668, 1.442695
      %v671 = vpow.pop %v670
      %v672 = vmul.f32 %v669, 1.442695
      %v673 = vpow.pop %v672
      %v674 = vsel %vm661, %v671, 0.0
      %675 = vadd.xlane.f32.xlu0 %v674
      %v676 = vpop.xlane.xlu0 %675
      %v677 = vsel %vm661, %v673, 0.0
      %678 = vadd.xlane.f32.xlu0 %v677
      %v679 = vpop.xlane.xlu0 %678
      %v680 = vrcp.pop %v676
      %v681 = vmul.f32 %v676, %v680
      %v682 = vsub.f32 1.0, %v681
      %v683 = vmul.f32 %v680, %v682
      %v684 = vadd.f32 %v680, %v683
      %vm685 = vweird.f32 %v676
      %vm686 = vweird.f32 %v680
      %vm687 = vmor %vm685, %vm686
      %v688 = vsel %vm687, %v680, %v684
      %v689 = vand.u32 2147483647, %v676
      %vm690 = vcmp.eq.f32.partialorder %v689, 8.507059e+37
      %v691 = vand.u32 %v676, 2147483648
      %v692 = vor.u32 1.1754944e-38, %v691
      %v693 = vsel %vm690, %v692, %v688
      %v694 = vmul.f32 1.0, %v693
      %v695 = vrcp.pop %v679
      %v696 = vmul.f32 %v679, %v695
      %v697 = vsub.f32 1.0, %v696
      %v698 = vmul.f32 %v695, %v697
      %v699 = vadd.f32 %v695, %v698
      %vm700 = vweird.f32 %v679
      %vm701 = vweird.f32 %v695
      %vm702 = vmor %vm700, %vm701
      %v703 = vsel %vm702, %v695, %v699
      %v704 = vand.u32 2147483647, %v679
      %vm705 = vcmp.eq.f32.partialorder %v704, 8.507059e+37
      %v706 = vand.u32 %v679, 2147483648
      %v707 = vor.u32 1.1754944e-38, %v706
      %v708 = vsel %vm705, %v707, %v703
      %v709 = vmul.f32 1.0, %v708
      %v710 = vmul.f32 %v671, %v694
      %v711 = vmul.f32 %v673, %v709
      %v712 = vpack.c.bf16 %v711, %v710
      %v714 = vsel %vm661, %v712, 0
      %716 = vmatpush.bf16.msra.mxu0 0
      %717 = vmatpush.bf16.msra.mxu0 0
      %718 = vmatpush.bf16.msra.mxu0 0
      %719 = vmatpush.bf16.msra.mxu0 0
      %720 = vmatpush.bf16.msra.mxu0 0
      %721 = vmatpush.bf16.msra.mxu0 0
      %722 = vmatpush.bf16.msra.mxu0 0
      %723 = vmatpush.bf16.msra.mxu0 %v646
      %724 = vmatmul.bf16.gmra.mxu0 %v714
      %v725 = vpop.f32.mrf.mxu0
      %v726 = vadd.f32 0.0, %v725
      %v727 = vpop.f32.mrf.mxu0
      %v728 = vadd.f32 0.0, %v727
      %729 = vdwg.mxu0
      %v730 = vunpack.c.l.bf16 %v392
      %v731 = vunpack.c.l.bf16 %v393
      %v732 = vadd.f32 %v730, %v726
      %v733 = vadd.f32 %v731, %v728
      %v734 = vpack.c.bf16 %v732, %v732
      %v735 = vpack.c.bf16 %v733, %v733
      %736 = vst [vmem:[%s389] sm:$0xf] %v734
      %737 = vst [vmem:[%s389 + $0x4] sm:$0xf] %v735
      %s738 = smul.u32 2, %s21
      %p739 = scmp.lt.s32.totalorder %s20, 3
      %s740 = scalar_select %p739, %s20, 3
      %p741 = scmp.lt.s32.totalorder %s738, 7
      %s742 = scalar_select %p741, %s738, 7
      %s743 = smul.addr %s740, 8
      %s744 = sadd.s32 %s742, %s743
      %s745 = smul.addr %s744, 4
      %s746 = scalar_lea.vmem %s5, %s745
      // Predicated region
      $region41: #{gmflow_forward.6} parent=39 // pred_check
        %p747 = pneg %p193
      $region42: #{gmflow_forward.6} parent=39 // pred_check_branch
        %749 = sbr.rel (%p747) target = $region44
      $region43: #{gmflow_forward.6} parent=39 // pred_region
        %s750 = smul.u32 2, %s21
      $region44: #{gmflow_forward.6} parent=39 // pred_fallthru
        _
    $region40: #{gmflow_forward.6} parent=5 // pred_fallthru
      _
    %p751 = scmp.le.s32.totalorder 2, %s11
    // Predicated region
    $region45: #{gmflow_forward.6} parent=5 // pred_check
      %p752 = pneg %p751
    $region46: #{gmflow_forward.6} parent=5 // pred_check_branch
      %754 = sbr.rel (%p752) target = $region48
    $region47: #{gmflow_forward.6} parent=5 // pred_region
      %s755 = ssub.s32 %s11, 2
      // Predicated region
      $region49: #{gmflow_forward.6} parent=47 // pred_check
        %p756 = pneg %p199
      $region50: #{gmflow_forward.6} parent=47 // pred_check_branch
        %758 = sbr.rel (%p756) target = $region52
      $region51: #{gmflow_forward.6} parent=47 // pred_region
        %s759 = smul.u32 2, %s23
        %p760 = scmp.lt.s32.totalorder %s22, 3
        %s761 = scalar_select %p760, %s22, 3
        %p762 = scmp.lt.s32.totalorder %s759, 7
        %s763 = scalar_select %p762, %s759, 7
        %s764 = smul.addr %s761, 8
        %s765 = sadd.s32 %s763, %s764
        %s766 = smul.addr %s765, 4
        %s767 = scalar_lea.vmem %s5, %s766
      $region52: #{gmflow_forward.6} parent=47 // pred_fallthru
        _
    $region48: #{gmflow_forward.6} parent=5 // pred_fallthru
      _
  $region6: #{gmflow_forward.6} parent=0 // loop_footer
    %s15 = sadd.s32 1, %s11
  $region7: #{gmflow_forward.6} parent=0 // loop_footer_branch
    %10 = sbr.rel target = $region3
  $region8: #{gmflow_forward.6} parent=0 // loop_exit
    _

// kernel: gmflow_forward.7
$region0: #{gmflow_forward.7}
  #allocation0 [shape = 'u32[]', space=smem, size = 0x4, offset = 0x4, fixed_abs, tag = 'smem constant byte address 0x4 - core index']
  #allocation1 [shape = 'u32[72,128]{1,0:T(1,128)}', space=vmem, size = 0x9000, scoped, tag = 'internal scratch']
  #allocation2 [shape = 'f32[64,1]{1,0:T(8,128)}', space=vmem, size = 0x8000, scoped, tag = 'scratch operand']
  #allocation3 [shape = 'f32[64,1]{1,0:T(8,128)}', space=vmem, size = 0x8000, scoped, tag = 'scratch operand']
  #allocation4 [shape = 'f32[64,8]{1,0:T(8,128)}', space=vmem, size = 0x8000, scoped, tag = 'scratch operand']
  %s0 = inlined_call_operand.vmem [shape: bf16[2,64,128], index: 0, kind: input, shape index: {}]
  %s1 = inlined_call_operand.vmem [shape: bf16[2,64,128], index: 1, kind: input, shape index: {}]
  %s2 = inlined_call_operand.vmem [shape: f32[64,8], index: 2, kind: input, shape index: {}, may-alias: {2,3}]
  %s3 = inlined_call_operand.vmem [shape: f32[64,8], index: 3, kind: input, shape index: {}, may-alias: {2,3}]
  %s4 = inlined_call_operand.vmem [shape: f32[2,64,8], index: 4, kind: output, shape index: {}]
  %s5 = sld [smem:[#allocation0]]
  $region57: #{gmflow_forward.7} parent=0
    _
  %s7 = ssub.s32 1, %s5
  %s8 = scalar_select 0, %s7, %s5
  loop: start=0, step=1, limit=4
  $region2: #{gmflow_forward.7} parent=0 // loop_pre_header
    _
  $region3: #{gmflow_forward.7} parent=0 // loop_header
    %s10 = sphi 0, %s14
    %p11 = scmp.ge.s32.totalorder %s10, 4
    %s17 = sphi 0, %s36
    %s18 = sphi 0, %s32
    %s19 = sphi 0, %s28
    %s20 = sphi 0, %s17
    %s21 = sphi 0, %s18
    %s22 = sphi 0, %s19
    %s23 = sphi 0, %s20
    %s24 = sphi 0, %s21
    %s25 = sphi 0, %s22
    %s41 = sphi 0, %s43
    %s44 = sphi 0, %s41
    %s45 = sphi 0, %s44
    %s61 = sphi 0, %s45
    %s69 = sphi 0, %s71
    %s72 = sphi 0, %s69
    %s73 = sphi 0, %s72
    %s89 = sphi 0, %s73
    %s95 = sphi 0, %s97
    %s98 = sphi 0, %s95
    %s99 = sphi 0, %s98
    %s115 = sphi 0, %s99
    %s121 = sphi 0, %s123
    %s124 = sphi 0, %s121
    %s125 = sphi 0, %s124
    %s141 = sphi 0, %s125
    %s149 = sphi 0, %s151
    %s152 = sphi 0, %s149
    %s153 = sphi 0, %s152
    %s169 = sphi 0, %s153
  $region4: #{gmflow_forward.7} parent=0 // loop_header_branch
    %13 = sbr.rel (%p11) target = $region8
  $region5: #{gmflow_forward.7} parent=0 // loop_body
    %s15 = ssub.s32 %s10, 1
    %s16 = ssub.s32 %s10, 2
    %s26 = sadd.s32 1, %s19
    %p27 = scmp.ge.s32.totalorder %s26, 1
    %s28 = scalar_select %p27, 0, %s26
    %s29 = sadd.s32 1, %s18
    %s30 = scalar_select %p27, %s29, %s18
    %p31 = scmp.ge.s32.totalorder %s30, 1
    %s32 = scalar_select %p31, 0, %s30
    %s33 = sadd.s32 1, %s17
    %s34 = scalar_select %p31, %s33, %s17
    %p35 = scmp.ge.s32.totalorder %s34, 2
    %s36 = scalar_select %p35, 0, %s34
    %s37 = ssub.s32 %s17, %s36
    %s38 = ssub.s32 %s18, %s32
    %s39 = sor.u32 %s37, %s38
    %p40 = scmp.eq.s32.totalorder %s39, 0
    %s42 = sadd.s32 %s41, 1
    %s43 = scalar_select %p40, %s41, %s42
    %p46 = pneg %p40
    %p47 = scmp.eq.s32.totalorder %s10, 1
    %p48 = por %p46, %p47
    %p49 = scmp.ne.s32.totalorder %s41, %s44
    %p50 = scmp.eq.s32.totalorder %s10, 0
    %p51 = por %p49, %p50
    %p52 = scmp.ne.s32.totalorder %s41, %s44
    %p53 = scmp.eq.s32.totalorder %s15, 1
    %p54 = por %p52, %p53
    %p55 = scmp.ne.s32.totalorder %s44, %s45
    %p56 = scmp.eq.s32.totalorder %s15, 0
    %p57 = por %p55, %p56
    %p58 = scmp.ne.s32.totalorder %s44, %s45
    %p59 = scmp.eq.s32.totalorder %s16, 1
    %p60 = por %p58, %p59
    %p62 = scmp.ne.s32.totalorder %s45, %s61
    %p63 = scmp.eq.s32.totalorder %s16, 0
    %p64 = por %p62, %p63
    %s65 = ssub.s32 %s17, %s36
    %s66 = ssub.s32 %s19, %s28
    %s67 = sor.u32 %s65, %s66
    %p68 = scmp.eq.s32.totalorder %s67, 0
    %s70 = sadd.s32 %s69, 1
    %s71 = scalar_select %p68, %s69, %s70
    %p74 = pneg %p68
    %p75 = scmp.eq.s32.totalorder %s10, 1
    %p76 = por %p74, %p75
    %p77 = scmp.ne.s32.totalorder %s69, %s72
    %p78 = scmp.eq.s32.totalorder %s10, 0
    %p79 = por %p77, %p78
    %p80 = scmp.ne.s32.totalorder %s69, %s72
    %p81 = scmp.eq.s32.totalorder %s15, 1
    %p82 = por %p80, %p81
    %p83 = scmp.ne.s32.totalorder %s72, %s73
    %p84 = scmp.eq.s32.totalorder %s15, 0
    %p85 = por %p83, %p84
    %p86 = scmp.ne.s32.totalorder %s72, %s73
    %p87 = scmp.eq.s32.totalorder %s16, 1
    %p88 = por %p86, %p87
    %p90 = scmp.ne.s32.totalorder %s73, %s89
    %p91 = scmp.eq.s32.totalorder %s16, 0
    %p92 = por %p90, %p91
    %s93 = ssub.s32 %s19, %s28
    %p94 = scmp.eq.s32.totalorder %s93, 0
    %s96 = sadd.s32 %s95, 1
    %s97 = scalar_select %p94, %s95, %s96
    %p100 = pneg %p94
    %p101 = scmp.eq.s32.totalorder %s10, 1
    %p102 = por %p100, %p101
    %p103 = scmp.ne.s32.totalorder %s95, %s98
    %p104 = scmp.eq.s32.totalorder %s10, 0
    %p105 = por %p103, %p104
    %p106 = scmp.ne.s32.totalorder %s95, %s98
    %p107 = scmp.eq.s32.totalorder %s15, 1
    %p108 = por %p106, %p107
    %p109 = scmp.ne.s32.totalorder %s98, %s99
    %p110 = scmp.eq.s32.totalorder %s15, 0
    %p111 = por %p109, %p110
    %p112 = scmp.ne.s32.totalorder %s98, %s99
    %p113 = scmp.eq.s32.totalorder %s16, 1
    %p114 = por %p112, %p113
    %p116 = scmp.ne.s32.totalorder %s99, %s115
    %p117 = scmp.eq.s32.totalorder %s16, 0
    %p118 = por %p116, %p117
    %s119 = ssub.s32 %s18, %s32
    %p120 = scmp.eq.s32.totalorder %s119, 0
    %s122 = sadd.s32 %s121, 1
    %s123 = scalar_select %p120, %s121, %s122
    %p126 = pneg %p120
    %p127 = scmp.eq.s32.totalorder %s10, 1
    %p128 = por %p126, %p127
    %p129 = scmp.ne.s32.totalorder %s121, %s124
    %p130 = scmp.eq.s32.totalorder %s10, 0
    %p131 = por %p129, %p130
    %p132 = scmp.ne.s32.totalorder %s121, %s124
    %p133 = scmp.eq.s32.totalorder %s15, 1
    %p134 = por %p132, %p133
    %p135 = scmp.ne.s32.totalorder %s124, %s125
    %p136 = scmp.eq.s32.totalorder %s15, 0
    %p137 = por %p135, %p136
    %p138 = scmp.ne.s32.totalorder %s124, %s125
    %p139 = scmp.eq.s32.totalorder %s16, 1
    %p140 = por %p138, %p139
    %p142 = scmp.ne.s32.totalorder %s125, %s141
    %p143 = scmp.eq.s32.totalorder %s16, 0
    %p144 = por %p142, %p143
    %s145 = ssub.s32 %s17, %s36
    %s146 = ssub.s32 %s18, %s32
    %s147 = sor.u32 %s145, %s146
    %p148 = scmp.eq.s32.totalorder %s147, 0
    %s150 = sadd.s32 %s149, 1
    %s151 = scalar_select %p148, %s149, %s150
    %p154 = pneg %p148
    %p155 = scmp.eq.s32.totalorder %s10, 1
    %p156 = por %p154, %p155
    %p157 = scmp.ne.s32.totalorder %s149, %s152
    %p158 = scmp.eq.s32.totalorder %s10, 0
    %p159 = por %p157, %p158
    %p160 = scmp.ne.s32.totalorder %s149, %s152
    %p161 = scmp.eq.s32.totalorder %s15, 1
    %p162 = por %p160, %p161
    %p163 = scmp.ne.s32.totalorder %s152, %s153
    %p164 = scmp.eq.s32.totalorder %s15, 0
    %p165 = por %p163, %p164
    %p166 = scmp.ne.s32.totalorder %s152, %s153
    %p167 = scmp.eq.s32.totalorder %s16, 1
    %p168 = por %p166, %p167
    %p170 = scmp.ne.s32.totalorder %s153, %s169
    %p171 = scmp.eq.s32.totalorder %s16, 0
    %p172 = por %p170, %p171
    %p173 = scmp.le.s32.totalorder 1, %s10
    %p174 = scmp.lt.s32.totalorder %s10, 3
    %p175 = pnand %p173, %p174
    %p176 = pneg %p175
    // Predicated region
    $region9: #{gmflow_forward.7} parent=5 // pred_check
      _
    $region10: #{gmflow_forward.7} parent=5 // pred_check_branch
      %178 = sbr.rel (%p175) target = $region12
    $region11: #{gmflow_forward.7} parent=5 // pred_region
      %s179 = ssub.s32 %s10, 1
      // Predicated region
      $region13: #{gmflow_forward.7} parent=11 // pred_check
        %p180 = pneg %p111
      $region14: #{gmflow_forward.7} parent=11 // pred_check_branch
        %182 = sbr.rel (%p180) target = $region16
      $region15: #{gmflow_forward.7} parent=11 // pred_region
        %s183 = smul.u32 8, %s22
        %p184 = scmp.lt.s32.totalorder %s183, 7
        %s185 = scalar_select %p184, %s183, 7
        %s186 = smul.addr %s185, 8
        %s187 = scalar_lea.vmem %s2, %s186
        %s188 = smul.u32 8, %s22
      $region16: #{gmflow_forward.7} parent=11 // pred_fallthru
        _
      // Predicated region
      $region17: #{gmflow_forward.7} parent=11 // pred_check
        %p189 = pneg %p137
      $region18: #{gmflow_forward.7} parent=11 // pred_check_branch
        %191 = sbr.rel (%p189) target = $region20
      $region19: #{gmflow_forward.7} parent=11 // pred_region
        %s192 = smul.u32 8, %s21
        %p193 = scmp.lt.s32.totalorder %s192, 7
        %s194 = scalar_select %p193, %s192, 7
        %s195 = smul.addr %s194, 8
        %s196 = scalar_lea.vmem %s3, %s195
        %s197 = smul.u32 8, %s21
      $region20: #{gmflow_forward.7} parent=11 // pred_fallthru
        _
    $region12: #{gmflow_forward.7} parent=5 // pred_fallthru
      _
    %p198 = scmp.lt.s32.totalorder %s10, 2
    // Predicated region
    $region21: #{gmflow_forward.7} parent=5 // pred_check
      %p199 = pneg %p198
    $region22: #{gmflow_forward.7} parent=5 // pred_check_branch
      %201 = sbr.rel (%p199) target = $region24
    $region23: #{gmflow_forward.7} parent=5 // pred_region
      // Predicated region
      $region25: #{gmflow_forward.7} parent=23 // pred_check
        %p202 = pneg %p51
      $region26: #{gmflow_forward.7} parent=23 // pred_check_branch
        %204 = sbr.rel (%p202) target = $region28
      $region27: #{gmflow_forward.7} parent=23 // pred_region
        %s205 = smul.u32 8, %s18
        %p206 = scmp.lt.s32.totalorder %s17, 1
        %s207 = scalar_select %p206, %s17, 1
        %p208 = scmp.lt.s32.totalorder %s205, 7
        %s209 = scalar_select %p208, %s205, 7
        %s210 = smul.addr %s207, 8
        %s211 = sadd.s32 %s209, %s210
        %s212 = smul.addr %s211, 4
        %s213 = scalar_lea.vmem %s0, %s212
        %s214 = smul.u32 8, %s18
      $region28: #{gmflow_forward.7} parent=23 // pred_fallthru
        _
      // Predicated region
      $region29: #{gmflow_forward.7} parent=23 // pred_check
        %p215 = pneg %p79
      $region30: #{gmflow_forward.7} parent=23 // pred_check_branch
        %217 = sbr.rel (%p215) target = $region32
      $region31: #{gmflow_forward.7} parent=23 // pred_region
        %s218 = smul.u32 8, %s19
        %p219 = scmp.lt.s32.totalorder %s17, 1
        %s220 = scalar_select %p219, %s17, 1
        %p221 = scmp.lt.s32.totalorder %s218, 7
        %s222 = scalar_select %p221, %s218, 7
        %s223 = smul.addr %s220, 8
        %s224 = sadd.s32 %s222, %s223
        %s225 = smul.addr %s224, 4
        %s226 = scalar_lea.vmem %s1, %s225
        %s227 = smul.u32 8, %s19
      $region32: #{gmflow_forward.7} parent=23 // pred_fallthru
        _
    $region24: #{gmflow_forward.7} parent=5 // pred_fallthru
      _
    %p228 = scmp.le.s32.totalorder 1, %s10
    %p229 = scmp.lt.s32.totalorder %s10, 3
    %p230 = pnand %p228, %p229
    %p231 = pneg %p230
    // Predicated region
    $region33: #{gmflow_forward.7} parent=5 // pred_check
      _
    $region34: #{gmflow_forward.7} parent=5 // pred_check_branch
      %233 = sbr.rel (%p230) target = $region36
    $region35: #{gmflow_forward.7} parent=5 // pred_region
      %s234 = ssub.s32 %s10, 1
      %s235 = smul.u32 8, %s21
      %p236 = scmp.lt.s32.totalorder %s20, 1
      %s237 = scalar_select %p236, %s20, 1
      %p238 = scmp.lt.s32.totalorder %s235, 7
      %s239 = scalar_select %p238, %s235, 7
      %s240 = smul.addr %s237, 8
      %s241 = sadd.s32 %s239, %s240
      %s242 = smul.addr %s241, 4
      %s243 = scalar_lea.vmem %s0, %s242
      %p244 = pneg %p57
      %p245 = pneg %p54
      %s246 = smul.u32 8, %s22
      %p247 = scmp.lt.s32.totalorder %s20, 1
      %s248 = scalar_select %p247, %s20, 1
      %p249 = scmp.lt.s32.totalorder %s246, 7
      %s250 = scalar_select %p249, %s246, 7
      %s251 = smul.addr %s248, 8
      %s252 = sadd.s32 %s250, %s251
      %s253 = smul.addr %s252, 4
      %s254 = scalar_lea.vmem %s1, %s253
      %p255 = pneg %p85
      %p256 = pneg %p82
      %s257 = smul.u32 8, %s22
      %p258 = scmp.lt.s32.totalorder %s257, 7
      %s259 = scalar_select %p258, %s257, 7
      %s260 = smul.addr %s259, 8
      %s261 = scalar_lea.vmem %s2, %s260
      %p262 = pneg %p111
      %p263 = pneg %p108
      %s264 = smul.u32 8, %s21
      %p265 = scmp.lt.s32.totalorder %s264, 7
      %s266 = scalar_select %p265, %s264, 7
      %s267 = smul.addr %s266, 8
      %s268 = scalar_lea.vmem %s3, %s267
      %p269 = pneg %p137
      %p270 = pneg %p134
      %p271 = pneg %p165
      %p272 = pneg %p162
      %s273 = smul.u32 8, %s21
      %p274 = scmp.lt.s32.totalorder %s20, 1
      %s275 = scalar_select %p274, %s20, 1
      %p276 = scmp.lt.s32.totalorder %s273, 7
      %s277 = scalar_select %p276, %s273, 7
      %s278 = smul.addr %s275, 8
      %s279 = sadd.s32 %s277, %s278
      %s280 = smul.addr %s279, 8
      %s281 = scalar_lea.vmem %s4, %s280
      %s282 = smul.u32 8, %s21
      %p283 = scmp.lt.s32.totalorder %s20, 1
      %s284 = scalar_select %p283, %s20, 1
      %p285 = scmp.lt.s32.totalorder %s282, 7
      %s286 = scalar_select %p285, %s282, 7
      %s287 = smul.addr %s284, 8
      %s288 = sadd.s32 %s286, %s287
      %s289 = smul.addr %s288, 4
      %s290 = scalar_lea.vmem %s0, %s289
      %s291 = smul.u32 8, %s21
      %s292 = smul.u32 8, %s22
      %p293 = scmp.lt.s32.totalorder %s20, 1
      %s294 = scalar_select %p293, %s20, 1
      %p295 = scmp.lt.s32.totalorder %s292, 7
      %s296 = scalar_select %p295, %s292, 7
      %s297 = smul.addr %s294, 8
      %s298 = sadd.s32 %s296, %s297
      %s299 = smul.addr %s298, 4
      %s300 = scalar_lea.vmem %s1, %s299
      %s301 = smul.u32 8, %s22
      %s302 = smul.u32 8, %s22
      %p303 = scmp.lt.s32.totalorder %s302, 7
      %s304 = scalar_select %p303, %s302, 7
      %s305 = smul.addr %s304, 8
      %s306 = scalar_lea.vmem %s2, %s305
      %s307 = smul.u32 8, %s22
      %s308 = smul.u32 8, %s21
      %p309 = scmp.lt.s32.totalorder %s308, 7
      %s310 = scalar_select %p309, %s308, 7
      %s311 = smul.addr %s310, 8
      %s312 = scalar_lea.vmem %s3, %s311
      %s313 = smul.u32 8, %s21
      %s314 = smul.u32 8, %s21
      %p315 = scmp.lt.s32.totalorder %s20, 1
      %s316 = scalar_select %p315, %s20, 1
      %p317 = scmp.lt.s32.totalorder %s314, 7
      %s318 = scalar_select %p317, %s314, 7
      %s319 = smul.addr %s316, 8
      %s320 = sadd.s32 %s318, %s319
      %s321 = smul.addr %s320, 8
      %s322 = scalar_lea.vmem %s4, %s321
      %s323 = smul.u32 8, %s21
      %p325 = scmp.eq.s32.totalorder %s22, 0
      // Predicated region
      $region37: #{gmflow_forward.7} parent=35 // pred_check
        %p326 = pneg %p325
      $region38: #{gmflow_forward.7} parent=35 // pred_check_branch
        %328 = sbr.rel (%p326) target = $region40
      $region39: #{gmflow_forward.7} parent=35 // pred_region
        %vm329 = vcmask 7168
        %330 = vst.msk [vmem:[#allocation2] sm:$0xff] %vm329, -inf
        %331 = vst.msk [vmem:[#allocation2 + $0x8] sm:$0xff] %vm329, -inf
        %332 = vst.msk [vmem:[#allocation2 + $0x10] sm:$0xff] %vm329, -inf
        %333 = vst.msk [vmem:[#allocation2 + $0x18] sm:$0xff] %vm329, -inf
        %334 = vst.msk [vmem:[#allocation2 + $0x20] sm:$0xff] %vm329, -inf
        %335 = vst.msk [vmem:[#allocation2 + $0x28] sm:$0xff] %vm329, -inf
        %336 = vst.msk [vmem:[#allocation2 + $0x30] sm:$0xff] %vm329, -inf
        %337 = vst.msk [vmem:[#allocation2 + $0x38] sm:$0xff] %vm329, -inf
        %338 = vst.msk [vmem:[#allocation3] sm:$0xff] %vm329, 0.0
        %339 = vst.msk [vmem:[#allocation3 + $0x8] sm:$0xff] %vm329, 0.0
        %340 = vst.msk [vmem:[#allocation3 + $0x10] sm:$0xff] %vm329, 0.0
        %341 = vst.msk [vmem:[#allocation3 + $0x18] sm:$0xff] %vm329, 0.0
        %342 = vst.msk [vmem:[#allocation3 + $0x20] sm:$0xff] %vm329, 0.0
        %343 = vst.msk [vmem:[#allocation3 + $0x28] sm:$0xff] %vm329, 0.0
        %344 = vst.msk [vmem:[#allocation3 + $0x30] sm:$0xff] %vm329, 0.0
        %345 = vst.msk [vmem:[#allocation3 + $0x38] sm:$0xff] %vm329, 0.0
        %vm346 = vcmask 64512
        %347 = vst.msk [vmem:[#allocation4] sm:$0xff] %vm346, 0.0
        %348 = vst.msk [vmem:[#allocation4 + $0x8] sm:$0xff] %vm346, 0.0
        %349 = vst.msk [vmem:[#allocation4 + $0x10] sm:$0xff] %vm346, 0.0
        %350 = vst.msk [vmem:[#allocation4 + $0x18] sm:$0xff] %vm346, 0.0
        %351 = vst.msk [vmem:[#allocation4 + $0x20] sm:$0xff] %vm346, 0.0
        %352 = vst.msk [vmem:[#allocation4 + $0x28] sm:$0xff] %vm346, 0.0
        %353 = vst.msk [vmem:[#allocation4 + $0x30] sm:$0xff] %vm346, 0.0
        %354 = vst.msk [vmem:[#allocation4 + $0x38] sm:$0xff] %vm346, 0.0
      $region40: #{gmflow_forward.7} parent=35 // pred_fallthru
        _
      %v355 = vld [vmem:[%s290] sm:$0xf]
      %v356 = vld [vmem:[%s290 + $0x4] sm:$0xf]
      %v357 = vld [vmem:[%s290 + $0x8] sm:$0xf]
      %v358 = vld [vmem:[%s290 + $0xc] sm:$0xf]
      %v359 = vld [vmem:[%s290 + $0x10] sm:$0xf]
      %v360 = vld [vmem:[%s290 + $0x14] sm:$0xf]
      %v361 = vld [vmem:[%s290 + $0x18] sm:$0xf]
      %v362 = vld [vmem:[%s290 + $0x1c] sm:$0xf]
      %v363 = vunpack.c.l.bf16 %v355
      %v364 = vunpack.c.l.bf16 %v356
      %v365 = vunpack.c.l.bf16 %v357
      %v366 = vunpack.c.l.bf16 %v358
      %v367 = vunpack.c.l.bf16 %v359
      %v368 = vunpack.c.l.bf16 %v360
      %v369 = vunpack.c.l.bf16 %v361
      %v370 = vunpack.c.l.bf16 %v362
      %v371 = vmul.f32 %v363, 0.088378906
      %v372 = vmul.f32 %v364, 0.088378906
      %v373 = vmul.f32 %v365, 0.088378906
      %v374 = vmul.f32 %v366, 0.088378906
      %v375 = vmul.f32 %v367, 0.088378906
      %v376 = vmul.f32 %v368, 0.088378906
      %v377 = vmul.f32 %v369, 0.088378906
      %v378 = vmul.f32 %v370, 0.088378906
      %v379 = vpack.c.bf16 %v372, %v371
      %v380 = vpack.c.bf16 %v374, %v373
      %v381 = vpack.c.bf16 %v376, %v375
      %v382 = vpack.c.bf16 %v378, %v377
      %v383 = vld [vmem:[%s300] sm:$0xf]
      %v384 = vld [vmem:[%s300 + $0x4] sm:$0xf]
      %v385 = vld [vmem:[%s300 + $0x8] sm:$0xf]
      %v386 = vld [vmem:[%s300 + $0xc] sm:$0xf]
      %v387 = vld [vmem:[%s300 + $0x10] sm:$0xf]
      %v388 = vld [vmem:[%s300 + $0x14] sm:$0xf]
      %v389 = vld [vmem:[%s300 + $0x18] sm:$0xf]
      %v390 = vld [vmem:[%s300 + $0x1c] sm:$0xf]
      %v399 = vunpack.c.l.b16 %v383
      %v400 = vunpack.c.l.b16 %v384
      %v401 = vunpack.c.l.b16 %v385
      %v402 = vunpack.c.l.b16 %v386
      %v403 = vunpack.c.l.b16 %v387
      %v404 = vunpack.c.l.b16 %v388
      %v405 = vunpack.c.l.b16 %v389
      %v406 = vunpack.c.l.b16 %v390
      %v407 = vpack.c.b16 %v400, %v399
      %v408 = vpack.c.b16 %v402, %v401
      %v409 = vpack.c.b16 %v404, %v403
      %v410 = vpack.c.b16 %v406, %v405
      %415 = vmatpush.bf16.xpose.msra.mxu0 0
      %416 = vmatpush.bf16.xpose.msra.mxu0 0
      %417 = vmatpush.bf16.xpose.msra.mxu0 0
      %418 = vmatpush.bf16.xpose.msra.mxu0 0
      %419 = vmatpush.bf16.xpose.msra.mxu0 %v410
      %420 = vmatpush.bf16.xpose.msra.mxu0 %v409
      %421 = vmatpush.bf16.xpose.msra.mxu0 %v408
      %422 = vmatpush.bf16.xpose.msra.mxu0 %v407
      %423 = vmatmul.bf16.gmra.mxu0 %v379
      %v424 = vpop.f32.mrf.mxu0
      %v425 = vadd.f32 0.0, %v424
      %v426 = vpop.f32.mrf.mxu0
      %v427 = vadd.f32 0.0, %v426
      %428 = vmatmul.bf16.gmra.mxu0 %v380
      %v429 = vpop.f32.mrf.mxu0
      %v430 = vadd.f32 0.0, %v429
      %v431 = vpop.f32.mrf.mxu0
      %v432 = vadd.f32 0.0, %v431
      %433 = vmatmul.bf16.gmra.mxu0 %v381
      %v434 = vpop.f32.mrf.mxu0
      %v435 = vadd.f32 0.0, %v434
      %v436 = vpop.f32.mrf.mxu0
      %v437 = vadd.f32 0.0, %v436
      %438 = vmatmul.bf16.gmra.mxu0 %v382
      %v439 = vpop.f32.mrf.mxu0
      %v440 = vadd.f32 0.0, %v439
      %v441 = vpop.f32.mrf.mxu0
      %v442 = vadd.f32 0.0, %v441
      %443 = vdwg.mxu0
      %v444 = vld [vmem:[#allocation2] sm:$0xff]
      %v445 = vld [vmem:[#allocation2 + $0x8] sm:$0xff]
      %v446 = vld [vmem:[#allocation2 + $0x10] sm:$0xff]
      %v447 = vld [vmem:[#allocation2 + $0x18] sm:$0xff]
      %v448 = vld [vmem:[#allocation2 + $0x20] sm:$0xff]
      %v449 = vld [vmem:[#allocation2 + $0x28] sm:$0xff]
      %v450 = vld [vmem:[#allocation2 + $0x30] sm:$0xff]
      %v451 = vld [vmem:[#allocation2 + $0x38] sm:$0xff]
      %vm452 = vcmask 523264
      %v453 = vsel %vm452, %v425, -inf
      %454 = vmax.xlane.f32.xlu0 %v453
      %v455 = vpop.xlane.xlu0 %454
      %v456 = vsel %vm452, %v427, -inf
      %457 = vmax.xlane.f32.xlu0 %v456
      %v458 = vpop.xlane.xlu0 %457
      %v459 = vsel %vm452, %v430, -inf
      %460 = vmax.xlane.f32.xlu0 %v459
      %v461 = vpop.xlane.xlu0 %460
      %v462 = vsel %vm452, %v432, -inf
      %463 = vmax.xlane.f32.xlu0 %v462
      %v464 = vpop.xlane.xlu0 %463
      %v465 = vsel %vm452, %v435, -inf
      %466 = vmax.xlane.f32.xlu0 %v465
      %v467 = vpop.xlane.xlu0 %466
      %v468 = vsel %vm452, %v437, -inf
      %469 = vmax.xlane.f32.xlu0 %v468
      %v470 = vpop.xlane.xlu0 %469
      %v471 = vsel %vm452, %v440, -inf
      %472 = vmax.xlane.f32.xlu0 %v471
      %v473 = vpop.xlane.xlu0 %472
      %v474 = vsel %vm452, %v442, -inf
      %475 = vmax.xlane.f32.xlu0 %v474
      %v476 = vpop.xlane.xlu0 %475
      %v477 = vmax.f32 %v444, %v455
      %v478 = vmax.f32 %v445, %v458
      %v479 = vmax.f32 %v446, %v461
      %v480 = vmax.f32 %v447, %v464
      %v481 = vmax.f32 %v448, %v467
      %v482 = vmax.f32 %v449, %v470
      %v483 = vmax.f32 %v450, %v473
      %v484 = vmax.f32 %v451, %v476
      %v485 = vsub.f32 %v444, %v477
      %v486 = vsub.f32 %v445, %v478
      %v487 = vsub.f32 %v446, %v479
      %v488 = vsub.f32 %v447, %v480
      %v489 = vsub.f32 %v448, %v481
      %v490 = vsub.f32 %v449, %v482
      %v491 = vsub.f32 %v450, %v483
      %v492 = vsub.f32 %v451, %v484
      %v493 = vmul.f32 %v485, 1.442695
      %v494 = vpow.pop %v493
      %v495 = vmul.f32 %v486, 1.442695
      %v496 = vpow.pop %v495
      %v497 = vmul.f32 %v487, 1.442695
      %v498 = vpow.pop %v497
      %v499 = vmul.f32 %v488, 1.442695
      %v500 = vpow.pop %v499
      %v501 = vmul.f32 %v489, 1.442695
      %v502 = vpow.pop %v501
      %v503 = vmul.f32 %v490, 1.442695
      %v504 = vpow.pop %v503
      %v505 = vmul.f32 %v491, 1.442695
      %v506 = vpow.pop %v505
      %v507 = vmul.f32 %v492, 1.442695
      %v508 = vpow.pop %v507
      %510 = vset.pattern.permute.xlu0 0
      %511 = vperm.xlu0 %510, %v477
      %v512 = vpop.permute.xlu0 %511
      %515 = vset.pattern.permute.xlu0 0
      %516 = vperm.xlu0 %515, %v478
      %v517 = vpop.permute.xlu0 %516
      %520 = vset.pattern.permute.xlu0 0
      %521 = vperm.xlu0 %520, %v479
      %v522 = vpop.permute.xlu0 %521
      %525 = vset.pattern.permute.xlu0 0
      %526 = vperm.xlu0 %525, %v480
      %v527 = vpop.permute.xlu0 %526
      %530 = vset.pattern.permute.xlu0 0
      %531 = vperm.xlu0 %530, %v481
      %v532 = vpop.permute.xlu0 %531
      %535 = vset.pattern.permute.xlu0 0
      %536 = vperm.xlu0 %535, %v482
      %v537 = vpop.permute.xlu0 %536
      %540 = vset.pattern.permute.xlu0 0
      %541 = vperm.xlu0 %540, %v483
      %v542 = vpop.permute.xlu0 %541
      %545 = vset.pattern.permute.xlu0 0
      %546 = vperm.xlu0 %545, %v484
      %v547 = vpop.permute.xlu0 %546
      %v549 = vsub.f32 %v425, %v512
      %v550 = vsub.f32 %v427, %v517
      %v551 = vsub.f32 %v430, %v522
      %v552 = vsub.f32 %v432, %v527
      %v553 = vsub.f32 %v435, %v532
      %v554 = vsub.f32 %v437, %v537
      %v555 = vsub.f32 %v440, %v542
      %v556 = vsub.f32 %v442, %v547
      %v557 = vmul.f32 %v549, 1.442695
      %v558 = vpow.pop %v557
      %v559 = vmul.f32 %v550, 1.442695
      %v560 = vpow.pop %v559
      %v561 = vmul.f32 %v551, 1.442695
      %v562 = vpow.pop %v561
      %v563 = vmul.f32 %v552, 1.442695
      %v564 = vpow.pop %v563
      %v565 = vmul.f32 %v553, 1.442695
      %v566 = vpow.pop %v565
      %v567 = vmul.f32 %v554, 1.442695
      %v568 = vpow.pop %v567
      %v569 = vmul.f32 %v555, 1.442695
      %v570 = vpow.pop %v569
      %v571 = vmul.f32 %v556, 1.442695
      %v572 = vpow.pop %v571
      %v573 = vld [vmem:[#allocation3] sm:$0xff]
      %v574 = vld [vmem:[#allocation3 + $0x8] sm:$0xff]
      %v575 = vld [vmem:[#allocation3 + $0x10] sm:$0xff]
      %v576 = vld [vmem:[#allocation3 + $0x18] sm:$0xff]
      %v577 = vld [vmem:[#allocation3 + $0x20] sm:$0xff]
      %v578 = vld [vmem:[#allocation3 + $0x28] sm:$0xff]
      %v579 = vld [vmem:[#allocation3 + $0x30] sm:$0xff]
      %v580 = vld [vmem:[#allocation3 + $0x38] sm:$0xff]
      %v581 = vmul.f32 %v494, %v573
      %v582 = vmul.f32 %v496, %v574
      %v583 = vmul.f32 %v498, %v575
      %v584 = vmul.f32 %v500, %v576
      %v585 = vmul.f32 %v502, %v577
      %v586 = vmul.f32 %v504, %v578
      %v587 = vmul.f32 %v506, %v579
      %v588 = vmul.f32 %v508, %v580
      %v589 = vsel %vm452, %v558, 0.0
      %590 = vadd.xlane.f32.xlu0 %v589
      %v591 = vpop.xlane.xlu0 %590
      %v592 = vsel %vm452, %v560, 0.0
      %593 = vadd.xlane.f32.xlu0 %v592
      %v594 = vpop.xlane.xlu0 %593
      %v595 = vsel %vm452, %v562, 0.0
      %596 = vadd.xlane.f32.xlu0 %v595
      %v597 = vpop.xlane.xlu0 %596
      %v598 = vsel %vm452, %v564, 0.0
      %599 = vadd.xlane.f32.xlu0 %v598
      %v600 = vpop.xlane.xlu0 %599
      %v601 = vsel %vm452, %v566, 0.0
      %602 = vadd.xlane.f32.xlu0 %v601
      %v603 = vpop.xlane.xlu0 %602
      %v604 = vsel %vm452, %v568, 0.0
      %605 = vadd.xlane.f32.xlu0 %v604
      %v606 = vpop.xlane.xlu0 %605
      %v607 = vsel %vm452, %v570, 0.0
      %608 = vadd.xlane.f32.xlu0 %v607
      %v609 = vpop.xlane.xlu0 %608
      %v610 = vsel %vm452, %v572, 0.0
      %611 = vadd.xlane.f32.xlu0 %v610
      %v612 = vpop.xlane.xlu0 %611
      %v613 = vadd.f32 %v581, %v591
      %v614 = vadd.f32 %v582, %v594
      %v615 = vadd.f32 %v583, %v597
      %v616 = vadd.f32 %v584, %v600
      %v617 = vadd.f32 %v585, %v603
      %v618 = vadd.f32 %v586, %v606
      %v619 = vadd.f32 %v587, %v609
      %v620 = vadd.f32 %v588, %v612
      %vm621 = vcmask 7168
      %622 = vst.msk [vmem:[#allocation3] sm:$0xff] %vm621, %v613
      %623 = vst.msk [vmem:[#allocation3 + $0x8] sm:$0xff] %vm621, %v614
      %624 = vst.msk [vmem:[#allocation3 + $0x10] sm:$0xff] %vm621, %v615
      %625 = vst.msk [vmem:[#allocation3 + $0x18] sm:$0xff] %vm621, %v616
      %626 = vst.msk [vmem:[#allocation3 + $0x20] sm:$0xff] %vm621, %v617
      %627 = vst.msk [vmem:[#allocation3 + $0x28] sm:$0xff] %vm621, %v618
      %628 = vst.msk [vmem:[#allocation3 + $0x30] sm:$0xff] %vm621, %v619
      %629 = vst.msk [vmem:[#allocation3 + $0x38] sm:$0xff] %vm621, %v620
      %v630 = vld [vmem:[#allocation4] sm:$0xff]
      %v631 = vld [vmem:[#allocation4 + $0x8] sm:$0xff]
      %v632 = vld [vmem:[#allocation4 + $0x10] sm:$0xff]
      %v633 = vld [vmem:[#allocation4 + $0x18] sm:$0xff]
      %v634 = vld [vmem:[#allocation4 + $0x20] sm:$0xff]
      %v635 = vld [vmem:[#allocation4 + $0x28] sm:$0xff]
      %v636 = vld [vmem:[#allocation4 + $0x30] sm:$0xff]
      %v637 = vld [vmem:[#allocation4 + $0x38] sm:$0xff]
      %639 = vset.pattern.permute.xlu0 0
      %640 = vperm.xlu0 %639, %v494
      %v641 = vpop.permute.xlu0 %640
      %644 = vset.pattern.permute.xlu0 0
      %645 = vperm.xlu0 %644, %v496
      %v646 = vpop.permute.xlu0 %645
      %649 = vset.pattern.permute.xlu0 0
      %650 = vperm.xlu0 %649, %v498
      %v651 = vpop.permute.xlu0 %650
      %654 = vset.pattern.permute.xlu0 0
      %655 = vperm.xlu0 %654, %v500
      %v656 = vpop.permute.xlu0 %655
      %659 = vset.pattern.permute.xlu0 0
      %660 = vperm.xlu0 %659, %v502
      %v661 = vpop.permute.xlu0 %660
      %664 = vset.pattern.permute.xlu0 0
      %665 = vperm.xlu0 %664, %v504
      %v666 = vpop.permute.xlu0 %665
      %669 = vset.pattern.permute.xlu0 0
      %670 = vperm.xlu0 %669, %v506
      %v671 = vpop.permute.xlu0 %670
      %674 = vset.pattern.permute.xlu0 0
      %675 = vperm.xlu0 %674, %v508
      %v676 = vpop.permute.xlu0 %675
      %v678 = vmul.f32 %v641, %v630
      %v679 = vmul.f32 %v646, %v631
      %v680 = vmul.f32 %v651, %v632
      %v681 = vmul.f32 %v656, %v633
      %v682 = vmul.f32 %v661, %v634
      %v683 = vmul.f32 %v666, %v635
      %v684 = vmul.f32 %v671, %v636
      %v685 = vmul.f32 %v676, %v637
      %v686 = vld [vmem:[%s306] sm:$0xff]
      %v687 = vld [vmem:[%s306 + $0x8] sm:$0xff]
      %v688 = vld [vmem:[%s306 + $0x10] sm:$0xff]
      %v689 = vld [vmem:[%s306 + $0x18] sm:$0xff]
      %v690 = vld [vmem:[%s306 + $0x20] sm:$0xff]
      %v691 = vld [vmem:[%s306 + $0x28] sm:$0xff]
      %v692 = vld [vmem:[%s306 + $0x30] sm:$0xff]
      %v693 = vld [vmem:[%s306 + $0x38] sm:$0xff]
      %v695 = vsel %vm452, %v558, 0
      %v698 = vsel %vm452, %v560, 0
      %v701 = vsel %vm452, %v562, 0
      %v704 = vsel %vm452, %v564, 0
      %v707 = vsel %vm452, %v566, 0
      %v710 = vsel %vm452, %v568, 0
      %v713 = vsel %vm452, %v570, 0
      %v716 = vsel %vm452, %v572, 0
      %718 = vmatpush.msra.mxu0 0.0
      %719 = vmatpush.msra.mxu0 0.0
      %720 = vmatpush.msra.mxu0 0.0
      %721 = vmatpush.msra.mxu0 0.0
      %722 = vmatpush.msra.mxu0 0.0
      %723 = vmatpush.msra.mxu0 0.0
      %724 = vmatpush.msra.mxu0 0.0
      %725 = vmatpush.msra.mxu0 0.0
      %726 = vmatpush.msra.mxu0 %v693
      %727 = vmatpush.msra.mxu0 %v692
      %728 = vmatpush.msra.mxu0 %v691
      %729 = vmatpush.msra.mxu0 %v690
      %730 = vmatpush.msra.mxu0 %v689
      %731 = vmatpush.msra.mxu0 %v688
      %732 = vmatpush.msra.mxu0 %v687
      %733 = vmatpush.msra.mxu0 %v686
      %734 = vmatmul.f32.gmra.mxu0 %v695
      %v735 = vpop.f32.mrf.mxu0
      %v736 = vadd.f32 0.0, %v735
      %737 = vmatmul.f32.gmra.mxu0 %v698
      %v738 = vpop.f32.mrf.mxu0
      %v739 = vadd.f32 0.0, %v738
      %740 = vmatmul.f32.gmra.mxu0 %v701
      %v741 = vpop.f32.mrf.mxu0
      %v742 = vadd.f32 0.0, %v741
      %743 = vmatmul.f32.gmra.mxu0 %v704
      %v744 = vpop.f32.mrf.mxu0
      %v745 = vadd.f32 0.0, %v744
      %746 = vmatmul.f32.gmra.mxu0 %v707
      %v747 = vpop.f32.mrf.mxu0
      %v748 = vadd.f32 0.0, %v747
      %749 = vmatmul.f32.gmra.mxu0 %v710
      %v750 = vpop.f32.mrf.mxu0
      %v751 = vadd.f32 0.0, %v750
      %752 = vmatmul.f32.gmra.mxu0 %v713
      %v753 = vpop.f32.mrf.mxu0
      %v754 = vadd.f32 0.0, %v753
      %755 = vmatmul.f32.gmra.mxu0 %v716
      %v756 = vpop.f32.mrf.mxu0
      %v757 = vadd.f32 0.0, %v756
      %758 = vdwg.mxu0
      %v759 = vadd.f32 %v678, %v736
      %v760 = vadd.f32 %v679, %v739
      %v761 = vadd.f32 %v680, %v742
      %v762 = vadd.f32 %v681, %v745
      %v763 = vadd.f32 %v682, %v748
      %v764 = vadd.f32 %v683, %v751
      %v765 = vadd.f32 %v684, %v754
      %v766 = vadd.f32 %v685, %v757
      %vm767 = vcmask 64512
      %768 = vst.msk [vmem:[#allocation4] sm:$0xff] %vm767, %v759
      %769 = vst.msk [vmem:[#allocation4 + $0x8] sm:$0xff] %vm767, %v760
      %770 = vst.msk [vmem:[#allocation4 + $0x10] sm:$0xff] %vm767, %v761
      %771 = vst.msk [vmem:[#allocation4 + $0x18] sm:$0xff] %vm767, %v762
      %772 = vst.msk [vmem:[#allocation4 + $0x20] sm:$0xff] %vm767, %v763
      %773 = vst.msk [vmem:[#allocation4 + $0x28] sm:$0xff] %vm767, %v764
      %774 = vst.msk [vmem:[#allocation4 + $0x30] sm:$0xff] %vm767, %v765
      %775 = vst.msk [vmem:[#allocation4 + $0x38] sm:$0xff] %vm767, %v766
      %776 = vst.msk [vmem:[#allocation2] sm:$0xff] %vm621, %v477
      %777 = vst.msk [vmem:[#allocation2 + $0x8] sm:$0xff] %vm621, %v478
      %778 = vst.msk [vmem:[#allocation2 + $0x10] sm:$0xff] %vm621, %v479
      %779 = vst.msk [vmem:[#allocation2 + $0x18] sm:$0xff] %vm621, %v480
      %780 = vst.msk [vmem:[#allocation2 + $0x20] sm:$0xff] %vm621, %v481
      %781 = vst.msk [vmem:[#allocation2 + $0x28] sm:$0xff] %vm621, %v482
      %782 = vst.msk [vmem:[#allocation2 + $0x30] sm:$0xff] %vm621, %v483
      %783 = vst.msk [vmem:[#allocation2 + $0x38] sm:$0xff] %vm621, %v484
      // Predicated region
      $region41: #{gmflow_forward.7} parent=35 // pred_check
        %p784 = pneg %p325
      $region42: #{gmflow_forward.7} parent=35 // pred_check_branch
        %786 = sbr.rel (%p784) target = $region44
      $region43: #{gmflow_forward.7} parent=35 // pred_region
        %v787 = vld [vmem:[#allocation4] sm:$0xff]
        %v788 = vld [vmem:[#allocation4 + $0x8] sm:$0xff]
        %v789 = vld [vmem:[#allocation4 + $0x10] sm:$0xff]
        %v790 = vld [vmem:[#allocation4 + $0x18] sm:$0xff]
        %v791 = vld [vmem:[#allocation4 + $0x20] sm:$0xff]
        %v792 = vld [vmem:[#allocation4 + $0x28] sm:$0xff]
        %v793 = vld [vmem:[#allocation4 + $0x30] sm:$0xff]
        %v794 = vld [vmem:[#allocation4 + $0x38] sm:$0xff]
        %v795 = vld [vmem:[#allocation3] sm:$0xff]
        %v796 = vld [vmem:[#allocation3 + $0x8] sm:$0xff]
        %v797 = vld [vmem:[#allocation3 + $0x10] sm:$0xff]
        %v798 = vld [vmem:[#allocation3 + $0x18] sm:$0xff]
        %v799 = vld [vmem:[#allocation3 + $0x20] sm:$0xff]
        %v800 = vld [vmem:[#allocation3 + $0x28] sm:$0xff]
        %v801 = vld [vmem:[#allocation3 + $0x30] sm:$0xff]
        %v802 = vld [vmem:[#allocation3 + $0x38] sm:$0xff]
        %804 = vset.pattern.permute.xlu0 0
        %805 = vperm.xlu0 %804, %v795
        %v806 = vpop.permute.xlu0 %805
        %809 = vset.pattern.permute.xlu0 0
        %810 = vperm.xlu0 %809, %v796
        %v811 = vpop.permute.xlu0 %810
        %814 = vset.pattern.permute.xlu0 0
        %815 = vperm.xlu0 %814, %v797
        %v816 = vpop.permute.xlu0 %815
        %819 = vset.pattern.permute.xlu0 0
        %820 = vperm.xlu0 %819, %v798
        %v821 = vpop.permute.xlu0 %820
        %824 = vset.pattern.permute.xlu0 0
        %825 = vperm.xlu0 %824, %v799
        %v826 = vpop.permute.xlu0 %825
        %829 = vset.pattern.permute.xlu0 0
        %830 = vperm.xlu0 %829, %v800
        %v831 = vpop.permute.xlu0 %830
        %834 = vset.pattern.permute.xlu0 0
        %835 = vperm.xlu0 %834, %v801
        %v836 = vpop.permute.xlu0 %835
        %839 = vset.pattern.permute.xlu0 0
        %840 = vperm.xlu0 %839, %v802
        %v841 = vpop.permute.xlu0 %840
        %v843 = vrcp.pop %v806
        %v844 = vmul.f32 %v806, %v843
        %v845 = vsub.f32 1.0, %v844
        %v846 = vmul.f32 %v843, %v845
        %v847 = vadd.f32 %v843, %v846
        %vm848 = vweird.f32 %v806
        %vm849 = vweird.f32 %v843
        %vm850 = vmor %vm848, %vm849
        %v851 = vsel %vm850, %v843, %v847
        %v852 = vand.u32 2147483647, %v806
        %vm853 = vcmp.eq.f32.partialorder %v852, 8.507059e+37
        %v854 = vand.u32 %v806, 2147483648
        %v855 = vor.u32 1.1754944e-38, %v854
        %v856 = vsel %vm853, %v855, %v851
        %v857 = vmul.f32 %v787, %v856
        %v858 = vrcp.pop %v811
        %v859 = vmul.f32 %v811, %v858
        %v860 = vsub.f32 1.0, %v859
        %v861 = vmul.f32 %v858, %v860
        %v862 = vadd.f32 %v858, %v861
        %vm863 = vweird.f32 %v811
        %vm864 = vweird.f32 %v858
        %vm865 = vmor %vm863, %vm864
        %v866 = vsel %vm865, %v858, %v862
        %v867 = vand.u32 2147483647, %v811
        %vm868 = vcmp.eq.f32.partialorder %v867, 8.507059e+37
        %v869 = vand.u32 %v811, 2147483648
        %v870 = vor.u32 1.1754944e-38, %v869
        %v871 = vsel %vm868, %v870, %v866
        %v872 = vmul.f32 %v788, %v871
        %v873 = vrcp.pop %v816
        %v874 = vmul.f32 %v816, %v873
        %v875 = vsub.f32 1.0, %v874
        %v876 = vmul.f32 %v873, %v875
        %v877 = vadd.f32 %v873, %v876
        %vm878 = vweird.f32 %v816
        %vm879 = vweird.f32 %v873
        %vm880 = vmor %vm878, %vm879
        %v881 = vsel %vm880, %v873, %v877
        %v882 = vand.u32 2147483647, %v816
        %vm883 = vcmp.eq.f32.partialorder %v882, 8.507059e+37
        %v884 = vand.u32 %v816, 2147483648
        %v885 = vor.u32 1.1754944e-38, %v884
        %v886 = vsel %vm883, %v885, %v881
        %v887 = vmul.f32 %v789, %v886
        %v888 = vrcp.pop %v821
        %v889 = vmul.f32 %v821, %v888
        %v890 = vsub.f32 1.0, %v889
        %v891 = vmul.f32 %v888, %v890
        %v892 = vadd.f32 %v888, %v891
        %vm893 = vweird.f32 %v821
        %vm894 = vweird.f32 %v888
        %vm895 = vmor %vm893, %vm894
        %v896 = vsel %vm895, %v888, %v892
        %v897 = vand.u32 2147483647, %v821
        %vm898 = vcmp.eq.f32.partialorder %v897, 8.507059e+37
        %v899 = vand.u32 %v821, 2147483648
        %v900 = vor.u32 1.1754944e-38, %v899
        %v901 = vsel %vm898, %v900, %v896
        %v902 = vmul.f32 %v790, %v901
        %v903 = vrcp.pop %v826
        %v904 = vmul.f32 %v826, %v903
        %v905 = vsub.f32 1.0, %v904
        %v906 = vmul.f32 %v903, %v905
        %v907 = vadd.f32 %v903, %v906
        %vm908 = vweird.f32 %v826
        %vm909 = vweird.f32 %v903
        %vm910 = vmor %vm908, %vm909
        %v911 = vsel %vm910, %v903, %v907
        %v912 = vand.u32 2147483647, %v826
        %vm913 = vcmp.eq.f32.partialorder %v912, 8.507059e+37
        %v914 = vand.u32 %v826, 2147483648
        %v915 = vor.u32 1.1754944e-38, %v914
        %v916 = vsel %vm913, %v915, %v911
        %v917 = vmul.f32 %v791, %v916
        %v918 = vrcp.pop %v831
        %v919 = vmul.f32 %v831, %v918
        %v920 = vsub.f32 1.0, %v919
        %v921 = vmul.f32 %v918, %v920
        %v922 = vadd.f32 %v918, %v921
        %vm923 = vweird.f32 %v831
        %vm924 = vweird.f32 %v918
        %vm925 = vmor %vm923, %vm924
        %v926 = vsel %vm925, %v918, %v922
        %v927 = vand.u32 2147483647, %v831
        %vm928 = vcmp.eq.f32.partialorder %v927, 8.507059e+37
        %v929 = vand.u32 %v831, 2147483648
        %v930 = vor.u32 1.1754944e-38, %v929
        %v931 = vsel %vm928, %v930, %v926
        %v932 = vmul.f32 %v792, %v931
        %v933 = vrcp.pop %v836
        %v934 = vmul.f32 %v836, %v933
        %v935 = vsub.f32 1.0, %v934
        %v936 = vmul.f32 %v933, %v935
        %v937 = vadd.f32 %v933, %v936
        %vm938 = vweird.f32 %v836
        %vm939 = vweird.f32 %v933
        %vm940 = vmor %vm938, %vm939
        %v941 = vsel %vm940, %v933, %v937
        %v942 = vand.u32 2147483647, %v836
        %vm943 = vcmp.eq.f32.partialorder %v942, 8.507059e+37
        %v944 = vand.u32 %v836, 2147483648
        %v945 = vor.u32 1.1754944e-38, %v944
        %v946 = vsel %vm943, %v945, %v941
        %v947 = vmul.f32 %v793, %v946
        %v948 = vrcp.pop %v841
        %v949 = vmul.f32 %v841, %v948
        %v950 = vsub.f32 1.0, %v949
        %v951 = vmul.f32 %v948, %v950
        %v952 = vadd.f32 %v948, %v951
        %vm953 = vweird.f32 %v841
        %vm954 = vweird.f32 %v948
        %vm955 = vmor %vm953, %vm954
        %v956 = vsel %vm955, %v948, %v952
        %v957 = vand.u32 2147483647, %v841
        %vm958 = vcmp.eq.f32.partialorder %v957, 8.507059e+37
        %v959 = vand.u32 %v841, 2147483648
        %v960 = vor.u32 1.1754944e-38, %v959
        %v961 = vsel %vm958, %v960, %v956
        %v962 = vmul.f32 %v794, %v961
        %v963 = vld [vmem:[%s312] sm:$0xff]
        %v964 = vld [vmem:[%s312 + $0x8] sm:$0xff]
        %v965 = vld [vmem:[%s312 + $0x10] sm:$0xff]
        %v966 = vld [vmem:[%s312 + $0x18] sm:$0xff]
        %v967 = vld [vmem:[%s312 + $0x20] sm:$0xff]
        %v968 = vld [vmem:[%s312 + $0x28] sm:$0xff]
        %v969 = vld [vmem:[%s312 + $0x30] sm:$0xff]
        %v970 = vld [vmem:[%s312 + $0x38] sm:$0xff]
        %v971 = vsub.f32 %v857, %v963
        %v972 = vsub.f32 %v872, %v964
        %v973 = vsub.f32 %v887, %v965
        %v974 = vsub.f32 %v902, %v966
        %v975 = vsub.f32 %v917, %v967
        %v976 = vsub.f32 %v932, %v968
        %v977 = vsub.f32 %v947, %v969
        %v978 = vsub.f32 %v962, %v970
        %979 = vst.msk [vmem:[%s322] sm:$0xff] %vm767, %v971
        %980 = vst.msk [vmem:[%s322 + $0x8] sm:$0xff] %vm767, %v972
        %981 = vst.msk [vmem:[%s322 + $0x10] sm:$0xff] %vm767, %v973
        %982 = vst.msk [vmem:[%s322 + $0x18] sm:$0xff] %vm767, %v974
        %983 = vst.msk [vmem:[%s322 + $0x20] sm:$0xff] %vm767, %v975
        %984 = vst.msk [vmem:[%s322 + $0x28] sm:$0xff] %vm767, %v976
        %985 = vst.msk [vmem:[%s322 + $0x30] sm:$0xff] %vm767, %v977
        %986 = vst.msk [vmem:[%s322 + $0x38] sm:$0xff] %vm767, %v978
      $region44: #{gmflow_forward.7} parent=35 // pred_fallthru
        _
      %s987 = smul.u32 8, %s21
      %p988 = scmp.lt.s32.totalorder %s20, 1
      %s989 = scalar_select %p988, %s20, 1
      %p990 = scmp.lt.s32.totalorder %s987, 7
      %s991 = scalar_select %p990, %s987, 7
      %s992 = smul.addr %s989, 8
      %s993 = sadd.s32 %s991, %s992
      %s994 = smul.addr %s993, 8
      %s995 = scalar_lea.vmem %s4, %s994
      // Predicated region
      $region45: #{gmflow_forward.7} parent=35 // pred_check
        %p996 = pneg %p162
      $region46: #{gmflow_forward.7} parent=35 // pred_check_branch
        %998 = sbr.rel (%p996) target = $region48
      $region47: #{gmflow_forward.7} parent=35 // pred_region
        %s999 = smul.u32 8, %s21
      $region48: #{gmflow_forward.7} parent=35 // pred_fallthru
        _
    $region36: #{gmflow_forward.7} parent=5 // pred_fallthru
      _
    %p1000 = scmp.le.s32.totalorder 2, %s10
    // Predicated region
    $region49: #{gmflow_forward.7} parent=5 // pred_check
      %p1001 = pneg %p1000
    $region50: #{gmflow_forward.7} parent=5 // pred_check_branch
      %1003 = sbr.rel (%p1001) target = $region52
    $region51: #{gmflow_forward.7} parent=5 // pred_region
      %s1004 = ssub.s32 %s10, 2
      // Predicated region
      $region53: #{gmflow_forward.7} parent=51 // pred_check
        %p1005 = pneg %p168
      $region54: #{gmflow_forward.7} parent=51 // pred_check_branch
        %1007 = sbr.rel (%p1005) target = $region56
      $region55: #{gmflow_forward.7} parent=51 // pred_region
        %s1008 = smul.u32 8, %s24
        %p1009 = scmp.lt.s32.totalorder %s23, 1
        %s1010 = scalar_select %p1009, %s23, 1
        %p1011 = scmp.lt.s32.totalorder %s1008, 7
        %s1012 = scalar_select %p1011, %s1008, 7
        %s1013 = smul.addr %s1010, 8
        %s1014 = sadd.s32 %s1012, %s1013
        %s1015 = smul.addr %s1014, 8
        %s1016 = scalar_lea.vmem %s4, %s1015
      $region56: #{gmflow_forward.7} parent=51 // pred_fallthru
        _
    $region52: #{gmflow_forward.7} parent=5 // pred_fallthru
      _
  $region6: #{gmflow_forward.7} parent=0 // loop_footer
    %s14 = sadd.s32 1, %s10
  $region7: #{gmflow_forward.7} parent=0 // loop_footer_branch
    %9 = sbr.rel target = $region3
  $region8: #{gmflow_forward.7} parent=0 // loop_exit
    _

</llo_original>
